<compile_context>
chip_gen: v5e
topology: v5e:2x2
jax: 0.10.0
libtpu: 0.0.40
codegen_flags: <defaults>
</compile_context>

<pallas_src>
import math

import numpy as np
import jax
import jax.numpy as jnp
from jax.experimental import pallas as pl
from jax.experimental.pallas import tpu as pltpu


# ---------------------------------------------------------------------------
# Fused Sinkhorn kernel: cost build + full eps-annealing loop in one call
# ---------------------------------------------------------------------------
def _sinkhorn_kernel(eps_ref, dampx_ref, dampy_ref,          # SMEM schedules (T,)
                     x_ref, y_ref, a_log_ref, b_log_ref,     # VMEM inputs
                     f_ref, g_ref,                           # VMEM outputs
                     c_ref):                                 # VMEM scratch (Np, Mp)
    # ---- cost matrix, built once:  C_ij = 0.5 * ||x_i - y_j||^2 ----
    x = x_ref[...]                                            # (Np, D) f32
    y = y_ref[...]                                            # (Mp, D) f32
    xx = jnp.sum(x * x, axis=-1, keepdims=True)               # (Np, 1)
    ones = jnp.ones((1, x.shape[1]), jnp.float32)
    yy = jax.lax.dot_general(ones, y * y, (((1,), (1,)), ((), ())),
                             preferred_element_type=jnp.float32)   # (1, Mp)
    xy = jax.lax.dot_general(x, y, (((1,), (1,)), ((), ())),
                             preferred_element_type=jnp.float32)   # (Np, Mp)
    c_ref[...] = 0.5 * (xx + yy) - xy

    a_log = a_log_ref[...]                                    # (Np, 1)  (-1e30 on pad rows)
    b_log = b_log_ref[...]                                    # (1, Mp)  (-1e30 on pad cols)
    n_eps = eps_ref.shape[0]

    # softmin over y (lanes): returns per-x column (Np, 1)
    def softmin_over_y(h_row, inv_eps, eps):
        z = h_row - c_ref[...] * inv_eps                      # (Np, Mp)
        m = jnp.max(z, axis=-1, keepdims=True)
        s = jnp.sum(jnp.exp(z - m), axis=-1, keepdims=True)
        return -eps * (m + jnp.log(s))

    # softmin over x (sublanes): returns per-y row (1, Mp)  -- uses the SAME C,
    # so C^T is never materialized.
    def softmin_over_x(h_col, inv_eps, eps):
        z = h_col - c_ref[...] * inv_eps                      # (Np, Mp)
        m = jnp.max(z, axis=0, keepdims=True)
        s = jnp.sum(jnp.exp(z - m), axis=0, keepdims=True)
        return -eps * (m + jnp.log(s))

    # ---- init (geomloss sinkhorn_loop first evaluation at eps_list[0]) ----
    eps0 = eps_ref[0]
    inv0 = 1.0 / eps0
    f = dampx_ref[0] * softmin_over_y(b_log, inv0, eps0)      # (Np, 1)
    g = dampy_ref[0] * softmin_over_x(a_log, inv0, eps0)      # (1, Mp)

    # ---- eps-annealing loop: symmetric damped Jacobi updates with averaging ----
    def body(t, carry):
        f, g = carry
        eps = eps_ref[t]
        inv = 1.0 / eps
        ft = dampx_ref[t] * softmin_over_y(b_log + g * inv, inv, eps)
        gt = dampy_ref[t] * softmin_over_x(a_log + f * inv, inv, eps)
        return 0.5 * (f + ft), 0.5 * (g + gt)

    f, g = jax.lax.fori_loop(0, n_eps, body, (f, g))

    # ---- last extrapolation at the final blur (no averaging), as in geomloss ----
    eps_l = eps_ref[n_eps - 1]
    inv_l = 1.0 / eps_l
    f_last = dampx_ref[n_eps - 1] * softmin_over_y(b_log + g * inv_l, inv_l, eps_l)
    g_last = dampy_ref[n_eps - 1] * softmin_over_x(a_log + f * inv_l, inv_l, eps_l)

    f_ref[...] = f_last                                       # (Np, 1)
    g_ref[...] = g_last                                       # (1, Mp)


@jax.jit
def _sinkhorn_apply(eps_sched, dampx_sched, dampy_sched,
                    x_p, y_p, a_log_col, b_log_row, a_w, b_w, rho_y, eps_final):
    Np = x_p.shape[0]
    Mp = y_p.shape[0]
    # C scratch + inputs/outputs + headroom; capped below v7x's 64 MiB VMEM.
    vmem_limit = int(min(60 * 1024 * 1024,
                         max(32 * 1024 * 1024, 6 * Np * Mp + (4 << 20))))

    f, g = pl.pallas_call(
        _sinkhorn_kernel,
        out_shape=(jax.ShapeDtypeStruct((Np, 1), jnp.float32),
                   jax.ShapeDtypeStruct((1, Mp), jnp.float32)),
        in_specs=[
            pl.BlockSpec(memory_space=pltpu.MemorySpace.SMEM),   # eps schedule
            pl.BlockSpec(memory_space=pltpu.MemorySpace.SMEM),   # damp_x schedule
            pl.BlockSpec(memory_space=pltpu.MemorySpace.SMEM),   # damp_y schedule
            pl.BlockSpec(memory_space=pltpu.MemorySpace.VMEM),   # x  (Np, D)
            pl.BlockSpec(memory_space=pltpu.MemorySpace.VMEM),   # y  (Mp, D)
            pl.BlockSpec(memory_space=pltpu.MemorySpace.VMEM),   # a_log column (Np, 1)
            pl.BlockSpec(memory_space=pltpu.MemorySpace.VMEM),   # b_log row    (1, Mp)
        ],
        out_specs=(pl.BlockSpec(memory_space=pltpu.MemorySpace.VMEM),
                   pl.BlockSpec(memory_space=pltpu.MemorySpace.VMEM)),
        scratch_shapes=[pltpu.VMEM((Np, Mp), jnp.float32)],
        compiler_params=pltpu.CompilerParams(vmem_limit_bytes=vmem_limit),
    )(eps_sched, dampx_sched, dampy_sched, x_p, y_p, a_log_col, b_log_row)

    # sinkhorn_cost, debias=False: balanced term on x, unbalanced (reach) term on y.
    term_x = jnp.sum(a_w * f[:, 0])
    term_y = jnp.sum(b_w * (rho_y + 0.5 * eps_final) * (1.0 - jnp.exp(-g[0, :] / rho_y)))
    return term_x + term_y


# ---------------------------------------------------------------------------
# Host wrapper: eps schedule (data-dependent length) + padding + final cost
# ---------------------------------------------------------------------------
def _pad_rows(arr, target_rows):
    pad = target_rows - arr.shape[0]
    if pad == 0:
        return arr
    return jnp.concatenate([arr, jnp.zeros((pad, arr.shape[1]), arr.dtype)], axis=0)


def sinkhorn_divergence(x, y, blur=0.001, reach=1.0, scaling=0.9):
    """geomloss SamplesLoss(blur, reach=[None, reach], scaling, debias=False)(x, y)."""
    p = 2
    x = jnp.asarray(x, jnp.float32)
    y = jnp.asarray(y, jnp.float32)
    N, D = x.shape
    M, Dy = y.shape
    assert D == Dy

    # geomloss scaling_parameters: bounding-box diameter + eps annealing schedule.
    # (Schedule length is data-dependent -> stays host-side, like geomloss.)
    mins = jnp.minimum(jnp.min(x, axis=0), jnp.min(y, axis=0))
    maxs = jnp.maximum(jnp.max(x, axis=0), jnp.max(y, axis=0))
    diameter = float(jnp.sqrt(jnp.sum((maxs - mins) ** 2)))
    eps_final = blur ** p
    # TODO(synk): reach=[None, reach] follows a geomloss fork; interpreted as an exact
    # marginal on the synthetic sample (x) and a soft (rho = reach**p) marginal on y.
    rho_y = float(reach) ** p
    eps_np = np.asarray(
        [diameter ** p]
        + [math.exp(e) for e in np.arange(p * math.log(diameter),
                                          p * math.log(blur),
                                          p * math.log(scaling))]
        + [eps_final], dtype=np.float32)
    dampx_np = np.ones_like(eps_np)                                    # rho_x = None
    dampy_np = (1.0 / (1.0 + eps_np / np.float32(rho_y))).astype(np.float32)

    # Pad rows (sublanes) of x to x8 and rows of y (= cost lanes) to x128; padded
    # entries are masked with -1e30 log-weights and zero weights.
    Np = max(8, ((N + 7) // 8) * 8)
    Mp = max(128, ((M + 127) // 128) * 128)
    x_p = _pad_rows(x, Np)
    y_p = _pad_rows(y, Mp)

    row_ids = jnp.arange(Np, dtype=jnp.int32)
    col_ids = jnp.arange(Mp, dtype=jnp.int32)
    neg_big = jnp.float32(-1e30)
    a_log_col = jnp.where(row_ids < N, jnp.float32(-math.log(N)), neg_big)[:, None]
    b_log_row = jnp.where(col_ids < M, jnp.float32(-math.log(M)), neg_big)[None, :]
    a_w = jnp.where(row_ids < N, 1.0 / N, 0.0).astype(jnp.float32)
    b_w = jnp.where(col_ids < M, 1.0 / M, 0.0).astype(jnp.float32)

    # TODO(synk): for very large N*M, column-tile C with an online logsumexp instead
    # of holding the full (Np, Mp) block in VMEM (and row-tile over a parallel grid
    # axis for v7x's two TensorCores).
    assert 4 * Np * Mp <= 48 * 1024 * 1024, "cost matrix too large for single-block VMEM kernel"

    return _sinkhorn_apply(jnp.asarray(eps_np), jnp.asarray(dampx_np), jnp.asarray(dampy_np),
                           x_p, y_p, a_log_col, b_log_row, a_w, b_w,
                           jnp.float32(rho_y), jnp.float32(eps_final))


# ---------------------------------------------------------------------------
# Pure-JAX reference (no Pallas) for correctness checking
# ---------------------------------------------------------------------------
def _sinkhorn_reference(x, y, blur=0.001, reach=1.0, scaling=0.9):
    p = 2
    x = jnp.asarray(x, jnp.float32)
    y = jnp.asarray(y, jnp.float32)
    N, _ = x.shape
    M, _ = y.shape
    a_log = jnp.full((1, N), -math.log(N), jnp.float32)
    b_log = jnp.full((1, M), -math.log(M), jnp.float32)
    mins = jnp.minimum(jnp.min(x, axis=0), jnp.min(y, axis=0))
    maxs = jnp.maximum(jnp.max(x, axis=0), jnp.max(y, axis=0))
    diameter = float(jnp.sqrt(jnp.sum((maxs - mins) ** 2)))
    eps_final = blur ** p
    rho_y = float(reach) ** p
    eps_list = ([diameter ** p]
                + [math.exp(e) for e in np.arange(p * math.log(diameter),
                                                  p * math.log(blur),
                                                  p * math.log(scaling))]
                + [eps_final])

    C_xy = 0.5 * jnp.sum((x[:, None, :] - y[None, :, :]) ** 2, axis=-1)   # (N, M)
    C_yx = C_xy.T

    def softmin(eps, C, h):
        z = h - C / eps
        m = jnp.max(z, axis=-1, keepdims=True)
        return -eps * (m + jnp.log(jnp.sum(jnp.exp(z - m), axis=-1, keepdims=True)))

    def damp_y(eps):
        return 1.0 / (1.0 + eps / rho_y)

    eps0 = eps_list[0]
    f = softmin(eps0, C_xy, b_log)
    g = damp_y(eps0) * softmin(eps0, C_yx, a_log)
    for eps in eps_list:
        ft = softmin(eps, C_xy, b_log + g.T / eps)
        gt = damp_y(eps) * softmin(eps, C_yx, a_log + f.T / eps)
        f, g = 0.5 * (f + ft), 0.5 * (g + gt)
    eps = eps_list[-1]
    f_new = softmin(eps, C_xy, b_log + g.T / eps)
    g_new = damp_y(eps) * softmin(eps, C_yx, a_log + f.T / eps)

    a = 1.0 / N
    b = 1.0 / M
    term_x = jnp.sum(a * f_new)
    term_y = jnp.sum(b * (rho_y + eps_final / 2.0) * (1.0 - jnp.exp(-g_new / rho_y)))
    return term_x + term_y


# ---------------------------------------------------------------------------
# Module-equivalent wrappers
# ---------------------------------------------------------------------------
class SuSLoss:
    def __init__(self, input_feature_sample, blur=0.001, reach=1, scaling=0.9, **kwargs):
        self.blur = blur
        self.p = 2
        self.reach = reach
        self.scaling = scaling
        self.input_feature_sample = input_feature_sample

    def __call__(self, synth_feature_sample):
        return sinkhorn_divergence(synth_feature_sample, self.input_feature_sample,
                                   blur=self.blur, reach=self.reach, scaling=self.scaling)


class SuSPP:
    def __init__(self, reference_img=None, reach=1, blur=0.001, scaling=0.9):
        self.reference_img = reference_img
        self.reach = reach
        self.blur = blur
        self.scaling = scaling
        self.regularizer_function = SuSLoss(self.reference_img, reach=reach,
                                            blur=blur, scaling=scaling)

    def __call__(self, fake_data):
        return self.regularizer_function(fake_data)

    def train(self, data, **kwargs):
        self.reference_img = data
        self.regularizer_function = SuSLoss(self.reference_img, reach=self.reach,
                                            blur=self.blur, scaling=self.scaling)

    def load_weights(self, file_name):
        return


if __name__ == "__main__":
    key = jax.random.PRNGKey(0)
    kx, ky = jax.random.split(key)
    # feature samples: (num_points, feature_dim)
    reference_img = jax.random.normal(ky, (128, 32), jnp.float32)
    fake_data = jax.random.normal(kx, (256, 32), jnp.float32)

    reg = SuSPP(reference_img=reference_img, reach=1.0, blur=0.001, scaling=0.9)
    loss = jax.block_until_ready(reg(fake_data))
    assert jnp.isfinite(loss)

    # correctness check against a pure-JAX reference of the same algorithm
    loss_ref = jax.block_until_ready(
        _sinkhorn_reference(fake_data, reference_img, blur=0.001, reach=1.0, scaling=0.9))
    np.testing.assert_allclose(float(loss), float(loss_ref), rtol=5e-2, atol=0.25)

    print("KERNEL_OK")
</pallas_src>

<mosaic_0001>
module attributes {stable_mosaic.version = 11 : i64} {
  func.func @_sinkhorn_kernel(%arg0: memref<102xf32, #tpu.memory_space<smem>>, %arg1: memref<102xf32, #tpu.memory_space<smem>>, %arg2: memref<102xf32, #tpu.memory_space<smem>>, %arg3: memref<256x32xf32, #tpu.memory_space<vmem>>, %arg4: memref<128x32xf32, #tpu.memory_space<vmem>>, %arg5: memref<256x1xf32, #tpu.memory_space<vmem>>, %arg6: memref<1x128xf32, #tpu.memory_space<vmem>>, %arg7: memref<256x1xf32, #tpu.memory_space<vmem>>, %arg8: memref<1x128xf32, #tpu.memory_space<vmem>>, %arg9: memref<256x128xf32, #tpu.memory_space<vmem>>) attributes {dimension_semantics = [], scalar_prefetch = 0 : i64, scratch_operands = 1 : i64, tpu.core_type = #tpu.core_type<tc>} {
    %c0 = arith.constant 0 : index
    %c0_0 = arith.constant 0 : index
    %0 = vector.load %arg3[%c0, %c0_0] : memref<256x32xf32, #tpu.memory_space<vmem>>, vector<256x32xf32>
    %c0_1 = arith.constant 0 : index
    %c0_2 = arith.constant 0 : index
    %1 = vector.load %arg4[%c0_1, %c0_2] : memref<128x32xf32, #tpu.memory_space<vmem>>, vector<128x32xf32>
    %2 = arith.mulf %0, %0 : vector<256x32xf32>
    %cst = arith.constant dense<0.000000e+00> : vector<256xf32>
    %3 = vector.multi_reduction <add>, %2, %cst [1] : vector<256x32xf32> to vector<256xf32>
    %4 = vector.shape_cast %3 : vector<256xf32> to vector<256x1xf32>
    %cst_3 = arith.constant 1.000000e+00 : f32
    %5 = vector.broadcast %cst_3 : f32 to vector<1x32xf32>
    %6 = arith.mulf %1, %1 : vector<128x32xf32>
    %cst_4 = arith.constant dense<0.000000e+00> : vector<1x128xf32>
    %7 = tpu.matmul %5, %6, %cst_4 {dimension_numbers = #tpu.dot_dimension_numbers<[1], [1], [0], [0], [0, 0, 1, 0], [], []>} : vector<1x32xf32>, vector<128x32xf32>, vector<1x128xf32> -> vector<1x128xf32>
    %cst_5 = arith.constant dense<0.000000e+00> : vector<256x128xf32>
    %8 = tpu.matmul %0, %1, %cst_5 {dimension_numbers = #tpu.dot_dimension_numbers<[1], [1], [0], [0], [0, 0, 1, 0], [], []>} : vector<256x32xf32>, vector<128x32xf32>, vector<256x128xf32> -> vector<256x128xf32>
    %9 = vector.broadcast %4 : vector<256x1xf32> to vector<256x128xf32>
    %10 = vector.broadcast %7 : vector<1x128xf32> to vector<256x128xf32>
    %11 = arith.addf %9, %10 : vector<256x128xf32>
    %cst_6 = arith.constant 5.000000e-01 : f32
    %12 = vector.broadcast %cst_6 : f32 to vector<256x128xf32>
    %13 = arith.mulf %12, %11 : vector<256x128xf32>
    %14 = arith.subf %13, %8 : vector<256x128xf32>
    %c0_7 = arith.constant 0 : index
    %c0_8 = arith.constant 0 : index
    %15 = vector.load %arg9[%c0_7, %c0_8] : memref<256x128xf32, #tpu.memory_space<vmem>>, vector<256x128xf32>
    tpu.vector_store %arg9[%c0_7, %c0_8], %14 {strides = array<i32>} : memref<256x128xf32, #tpu.memory_space<vmem>>, vector<256x128xf32>,
    %c0_9 = arith.constant 0 : index
    %c0_10 = arith.constant 0 : index
    %16 = vector.load %arg5[%c0_9, %c0_10] : memref<256x1xf32, #tpu.memory_space<vmem>>, vector<256x1xf32>
    %c0_11 = arith.constant 0 : index
    %c0_12 = arith.constant 0 : index
    %17 = vector.load %arg6[%c0_11, %c0_12] : memref<1x128xf32, #tpu.memory_space<vmem>>, vector<1x128xf32>
    %c0_13 = arith.constant 0 : index
    %18 = memref.load %arg0[%c0_13] : memref<102xf32, #tpu.memory_space<smem>>
    %cst_14 = arith.constant 1.000000e+00 : f32
    %19 = arith.divf %cst_14, %18 : f32
    %c0_15 = arith.constant 0 : index
    %20 = memref.load %arg1[%c0_15] : memref<102xf32, #tpu.memory_space<smem>>
    %c0_16 = arith.constant 0 : index
    %c0_17 = arith.constant 0 : index
    %21 = vector.load %arg9[%c0_16, %c0_17] : memref<256x128xf32, #tpu.memory_space<vmem>>, vector<256x128xf32>
    %22 = vector.broadcast %19 : f32 to vector<256x128xf32>
    %23 = arith.mulf %21, %22 : vector<256x128xf32>
    %24 = vector.broadcast %17 : vector<1x128xf32> to vector<256x128xf32>
    %25 = arith.subf %24, %23 : vector<256x128xf32>
    %cst_18 = arith.constant dense<0xFF800000> : vector<256xf32>
    %26 = vector.multi_reduction <maximumf>, %25, %cst_18 [1] : vector<256x128xf32> to vector<256xf32>
    %27 = vector.shape_cast %26 : vector<256xf32> to vector<256x1xf32>
    %28 = vector.broadcast %27 : vector<256x1xf32> to vector<256x128xf32>
    %29 = arith.subf %25, %28 : vector<256x128xf32>
    %30 = math.exp %29 : vector<256x128xf32>
    %cst_19 = arith.constant dense<0.000000e+00> : vector<256xf32>
    %31 = vector.multi_reduction <add>, %30, %cst_19 [1] : vector<256x128xf32> to vector<256xf32>
    %32 = vector.shape_cast %31 : vector<256xf32> to vector<256x1xf32>
    %cst_20 = arith.constant 0.000000e+00 : f32
    %33 = arith.subf %cst_20, %18 : f32
    %34 = math.log %32 : vector<256x1xf32>
    %35 = arith.addf %27, %34 : vector<256x1xf32>
    %36 = vector.broadcast %33 : f32 to vector<256x1xf32>
    %37 = arith.mulf %36, %35 : vector<256x1xf32>
    %38 = vector.broadcast %20 : f32 to vector<256x1xf32>
    %39 = arith.mulf %38, %37 : vector<256x1xf32>
    %c0_21 = arith.constant 0 : index
    %40 = memref.load %arg2[%c0_21] : memref<102xf32, #tpu.memory_space<smem>>
    %c0_22 = arith.constant 0 : index
    %c0_23 = arith.constant 0 : index
    %41 = vector.load %arg9[%c0_22, %c0_23] : memref<256x128xf32, #tpu.memory_space<vmem>>, vector<256x128xf32>
    %42 = vector.broadcast %19 : f32 to vector<256x128xf32>
    %43 = arith.mulf %41, %42 : vector<256x128xf32>
    %44 = vector.broadcast %16 : vector<256x1xf32> to vector<256x128xf32>
    %45 = arith.subf %44, %43 : vector<256x128xf32>
    %cst_24 = arith.constant dense<0xFF800000> : vector<128xf32>
    %46 = vector.multi_reduction <maximumf>, %45, %cst_24 [0] : vector<256x128xf32> to vector<128xf32>
    %47 = vector.shape_cast %46 : vector<128xf32> to vector<1x128xf32>
    %48 = vector.broadcast %47 : vector<1x128xf32> to vector<256x128xf32>
    %49 = arith.subf %45, %48 : vector<256x128xf32>
    %50 = math.exp %49 : vector<256x128xf32>
    %cst_25 = arith.constant dense<0.000000e+00> : vector<128xf32>
    %51 = vector.multi_reduction <add>, %50, %cst_25 [0] : vector<256x128xf32> to vector<128xf32>
    %52 = vector.shape_cast %51 : vector<128xf32> to vector<1x128xf32>
    %cst_26 = arith.constant 0.000000e+00 : f32
    %53 = arith.subf %cst_26, %18 : f32
    %54 = math.log %52 : vector<1x128xf32>
    %55 = arith.addf %47, %54 : vector<1x128xf32>
    %56 = vector.broadcast %53 : f32 to vector<1x128xf32>
    %57 = arith.mulf %56, %55 : vector<1x128xf32>
    %58 = vector.broadcast %40 : f32 to vector<1x128xf32>
    %59 = arith.mulf %58, %57 : vector<1x128xf32>
    %c0_i32 = arith.constant 0 : i32
    %c102_i32 = arith.constant 102 : i32
    %60 = arith.addi %c0_i32, %c102_i32 : i32
    %c1_i32 = arith.constant 1 : i32
    %61:2 = scf.for %arg10 = %c0_i32 to %60 step %c1_i32 iter_args(%arg11 = %39, %arg12 = %59) -> (vector<256x1xf32>, vector<1x128xf32>)  : i32 {
      %112 = arith.index_cast %arg10 : i32 to index
      %113 = memref.load %arg0[%112] : memref<102xf32, #tpu.memory_space<smem>>
      %cst_45 = arith.constant 1.000000e+00 : f32
      %114 = arith.divf %cst_45, %113 : f32
      %115 = arith.index_cast %arg10 : i32 to index
      %116 = memref.load %arg1[%115] : memref<102xf32, #tpu.memory_space<smem>>
      %117 = vector.broadcast %114 : f32 to vector<1x128xf32>
      %118 = arith.mulf %arg12, %117 : vector<1x128xf32>
      %119 = arith.addf %17, %118 : vector<1x128xf32>
      %c0_46 = arith.constant 0 : index
      %c0_47 = arith.constant 0 : index
      %120 = vector.load %arg9[%c0_46, %c0_47] : memref<256x128xf32, #tpu.memory_space<vmem>>, vector<256x128xf32>
      %121 = vector.broadcast %114 : f32 to vector<256x128xf32>
      %122 = arith.mulf %120, %121 : vector<256x128xf32>
      %123 = vector.broadcast %119 : vector<1x128xf32> to vector<256x128xf32>
      %124 = arith.subf %123, %122 : vector<256x128xf32>
      %cst_48 = arith.constant dense<0xFF800000> : vector<256xf32>
      %125 = vector.multi_reduction <maximumf>, %124, %cst_48 [1] : vector<256x128xf32> to vector<256xf32>
      %126 = vector.shape_cast %125 : vector<256xf32> to vector<256x1xf32>
      %127 = vector.broadcast %126 : vector<256x1xf32> to vector<256x128xf32>
      %128 = arith.subf %124, %127 : vector<256x128xf32>
      %129 = math.exp %128 : vector<256x128xf32>
      %cst_49 = arith.constant dense<0.000000e+00> : vector<256xf32>
      %130 = vector.multi_reduction <add>, %129, %cst_49 [1] : vector<256x128xf32> to vector<256xf32>
      %131 = vector.shape_cast %130 : vector<256xf32> to vector<256x1xf32>
      %cst_50 = arith.constant 0.000000e+00 : f32
      %132 = arith.subf %cst_50, %113 : f32
      %133 = math.log %131 : vector<256x1xf32>
      %134 = arith.addf %126, %133 : vector<256x1xf32>
      %135 = vector.broadcast %132 : f32 to vector<256x1xf32>
      %136 = arith.mulf %135, %134 : vector<256x1xf32>
      %137 = vector.broadcast %116 : f32 to vector<256x1xf32>
      %138 = arith.mulf %137, %136 : vector<256x1xf32>
      %139 = arith.index_cast %arg10 : i32 to index
      %140 = memref.load %arg2[%139] : memref<102xf32, #tpu.memory_space<smem>>
      %141 = vector.broadcast %114 : f32 to vector<256x1xf32>
      %142 = arith.mulf %arg11, %141 : vector<256x1xf32>
      %143 = arith.addf %16, %142 : vector<256x1xf32>
      %c0_51 = arith.constant 0 : index
      %c0_52 = arith.constant 0 : index
      %144 = vector.load %arg9[%c0_51, %c0_52] : memref<256x128xf32, #tpu.memory_space<vmem>>, vector<256x128xf32>
      %145 = vector.broadcast %114 : f32 to vector<256x128xf32>
      %146 = arith.mulf %144, %145 : vector<256x128xf32>
      %147 = vector.broadcast %143 : vector<256x1xf32> to vector<256x128xf32>
      %148 = arith.subf %147, %146 : vector<256x128xf32>
      %cst_53 = arith.constant dense<0xFF800000> : vector<128xf32>
      %149 = vector.multi_reduction <maximumf>, %148, %cst_53 [0] : vector<256x128xf32> to vector<128xf32>
      %150 = vector.shape_cast %149 : vector<128xf32> to vector<1x128xf32>
      %151 = vector.broadcast %150 : vector<1x128xf32> to vector<256x128xf32>
      %152 = arith.subf %148, %151 : vector<256x128xf32>
      %153 = math.exp %152 : vector<256x128xf32>
      %cst_54 = arith.constant dense<0.000000e+00> : vector<128xf32>
      %154 = vector.multi_reduction <add>, %153, %cst_54 [0] : vector<256x128xf32> to vector<128xf32>
      %155 = vector.shape_cast %154 : vector<128xf32> to vector<1x128xf32>
      %cst_55 = arith.constant 0.000000e+00 : f32
      %156 = arith.subf %cst_55, %113 : f32
      %157 = math.log %155 : vector<1x128xf32>
      %158 = arith.addf %150, %157 : vector<1x128xf32>
      %159 = vector.broadcast %156 : f32 to vector<1x128xf32>
      %160 = arith.mulf %159, %158 : vector<1x128xf32>
      %161 = vector.broadcast %140 : f32 to vector<1x128xf32>
      %162 = arith.mulf %161, %160 : vector<1x128xf32>
      %163 = arith.addf %arg11, %138 : vector<256x1xf32>
      %cst_56 = arith.constant 5.000000e-01 : f32
      %164 = vector.broadcast %cst_56 : f32 to vector<256x1xf32>
      %165 = arith.mulf %164, %163 : vector<256x1xf32>
      %166 = arith.addf %arg12, %162 : vector<1x128xf32>
      %cst_57 = arith.constant 5.000000e-01 : f32
      %167 = vector.broadcast %cst_57 : f32 to vector<1x128xf32>
      %168 = arith.mulf %167, %166 : vector<1x128xf32>
      scf.yield %165, %168 : vector<256x1xf32>, vector<1x128xf32>
    }
    %c102_i32_27 = arith.constant 102 : i32
    %c101 = arith.constant 101 : index
    %62 = memref.load %arg0[%c101] : memref<102xf32, #tpu.memory_space<smem>>
    %cst_28 = arith.constant 1.000000e+00 : f32
    %63 = arith.divf %cst_28, %62 : f32
    %c101_29 = arith.constant 101 : index
    %64 = memref.load %arg1[%c101_29] : memref<102xf32, #tpu.memory_space<smem>>
    %65 = vector.broadcast %63 : f32 to vector<1x128xf32>
    %66 = arith.mulf %61#1, %65 : vector<1x128xf32>
    %67 = arith.addf %17, %66 : vector<1x128xf32>
    %c0_30 = arith.constant 0 : index
    %c0_31 = arith.constant 0 : index
    %68 = vector.load %arg9[%c0_30, %c0_31] : memref<256x128xf32, #tpu.memory_space<vmem>>, vector<256x128xf32>
    %69 = vector.broadcast %63 : f32 to vector<256x128xf32>
    %70 = arith.mulf %68, %69 : vector<256x128xf32>
    %71 = vector.broadcast %67 : vector<1x128xf32> to vector<256x128xf32>
    %72 = arith.subf %71, %70 : vector<256x128xf32>
    %cst_32 = arith.constant dense<0xFF800000> : vector<256xf32>
    %73 = vector.multi_reduction <maximumf>, %72, %cst_32 [1] : vector<256x128xf32> to vector<256xf32>
    %74 = vector.shape_cast %73 : vector<256xf32> to vector<256x1xf32>
    %75 = vector.broadcast %74 : vector<256x1xf32> to vector<256x128xf32>
    %76 = arith.subf %72, %75 : vector<256x128xf32>
    %77 = math.exp %76 : vector<256x128xf32>
    %cst_33 = arith.constant dense<0.000000e+00> : vector<256xf32>
    %78 = vector.multi_reduction <add>, %77, %cst_33 [1] : vector<256x128xf32> to vector<256xf32>
    %79 = vector.shape_cast %78 : vector<256xf32> to vector<256x1xf32>
    %cst_34 = arith.constant 0.000000e+00 : f32
    %80 = arith.subf %cst_34, %62 : f32
    %81 = math.log %79 : vector<256x1xf32>
    %82 = arith.addf %74, %81 : vector<256x1xf32>
    %83 = vector.broadcast %80 : f32 to vector<256x1xf32>
    %84 = arith.mulf %83, %82 : vector<256x1xf32>
    %85 = vector.broadcast %64 : f32 to vector<256x1xf32>
    %86 = arith.mulf %85, %84 : vector<256x1xf32>
    %c101_35 = arith.constant 101 : index
    %87 = memref.load %arg2[%c101_35] : memref<102xf32, #tpu.memory_space<smem>>
    %88 = vector.broadcast %63 : f32 to vector<256x1xf32>
    %89 = arith.mulf %61#0, %88 : vector<256x1xf32>
    %90 = arith.addf %16, %89 : vector<256x1xf32>
    %c0_36 = arith.constant 0 : index
    %c0_37 = arith.constant 0 : index
    %91 = vector.load %arg9[%c0_36, %c0_37] : memref<256x128xf32, #tpu.memory_space<vmem>>, vector<256x128xf32>
    %92 = vector.broadcast %63 : f32 to vector<256x128xf32>
    %93 = arith.mulf %91, %92 : vector<256x128xf32>
    %94 = vector.broadcast %90 : vector<256x1xf32> to vector<256x128xf32>
    %95 = arith.subf %94, %93 : vector<256x128xf32>
    %cst_38 = arith.constant dense<0xFF800000> : vector<128xf32>
    %96 = vector.multi_reduction <maximumf>, %95, %cst_38 [0] : vector<256x128xf32> to vector<128xf32>
    %97 = vector.shape_cast %96 : vector<128xf32> to vector<1x128xf32>
    %98 = vector.broadcast %97 : vector<1x128xf32> to vector<256x128xf32>
    %99 = arith.subf %95, %98 : vector<256x128xf32>
    %100 = math.exp %99 : vector<256x128xf32>
    %cst_39 = arith.constant dense<0.000000e+00> : vector<128xf32>
    %101 = vector.multi_reduction <add>, %100, %cst_39 [0] : vector<256x128xf32> to vector<128xf32>
    %102 = vector.shape_cast %101 : vector<128xf32> to vector<1x128xf32>
    %cst_40 = arith.constant 0.000000e+00 : f32
    %103 = arith.subf %cst_40, %62 : f32
    %104 = math.log %102 : vector<1x128xf32>
    %105 = arith.addf %97, %104 : vector<1x128xf32>
    %106 = vector.broadcast %103 : f32 to vector<1x128xf32>
    %107 = arith.mulf %106, %105 : vector<1x128xf32>
    %108 = vector.broadcast %87 : f32 to vector<1x128xf32>
    %109 = arith.mulf %108, %107 : vector<1x128xf32>
    %c0_41 = arith.constant 0 : index
    %c0_42 = arith.constant 0 : index
    %110 = vector.load %arg7[%c0_41, %c0_42] : memref<256x1xf32, #tpu.memory_space<vmem>>, vector<256x1xf32>
    tpu.vector_store %arg7[%c0_41, %c0_42], %86 {strides = array<i32>} : memref<256x1xf32, #tpu.memory_space<vmem>>, vector<256x1xf32>,
    %c0_43 = arith.constant 0 : index
    %c0_44 = arith.constant 0 : index
    %111 = vector.load %arg8[%c0_43, %c0_44] : memref<1x128xf32, #tpu.memory_space<vmem>>, vector<1x128xf32>
    tpu.vector_store %arg8[%c0_43, %c0_44], %109 {strides = array<i32>} : memref<1x128xf32, #tpu.memory_space<vmem>>, vector<1x128xf32>,
    return
  }
}

</mosaic_0001>

<llo_original>
// kernel: _sinkhorn_apply.1
$region0: #{_sinkhorn_apply.1}
  #allocation0 [shape = 'u32[]', space=smem, size = 0x4, offset = 0x4, fixed_abs, tag = 'smem constant byte address 0x4 - core index']
  #allocation1 [shape = 'u32[72,128]{1,0:T(1,128)}', space=vmem, size = 0x9000, scoped, tag = 'internal scratch']
  #allocation2 [shape = 'f32[256,128]{1,0:T(8,128)}', space=vmem, size = 0x20000, scoped, tag = 'scratch operand']
  %s0 = inlined_call_operand.vmem [shape: f32[102], index: 0, kind: input, shape index: {}]
  %s1 = inlined_call_operand.vmem [shape: f32[102], index: 1, kind: input, shape index: {}]
  %s2 = inlined_call_operand.vmem [shape: f32[102], index: 2, kind: input, shape index: {}]
  %s3 = inlined_call_operand.vmem [shape: f32[256,32], index: 3, kind: input, shape index: {}]
  %s4 = inlined_call_operand.vmem [shape: f32[128,32], index: 4, kind: input, shape index: {}]
  %s5 = inlined_call_operand.vmem [shape: f32[256,1], index: 5, kind: input, shape index: {}]
  %s6 = inlined_call_operand.vmem [shape: f32[1,128], index: 6, kind: input, shape index: {}]
  %s7 = inlined_call_operand.vmem [shape: f32[256,1], index: 7, kind: output, shape index: {0}]
  %s8 = inlined_call_operand.vmem [shape: f32[1,128], index: 8, kind: output, shape index: {1}]
  %9 = xla_tuple %s7, %s8
  %s10 = sld [smem:[#allocation0]]
  $region65: #{_sinkhorn_apply.1} parent=0
    _
  %s12 = ssub.s32 1, %s10
  %s13 = scalar_select 0, %s12, %s10
  $region1: #{_sinkhorn_apply.1} parent=0
    #allocation3 [shape = 'u8[512]{0}', space=smem, size = 0x200, scoped, tag = 'input window, operand 0, single buffered']
    #allocation4 [shape = 's32[1]{0}', space=sflag, size = 0x4, scoped, tag = 'scoped memory for _sinkhorn_apply.1']
    #allocation5 [shape = 'u8[512]{0}', space=smem, size = 0x200, scoped, tag = 'input window, operand 1, single buffered']
    #allocation6 [shape = 's32[1]{0}', space=sflag, size = 0x4, scoped, tag = 'scoped memory for _sinkhorn_apply.1']
    #allocation7 [shape = 'u8[512]{0}', space=smem, size = 0x200, scoped, tag = 'input window, operand 2, single buffered']
    %14 = vsyncpa [#allocation4], 0
    %15 = vsyncpa [#allocation6], 0
    // Predicated region
    $region2: #{_sinkhorn_apply.1} parent=1 // pred_check
      _
    $region3: #{_sinkhorn_apply.1} parent=1 // pred_check_branch
      %17 = sbr.rel (0) target = $region5
    $region4: #{_sinkhorn_apply.1} parent=1 // pred_region
      %19 = vsyncadd [#allocation4], 0
      %s21 = sshll.u32 %s0, 4
      %s22 = int_to_ptr.vmem [resolvable:$true] %s21
      %24 = dma.vmem_to_smem %s22, 16, [#allocation3], [#allocation4]
    $region5: #{_sinkhorn_apply.1} parent=1 // pred_fallthru
      _
    // Predicated region
    $region6: #{_sinkhorn_apply.1} parent=1 // pred_check
      _
    $region7: #{_sinkhorn_apply.1} parent=1 // pred_check_branch
      %26 = sbr.rel (0) target = $region9
    $region8: #{_sinkhorn_apply.1} parent=1 // pred_region
      %28 = vsyncadd [#allocation6], 0
      %s30 = sshll.u32 %s1, 4
      %s31 = int_to_ptr.vmem [resolvable:$true] %s30
      %33 = dma.vmem_to_smem %s31, 16, [#allocation5], [#allocation6]
    $region9: #{_sinkhorn_apply.1} parent=1 // pred_fallthru
      _
    // Predicated region
    $region10: #{_sinkhorn_apply.1} parent=1 // pred_check
      _
    $region11: #{_sinkhorn_apply.1} parent=1 // pred_check_branch
      %35 = sbr.rel (0) target = $region13
    $region12: #{_sinkhorn_apply.1} parent=1 // pred_region
      %37 = vsyncadd [#allocation6], 0
      %s39 = sshll.u32 %s2, 4
      %s40 = int_to_ptr.vmem [resolvable:$true] %s39
      %42 = dma.vmem_to_smem %s40, 16, [#allocation7], [#allocation6]
    $region13: #{_sinkhorn_apply.1} parent=1 // pred_fallthru
      _
    // Predicated region
    $region14: #{_sinkhorn_apply.1} parent=1 // pred_check
      _
    $region15: #{_sinkhorn_apply.1} parent=1 // pred_check_branch
      %44 = sbr.rel (0) target = $region17
    $region16: #{_sinkhorn_apply.1} parent=1 // pred_region
      _
    $region17: #{_sinkhorn_apply.1} parent=1 // pred_fallthru
      _
    // Predicated region
    $region18: #{_sinkhorn_apply.1} parent=1 // pred_check
      _
    $region19: #{_sinkhorn_apply.1} parent=1 // pred_check_branch
      %46 = sbr.rel (0) target = $region21
    $region20: #{_sinkhorn_apply.1} parent=1 // pred_region
      _
    $region21: #{_sinkhorn_apply.1} parent=1 // pred_fallthru
      _
    // Predicated region
    $region22: #{_sinkhorn_apply.1} parent=1 // pred_check
      _
    $region23: #{_sinkhorn_apply.1} parent=1 // pred_check_branch
      %48 = sbr.rel (0) target = $region25
    $region24: #{_sinkhorn_apply.1} parent=1 // pred_region
      _
    $region25: #{_sinkhorn_apply.1} parent=1 // pred_fallthru
      _
    // Predicated region
    $region26: #{_sinkhorn_apply.1} parent=1 // pred_check
      _
    $region27: #{_sinkhorn_apply.1} parent=1 // pred_check_branch
      %50 = sbr.rel (0) target = $region29
    $region28: #{_sinkhorn_apply.1} parent=1 // pred_region
      _
    $region29: #{_sinkhorn_apply.1} parent=1 // pred_fallthru
      _
    // Predicated region
    $region30: #{_sinkhorn_apply.1} parent=1 // pred_check
      _
    $region31: #{_sinkhorn_apply.1} parent=1 // pred_check_branch
      %52 = sbr.rel (0) target = $region33
    $region32: #{_sinkhorn_apply.1} parent=1 // pred_region
      %54 = dma.done [#allocation4], 16
    $region33: #{_sinkhorn_apply.1} parent=1 // pred_fallthru
      _
    // Predicated region
    $region34: #{_sinkhorn_apply.1} parent=1 // pred_check
      _
    $region35: #{_sinkhorn_apply.1} parent=1 // pred_check_branch
      %56 = sbr.rel (0) target = $region37
    $region36: #{_sinkhorn_apply.1} parent=1 // pred_region
      %58 = dma.done [#allocation6], 16
    $region37: #{_sinkhorn_apply.1} parent=1 // pred_fallthru
      _
    // Predicated region
    $region38: #{_sinkhorn_apply.1} parent=1 // pred_check
      _
    $region39: #{_sinkhorn_apply.1} parent=1 // pred_check_branch
      %60 = sbr.rel (0) target = $region41
    $region40: #{_sinkhorn_apply.1} parent=1 // pred_region
      %62 = dma.done [#allocation6], 16
    $region41: #{_sinkhorn_apply.1} parent=1 // pred_fallthru
      _
    %63 = sfence
    %v64 = vld [vmem:[%s3] sm:$0xff]
    %v65 = vld [vmem:[%s3 + $0x8] sm:$0xff]
    %v66 = vld [vmem:[%s3 + $0x10] sm:$0xff]
    %v67 = vld [vmem:[%s3 + $0x18] sm:$0xff]
    %v68 = vld [vmem:[%s3 + $0x20] sm:$0xff]
    %v69 = vld [vmem:[%s3 + $0x28] sm:$0xff]
    %v70 = vld [vmem:[%s3 + $0x30] sm:$0xff]
    %v71 = vld [vmem:[%s3 + $0x38] sm:$0xff]
    %v72 = vld [vmem:[%s3 + $0x40] sm:$0xff]
    %v73 = vld [vmem:[%s3 + $0x48] sm:$0xff]
    %v74 = vld [vmem:[%s3 + $0x50] sm:$0xff]
    %v75 = vld [vmem:[%s3 + $0x58] sm:$0xff]
    %v76 = vld [vmem:[%s3 + $0x60] sm:$0xff]
    %v77 = vld [vmem:[%s3 + $0x68] sm:$0xff]
    %v78 = vld [vmem:[%s3 + $0x70] sm:$0xff]
    %v79 = vld [vmem:[%s3 + $0x78] sm:$0xff]
    %v80 = vld [vmem:[%s3 + $0x80] sm:$0xff]
    %v81 = vld [vmem:[%s3 + $0x88] sm:$0xff]
    %v82 = vld [vmem:[%s3 + $0x90] sm:$0xff]
    %v83 = vld [vmem:[%s3 + $0x98] sm:$0xff]
    %v84 = vld [vmem:[%s3 + $0xa0] sm:$0xff]
    %v85 = vld [vmem:[%s3 + $0xa8] sm:$0xff]
    %v86 = vld [vmem:[%s3 + $0xb0] sm:$0xff]
    %v87 = vld [vmem:[%s3 + $0xb8] sm:$0xff]
    %v88 = vld [vmem:[%s3 + $0xc0] sm:$0xff]
    %v89 = vld [vmem:[%s3 + $0xc8] sm:$0xff]
    %v90 = vld [vmem:[%s3 + $0xd0] sm:$0xff]
    %v91 = vld [vmem:[%s3 + $0xd8] sm:$0xff]
    %v92 = vld [vmem:[%s3 + $0xe0] sm:$0xff]
    %v93 = vld [vmem:[%s3 + $0xe8] sm:$0xff]
    %v94 = vld [vmem:[%s3 + $0xf0] sm:$0xff]
    %v95 = vld [vmem:[%s3 + $0xf8] sm:$0xff]
    %v96 = vld [vmem:[%s4] sm:$0xff]
    %v97 = vld [vmem:[%s4 + $0x8] sm:$0xff]
    %v98 = vld [vmem:[%s4 + $0x10] sm:$0xff]
    %v99 = vld [vmem:[%s4 + $0x18] sm:$0xff]
    %v100 = vld [vmem:[%s4 + $0x20] sm:$0xff]
    %v101 = vld [vmem:[%s4 + $0x28] sm:$0xff]
    %v102 = vld [vmem:[%s4 + $0x30] sm:$0xff]
    %v103 = vld [vmem:[%s4 + $0x38] sm:$0xff]
    %v104 = vld [vmem:[%s4 + $0x40] sm:$0xff]
    %v105 = vld [vmem:[%s4 + $0x48] sm:$0xff]
    %v106 = vld [vmem:[%s4 + $0x50] sm:$0xff]
    %v107 = vld [vmem:[%s4 + $0x58] sm:$0xff]
    %v108 = vld [vmem:[%s4 + $0x60] sm:$0xff]
    %v109 = vld [vmem:[%s4 + $0x68] sm:$0xff]
    %v110 = vld [vmem:[%s4 + $0x70] sm:$0xff]
    %v111 = vld [vmem:[%s4 + $0x78] sm:$0xff]
    %v112 = vmul.f32 %v64, %v64
    %v113 = vmul.f32 %v65, %v65
    %v114 = vmul.f32 %v66, %v66
    %v115 = vmul.f32 %v67, %v67
    %v116 = vmul.f32 %v68, %v68
    %v117 = vmul.f32 %v69, %v69
    %v118 = vmul.f32 %v70, %v70
    %v119 = vmul.f32 %v71, %v71
    %v120 = vmul.f32 %v72, %v72
    %v121 = vmul.f32 %v73, %v73
    %v122 = vmul.f32 %v74, %v74
    %v123 = vmul.f32 %v75, %v75
    %v124 = vmul.f32 %v76, %v76
    %v125 = vmul.f32 %v77, %v77
    %v126 = vmul.f32 %v78, %v78
    %v127 = vmul.f32 %v79, %v79
    %v128 = vmul.f32 %v80, %v80
    %v129 = vmul.f32 %v81, %v81
    %v130 = vmul.f32 %v82, %v82
    %v131 = vmul.f32 %v83, %v83
    %v132 = vmul.f32 %v84, %v84
    %v133 = vmul.f32 %v85, %v85
    %v134 = vmul.f32 %v86, %v86
    %v135 = vmul.f32 %v87, %v87
    %v136 = vmul.f32 %v88, %v88
    %v137 = vmul.f32 %v89, %v89
    %v138 = vmul.f32 %v90, %v90
    %v139 = vmul.f32 %v91, %v91
    %v140 = vmul.f32 %v92, %v92
    %v141 = vmul.f32 %v93, %v93
    %v142 = vmul.f32 %v94, %v94
    %v143 = vmul.f32 %v95, %v95
    %vm144 = vcmask 261120
    %v145 = vsel %vm144, %v112, 0.0
    %146 = vadd.xlane.f32.xlu0 %v145
    %v147 = vpop.xlane.xlu0 %146
    %v148 = vsel %vm144, %v113, 0.0
    %149 = vadd.xlane.f32.xlu0 %v148
    %v150 = vpop.xlane.xlu0 %149
    %v151 = vsel %vm144, %v114, 0.0
    %152 = vadd.xlane.f32.xlu0 %v151
    %v153 = vpop.xlane.xlu0 %152
    %v154 = vsel %vm144, %v115, 0.0
    %155 = vadd.xlane.f32.xlu0 %v154
    %v156 = vpop.xlane.xlu0 %155
    %v157 = vsel %vm144, %v116, 0.0
    %158 = vadd.xlane.f32.xlu0 %v157
    %v159 = vpop.xlane.xlu0 %158
    %v160 = vsel %vm144, %v117, 0.0
    %161 = vadd.xlane.f32.xlu0 %v160
    %v162 = vpop.xlane.xlu0 %161
    %v163 = vsel %vm144, %v118, 0.0
    %164 = vadd.xlane.f32.xlu0 %v163
    %v165 = vpop.xlane.xlu0 %164
    %v166 = vsel %vm144, %v119, 0.0
    %167 = vadd.xlane.f32.xlu0 %v166
    %v168 = vpop.xlane.xlu0 %167
    %v169 = vsel %vm144, %v120, 0.0
    %170 = vadd.xlane.f32.xlu0 %v169
    %v171 = vpop.xlane.xlu0 %170
    %v172 = vsel %vm144, %v121, 0.0
    %173 = vadd.xlane.f32.xlu0 %v172
    %v174 = vpop.xlane.xlu0 %173
    %v175 = vsel %vm144, %v122, 0.0
    %176 = vadd.xlane.f32.xlu0 %v175
    %v177 = vpop.xlane.xlu0 %176
    %v178 = vsel %vm144, %v123, 0.0
    %179 = vadd.xlane.f32.xlu0 %v178
    %v180 = vpop.xlane.xlu0 %179
    %v181 = vsel %vm144, %v124, 0.0
    %182 = vadd.xlane.f32.xlu0 %v181
    %v183 = vpop.xlane.xlu0 %182
    %v184 = vsel %vm144, %v125, 0.0
    %185 = vadd.xlane.f32.xlu0 %v184
    %v186 = vpop.xlane.xlu0 %185
    %v187 = vsel %vm144, %v126, 0.0
    %188 = vadd.xlane.f32.xlu0 %v187
    %v189 = vpop.xlane.xlu0 %188
    %v190 = vsel %vm144, %v127, 0.0
    %191 = vadd.xlane.f32.xlu0 %v190
    %v192 = vpop.xlane.xlu0 %191
    %v193 = vsel %vm144, %v128, 0.0
    %194 = vadd.xlane.f32.xlu0 %v193
    %v195 = vpop.xlane.xlu0 %194
    %v196 = vsel %vm144, %v129, 0.0
    %197 = vadd.xlane.f32.xlu0 %v196
    %v198 = vpop.xlane.xlu0 %197
    %v199 = vsel %vm144, %v130, 0.0
    %200 = vadd.xlane.f32.xlu0 %v199
    %v201 = vpop.xlane.xlu0 %200
    %v202 = vsel %vm144, %v131, 0.0
    %203 = vadd.xlane.f32.xlu0 %v202
    %v204 = vpop.xlane.xlu0 %203
    %v205 = vsel %vm144, %v132, 0.0
    %206 = vadd.xlane.f32.xlu0 %v205
    %v207 = vpop.xlane.xlu0 %206
    %v208 = vsel %vm144, %v133, 0.0
    %209 = vadd.xlane.f32.xlu0 %v208
    %v210 = vpop.xlane.xlu0 %209
    %v211 = vsel %vm144, %v134, 0.0
    %212 = vadd.xlane.f32.xlu0 %v211
    %v213 = vpop.xlane.xlu0 %212
    %v214 = vsel %vm144, %v135, 0.0
    %215 = vadd.xlane.f32.xlu0 %v214
    %v216 = vpop.xlane.xlu0 %215
    %v217 = vsel %vm144, %v136, 0.0
    %218 = vadd.xlane.f32.xlu0 %v217
    %v219 = vpop.xlane.xlu0 %218
    %v220 = vsel %vm144, %v137, 0.0
    %221 = vadd.xlane.f32.xlu0 %v220
    %v222 = vpop.xlane.xlu0 %221
    %v223 = vsel %vm144, %v138, 0.0
    %224 = vadd.xlane.f32.xlu0 %v223
    %v225 = vpop.xlane.xlu0 %224
    %v226 = vsel %vm144, %v139, 0.0
    %227 = vadd.xlane.f32.xlu0 %v226
    %v228 = vpop.xlane.xlu0 %227
    %v229 = vsel %vm144, %v140, 0.0
    %230 = vadd.xlane.f32.xlu0 %v229
    %v231 = vpop.xlane.xlu0 %230
    %v232 = vsel %vm144, %v141, 0.0
    %233 = vadd.xlane.f32.xlu0 %v232
    %v234 = vpop.xlane.xlu0 %233
    %v235 = vsel %vm144, %v142, 0.0
    %236 = vadd.xlane.f32.xlu0 %v235
    %v237 = vpop.xlane.xlu0 %236
    %v238 = vsel %vm144, %v143, 0.0
    %239 = vadd.xlane.f32.xlu0 %v238
    %v240 = vpop.xlane.xlu0 %239
    %v241 = vmul.f32 %v96, %v96
    %v242 = vmul.f32 %v97, %v97
    %v243 = vmul.f32 %v98, %v98
    %v244 = vmul.f32 %v99, %v99
    %v245 = vmul.f32 %v100, %v100
    %v246 = vmul.f32 %v101, %v101
    %v247 = vmul.f32 %v102, %v102
    %v248 = vmul.f32 %v103, %v103
    %v249 = vmul.f32 %v104, %v104
    %v250 = vmul.f32 %v105, %v105
    %v251 = vmul.f32 %v106, %v106
    %v252 = vmul.f32 %v107, %v107
    %v253 = vmul.f32 %v108, %v108
    %v254 = vmul.f32 %v109, %v109
    %v255 = vmul.f32 %v110, %v110
    %v256 = vmul.f32 %v111, %v111
    %v258 = vsel %vm144, 1.0, 0
    %v261 = vsel %vm144, %v241, 0
    %v264 = vsel %vm144, %v242, 0
    %v267 = vsel %vm144, %v243, 0
    %v270 = vsel %vm144, %v244, 0
    %v273 = vsel %vm144, %v245, 0
    %v276 = vsel %vm144, %v246, 0
    %v279 = vsel %vm144, %v247, 0
    %v282 = vsel %vm144, %v248, 0
    %v285 = vsel %vm144, %v249, 0
    %v288 = vsel %vm144, %v250, 0
    %v291 = vsel %vm144, %v251, 0
    %v294 = vsel %vm144, %v252, 0
    %v297 = vsel %vm144, %v253, 0
    %v300 = vsel %vm144, %v254, 0
    %v303 = vsel %vm144, %v255, 0
    %v306 = vsel %vm144, %v256, 0
    %308 = vmatpush.xpose.msra.mxu0 %v306
    %309 = vmatpush.xpose.msra.mxu0 %v303
    %310 = vmatpush.xpose.msra.mxu0 %v300
    %311 = vmatpush.xpose.msra.mxu0 %v297
    %312 = vmatpush.xpose.msra.mxu0 %v294
    %313 = vmatpush.xpose.msra.mxu0 %v291
    %314 = vmatpush.xpose.msra.mxu0 %v288
    %315 = vmatpush.xpose.msra.mxu0 %v285
    %316 = vmatpush.xpose.msra.mxu0 %v282
    %317 = vmatpush.xpose.msra.mxu0 %v279
    %318 = vmatpush.xpose.msra.mxu0 %v276
    %319 = vmatpush.xpose.msra.mxu0 %v273
    %320 = vmatpush.xpose.msra.mxu0 %v270
    %321 = vmatpush.xpose.msra.mxu0 %v267
    %322 = vmatpush.xpose.msra.mxu0 %v264
    %323 = vmatpush.xpose.msra.mxu0 %v261
    %324 = vmatmul.f32.gmra.mxu0 %v258
    %v325 = vpop.f32.mrf.mxu0
    %v326 = vadd.f32 0.0, %v325
    %327 = vdwg.mxu0
    %v329 = vsel %vm144, %v64, 0
    %v332 = vsel %vm144, %v65, 0
    %v335 = vsel %vm144, %v66, 0
    %v338 = vsel %vm144, %v67, 0
    %v341 = vsel %vm144, %v68, 0
    %v344 = vsel %vm144, %v69, 0
    %v347 = vsel %vm144, %v70, 0
    %v350 = vsel %vm144, %v71, 0
    %v353 = vsel %vm144, %v72, 0
    %v356 = vsel %vm144, %v73, 0
    %v359 = vsel %vm144, %v74, 0
    %v362 = vsel %vm144, %v75, 0
    %v365 = vsel %vm144, %v76, 0
    %v368 = vsel %vm144, %v77, 0
    %v371 = vsel %vm144, %v78, 0
    %v374 = vsel %vm144, %v79, 0
    %v377 = vsel %vm144, %v80, 0
    %v380 = vsel %vm144, %v81, 0
    %v383 = vsel %vm144, %v82, 0
    %v386 = vsel %vm144, %v83, 0
    %v389 = vsel %vm144, %v84, 0
    %v392 = vsel %vm144, %v85, 0
    %v395 = vsel %vm144, %v86, 0
    %v398 = vsel %vm144, %v87, 0
    %v401 = vsel %vm144, %v88, 0
    %v404 = vsel %vm144, %v89, 0
    %v407 = vsel %vm144, %v90, 0
    %v410 = vsel %vm144, %v91, 0
    %v413 = vsel %vm144, %v92, 0
    %v416 = vsel %vm144, %v93, 0
    %v419 = vsel %vm144, %v94, 0
    %v422 = vsel %vm144, %v95, 0
    %v425 = vsel %vm144, %v96, 0
    %v428 = vsel %vm144, %v97, 0
    %v431 = vsel %vm144, %v98, 0
    %v434 = vsel %vm144, %v99, 0
    %v437 = vsel %vm144, %v100, 0
    %v440 = vsel %vm144, %v101, 0
    %v443 = vsel %vm144, %v102, 0
    %v446 = vsel %vm144, %v103, 0
    %v449 = vsel %vm144, %v104, 0
    %v452 = vsel %vm144, %v105, 0
    %v455 = vsel %vm144, %v106, 0
    %v458 = vsel %vm144, %v107, 0
    %v461 = vsel %vm144, %v108, 0
    %v464 = vsel %vm144, %v109, 0
    %v467 = vsel %vm144, %v110, 0
    %v470 = vsel %vm144, %v111, 0
    %472 = vmatpush.xpose.msra.mxu0 %v470
    %473 = vmatpush.xpose.msra.mxu0 %v467
    %474 = vmatpush.xpose.msra.mxu0 %v464
    %475 = vmatpush.xpose.msra.mxu0 %v461
    %476 = vmatpush.xpose.msra.mxu0 %v458
    %477 = vmatpush.xpose.msra.mxu0 %v455
    %478 = vmatpush.xpose.msra.mxu0 %v452
    %479 = vmatpush.xpose.msra.mxu0 %v449
    %480 = vmatpush.xpose.msra.mxu0 %v446
    %481 = vmatpush.xpose.msra.mxu0 %v443
    %482 = vmatpush.xpose.msra.mxu0 %v440
    %483 = vmatpush.xpose.msra.mxu0 %v437
    %484 = vmatpush.xpose.msra.mxu0 %v434
    %485 = vmatpush.xpose.msra.mxu0 %v431
    %486 = vmatpush.xpose.msra.mxu0 %v428
    %487 = vmatpush.xpose.msra.mxu0 %v425
    %488 = vmatmul.f32.gmra.mxu0 %v329
    %v489 = vpop.f32.mrf.mxu0
    %v490 = vadd.f32 0.0, %v489
    %491 = vmatmul.f32.gmra.mxu0 %v332
    %v492 = vpop.f32.mrf.mxu0
    %v493 = vadd.f32 0.0, %v492
    %494 = vmatmul.f32.gmra.mxu0 %v335
    %v495 = vpop.f32.mrf.mxu0
    %v496 = vadd.f32 0.0, %v495
    %497 = vmatmul.f32.gmra.mxu0 %v338
    %v498 = vpop.f32.mrf.mxu0
    %v499 = vadd.f32 0.0, %v498
    %500 = vmatmul.f32.gmra.mxu0 %v341
    %v501 = vpop.f32.mrf.mxu0
    %v502 = vadd.f32 0.0, %v501
    %503 = vmatmul.f32.gmra.mxu0 %v344
    %v504 = vpop.f32.mrf.mxu0
    %v505 = vadd.f32 0.0, %v504
    %506 = vmatmul.f32.gmra.mxu0 %v347
    %v507 = vpop.f32.mrf.mxu0
    %v508 = vadd.f32 0.0, %v507
    %509 = vmatmul.f32.gmra.mxu0 %v350
    %v510 = vpop.f32.mrf.mxu0
    %v511 = vadd.f32 0.0, %v510
    %512 = vmatmul.f32.gmra.mxu0 %v353
    %v513 = vpop.f32.mrf.mxu0
    %v514 = vadd.f32 0.0, %v513
    %515 = vmatmul.f32.gmra.mxu0 %v356
    %v516 = vpop.f32.mrf.mxu0
    %v517 = vadd.f32 0.0, %v516
    %518 = vmatmul.f32.gmra.mxu0 %v359
    %v519 = vpop.f32.mrf.mxu0
    %v520 = vadd.f32 0.0, %v519
    %521 = vmatmul.f32.gmra.mxu0 %v362
    %v522 = vpop.f32.mrf.mxu0
    %v523 = vadd.f32 0.0, %v522
    %524 = vmatmul.f32.gmra.mxu0 %v365
    %v525 = vpop.f32.mrf.mxu0
    %v526 = vadd.f32 0.0, %v525
    %527 = vmatmul.f32.gmra.mxu0 %v368
    %v528 = vpop.f32.mrf.mxu0
    %v529 = vadd.f32 0.0, %v528
    %530 = vmatmul.f32.gmra.mxu0 %v371
    %v531 = vpop.f32.mrf.mxu0
    %v532 = vadd.f32 0.0, %v531
    %533 = vmatmul.f32.gmra.mxu0 %v374
    %v534 = vpop.f32.mrf.mxu0
    %v535 = vadd.f32 0.0, %v534
    %536 = vmatmul.f32.gmra.mxu0 %v377
    %v537 = vpop.f32.mrf.mxu0
    %v538 = vadd.f32 0.0, %v537
    %539 = vmatmul.f32.gmra.mxu0 %v380
    %v540 = vpop.f32.mrf.mxu0
    %v541 = vadd.f32 0.0, %v540
    %542 = vmatmul.f32.gmra.mxu0 %v383
    %v543 = vpop.f32.mrf.mxu0
    %v544 = vadd.f32 0.0, %v543
    %545 = vmatmul.f32.gmra.mxu0 %v386
    %v546 = vpop.f32.mrf.mxu0
    %v547 = vadd.f32 0.0, %v546
    %548 = vmatmul.f32.gmra.mxu0 %v389
    %v549 = vpop.f32.mrf.mxu0
    %v550 = vadd.f32 0.0, %v549
    %551 = vmatmul.f32.gmra.mxu0 %v392
    %v552 = vpop.f32.mrf.mxu0
    %v553 = vadd.f32 0.0, %v552
    %554 = vmatmul.f32.gmra.mxu0 %v395
    %v555 = vpop.f32.mrf.mxu0
    %v556 = vadd.f32 0.0, %v555
    %557 = vmatmul.f32.gmra.mxu0 %v398
    %v558 = vpop.f32.mrf.mxu0
    %v559 = vadd.f32 0.0, %v558
    %560 = vmatmul.f32.gmra.mxu0 %v401
    %v561 = vpop.f32.mrf.mxu0
    %v562 = vadd.f32 0.0, %v561
    %563 = vmatmul.f32.gmra.mxu0 %v404
    %v564 = vpop.f32.mrf.mxu0
    %v565 = vadd.f32 0.0, %v564
    %566 = vmatmul.f32.gmra.mxu0 %v407
    %v567 = vpop.f32.mrf.mxu0
    %v568 = vadd.f32 0.0, %v567
    %569 = vmatmul.f32.gmra.mxu0 %v410
    %v570 = vpop.f32.mrf.mxu0
    %v571 = vadd.f32 0.0, %v570
    %572 = vmatmul.f32.gmra.mxu0 %v413
    %v573 = vpop.f32.mrf.mxu0
    %v574 = vadd.f32 0.0, %v573
    %575 = vmatmul.f32.gmra.mxu0 %v416
    %v576 = vpop.f32.mrf.mxu0
    %v577 = vadd.f32 0.0, %v576
    %578 = vmatmul.f32.gmra.mxu0 %v419
    %v579 = vpop.f32.mrf.mxu0
    %v580 = vadd.f32 0.0, %v579
    %581 = vmatmul.f32.gmra.mxu0 %v422
    %v582 = vpop.f32.mrf.mxu0
    %v583 = vadd.f32 0.0, %v582
    %584 = vdwg.mxu0
    %v585 = vperm.slane %v326, 0
    %v586 = vadd.f32 %v147, %v585
    %v587 = vadd.f32 %v150, %v585
    %v588 = vadd.f32 %v153, %v585
    %v589 = vadd.f32 %v156, %v585
    %v590 = vadd.f32 %v159, %v585
    %v591 = vadd.f32 %v162, %v585
    %v592 = vadd.f32 %v165, %v585
    %v593 = vadd.f32 %v168, %v585
    %v594 = vadd.f32 %v171, %v585
    %v595 = vadd.f32 %v174, %v585
    %v596 = vadd.f32 %v177, %v585
    %v597 = vadd.f32 %v180, %v585
    %v598 = vadd.f32 %v183, %v585
    %v599 = vadd.f32 %v186, %v585
    %v600 = vadd.f32 %v189, %v585
    %v601 = vadd.f32 %v192, %v585
    %v602 = vadd.f32 %v195, %v585
    %v603 = vadd.f32 %v198, %v585
    %v604 = vadd.f32 %v201, %v585
    %v605 = vadd.f32 %v204, %v585
    %v606 = vadd.f32 %v207, %v585
    %v607 = vadd.f32 %v210, %v585
    %v608 = vadd.f32 %v213, %v585
    %v609 = vadd.f32 %v216, %v585
    %v610 = vadd.f32 %v219, %v585
    %v611 = vadd.f32 %v222, %v585
    %v612 = vadd.f32 %v225, %v585
    %v613 = vadd.f32 %v228, %v585
    %v614 = vadd.f32 %v231, %v585
    %v615 = vadd.f32 %v234, %v585
    %v616 = vadd.f32 %v237, %v585
    %v617 = vadd.f32 %v240, %v585
    %v618 = vmul.f32 %v586, 0.5
    %v619 = vmul.f32 %v587, 0.5
    %v620 = vmul.f32 %v588, 0.5
    %v621 = vmul.f32 %v589, 0.5
    %v622 = vmul.f32 %v590, 0.5
    %v623 = vmul.f32 %v591, 0.5
    %v624 = vmul.f32 %v592, 0.5
    %v625 = vmul.f32 %v593, 0.5
    %v626 = vmul.f32 %v594, 0.5
    %v627 = vmul.f32 %v595, 0.5
    %v628 = vmul.f32 %v596, 0.5
    %v629 = vmul.f32 %v597, 0.5
    %v630 = vmul.f32 %v598, 0.5
    %v631 = vmul.f32 %v599, 0.5
    %v632 = vmul.f32 %v600, 0.5
    %v633 = vmul.f32 %v601, 0.5
    %v634 = vmul.f32 %v602, 0.5
    %v635 = vmul.f32 %v603, 0.5
    %v636 = vmul.f32 %v604, 0.5
    %v637 = vmul.f32 %v605, 0.5
    %v638 = vmul.f32 %v606, 0.5
    %v639 = vmul.f32 %v607, 0.5
    %v640 = vmul.f32 %v608, 0.5
    %v641 = vmul.f32 %v609, 0.5
    %v642 = vmul.f32 %v610, 0.5
    %v643 = vmul.f32 %v611, 0.5
    %v644 = vmul.f32 %v612, 0.5
    %v645 = vmul.f32 %v613, 0.5
    %v646 = vmul.f32 %v614, 0.5
    %v647 = vmul.f32 %v615, 0.5
    %v648 = vmul.f32 %v616, 0.5
    %v649 = vmul.f32 %v617, 0.5
    %v650 = vsub.f32 %v618, %v490
    %v651 = vsub.f32 %v619, %v493
    %v652 = vsub.f32 %v620, %v496
    %v653 = vsub.f32 %v621, %v499
    %v654 = vsub.f32 %v622, %v502
    %v655 = vsub.f32 %v623, %v505
    %v656 = vsub.f32 %v624, %v508
    %v657 = vsub.f32 %v625, %v511
    %v658 = vsub.f32 %v626, %v514
    %v659 = vsub.f32 %v627, %v517
    %v660 = vsub.f32 %v628, %v520
    %v661 = vsub.f32 %v629, %v523
    %v662 = vsub.f32 %v630, %v526
    %v663 = vsub.f32 %v631, %v529
    %v664 = vsub.f32 %v632, %v532
    %v665 = vsub.f32 %v633, %v535
    %v666 = vsub.f32 %v634, %v538
    %v667 = vsub.f32 %v635, %v541
    %v668 = vsub.f32 %v636, %v544
    %v669 = vsub.f32 %v637, %v547
    %v670 = vsub.f32 %v638, %v550
    %v671 = vsub.f32 %v639, %v553
    %v672 = vsub.f32 %v640, %v556
    %v673 = vsub.f32 %v641, %v559
    %v674 = vsub.f32 %v642, %v562
    %v675 = vsub.f32 %v643, %v565
    %v676 = vsub.f32 %v644, %v568
    %v677 = vsub.f32 %v645, %v571
    %v678 = vsub.f32 %v646, %v574
    %v679 = vsub.f32 %v647, %v577
    %v680 = vsub.f32 %v648, %v580
    %v681 = vsub.f32 %v649, %v583
    %682 = vst [vmem:[#allocation2] sm:$0xff] %v650
    %683 = vst [vmem:[#allocation2 + $0x8] sm:$0xff] %v651
    %684 = vst [vmem:[#allocation2 + $0x10] sm:$0xff] %v652
    %685 = vst [vmem:[#allocation2 + $0x18] sm:$0xff] %v653
    %686 = vst [vmem:[#allocation2 + $0x20] sm:$0xff] %v654
    %687 = vst [vmem:[#allocation2 + $0x28] sm:$0xff] %v655
    %688 = vst [vmem:[#allocation2 + $0x30] sm:$0xff] %v656
    %689 = vst [vmem:[#allocation2 + $0x38] sm:$0xff] %v657
    %690 = vst [vmem:[#allocation2 + $0x40] sm:$0xff] %v658
    %691 = vst [vmem:[#allocation2 + $0x48] sm:$0xff] %v659
    %692 = vst [vmem:[#allocation2 + $0x50] sm:$0xff] %v660
    %693 = vst [vmem:[#allocation2 + $0x58] sm:$0xff] %v661
    %694 = vst [vmem:[#allocation2 + $0x60] sm:$0xff] %v662
    %695 = vst [vmem:[#allocation2 + $0x68] sm:$0xff] %v663
    %696 = vst [vmem:[#allocation2 + $0x70] sm:$0xff] %v664
    %697 = vst [vmem:[#allocation2 + $0x78] sm:$0xff] %v665
    %698 = vst [vmem:[#allocation2 + $0x80] sm:$0xff] %v666
    %699 = vst [vmem:[#allocation2 + $0x88] sm:$0xff] %v667
    %700 = vst [vmem:[#allocation2 + $0x90] sm:$0xff] %v668
    %701 = vst [vmem:[#allocation2 + $0x98] sm:$0xff] %v669
    %702 = vst [vmem:[#allocation2 + $0xa0] sm:$0xff] %v670
    %703 = vst [vmem:[#allocation2 + $0xa8] sm:$0xff] %v671
    %704 = vst [vmem:[#allocation2 + $0xb0] sm:$0xff] %v672
    %705 = vst [vmem:[#allocation2 + $0xb8] sm:$0xff] %v673
    %706 = vst [vmem:[#allocation2 + $0xc0] sm:$0xff] %v674
    %707 = vst [vmem:[#allocation2 + $0xc8] sm:$0xff] %v675
    %708 = vst [vmem:[#allocation2 + $0xd0] sm:$0xff] %v676
    %709 = vst [vmem:[#allocation2 + $0xd8] sm:$0xff] %v677
    %710 = vst [vmem:[#allocation2 + $0xe0] sm:$0xff] %v678
    %711 = vst [vmem:[#allocation2 + $0xe8] sm:$0xff] %v679
    %712 = vst [vmem:[#allocation2 + $0xf0] sm:$0xff] %v680
    %713 = vst [vmem:[#allocation2 + $0xf8] sm:$0xff] %v681
    %v714 = vld [vmem:[%s5] sm:$0xff]
    %v715 = vld [vmem:[%s5 + $0x8] sm:$0xff]
    %v716 = vld [vmem:[%s5 + $0x10] sm:$0xff]
    %v717 = vld [vmem:[%s5 + $0x18] sm:$0xff]
    %v718 = vld [vmem:[%s5 + $0x20] sm:$0xff]
    %v719 = vld [vmem:[%s5 + $0x28] sm:$0xff]
    %v720 = vld [vmem:[%s5 + $0x30] sm:$0xff]
    %v721 = vld [vmem:[%s5 + $0x38] sm:$0xff]
    %v722 = vld [vmem:[%s5 + $0x40] sm:$0xff]
    %v723 = vld [vmem:[%s5 + $0x48] sm:$0xff]
    %v724 = vld [vmem:[%s5 + $0x50] sm:$0xff]
    %v725 = vld [vmem:[%s5 + $0x58] sm:$0xff]
    %v726 = vld [vmem:[%s5 + $0x60] sm:$0xff]
    %v727 = vld [vmem:[%s5 + $0x68] sm:$0xff]
    %v728 = vld [vmem:[%s5 + $0x70] sm:$0xff]
    %v729 = vld [vmem:[%s5 + $0x78] sm:$0xff]
    %v730 = vld [vmem:[%s5 + $0x80] sm:$0xff]
    %v731 = vld [vmem:[%s5 + $0x88] sm:$0xff]
    %v732 = vld [vmem:[%s5 + $0x90] sm:$0xff]
    %v733 = vld [vmem:[%s5 + $0x98] sm:$0xff]
    %v734 = vld [vmem:[%s5 + $0xa0] sm:$0xff]
    %v735 = vld [vmem:[%s5 + $0xa8] sm:$0xff]
    %v736 = vld [vmem:[%s5 + $0xb0] sm:$0xff]
    %v737 = vld [vmem:[%s5 + $0xb8] sm:$0xff]
    %v738 = vld [vmem:[%s5 + $0xc0] sm:$0xff]
    %v739 = vld [vmem:[%s5 + $0xc8] sm:$0xff]
    %v740 = vld [vmem:[%s5 + $0xd0] sm:$0xff]
    %v741 = vld [vmem:[%s5 + $0xd8] sm:$0xff]
    %v742 = vld [vmem:[%s5 + $0xe0] sm:$0xff]
    %v743 = vld [vmem:[%s5 + $0xe8] sm:$0xff]
    %v744 = vld [vmem:[%s5 + $0xf0] sm:$0xff]
    %v745 = vld [vmem:[%s5 + $0xf8] sm:$0xff]
    %v746 = vld [vmem:[%s6] sm:$0x1]
    %s747 = sld [smem:[#allocation3]]
    %v748 = vstv %s747
    %v749 = vrcp.pop %v748
    %v750 = vmul.f32 %v748, %v749
    %v751 = vsub.f32 1.0, %v750
    %v752 = vmul.f32 %v749, %v751
    %v753 = vadd.f32 %v749, %v752
    %vm754 = vweird.f32 %v748
    %vm755 = vweird.f32 %v749
    %vm756 = vmor %vm754, %vm755
    %v757 = vsel %vm756, %v749, %v753
    %v758 = vand.u32 2147483647, %v748
    %vm759 = vcmp.eq.f32.partialorder %v758, 8.507059e+37
    %v760 = vand.u32 %v748, 2147483648
    %v761 = vor.u32 1.1754944e-38, %v760
    %v762 = vsel %vm759, %v761, %v757
    %s763 = vtos %v762
    %s764 = sld [smem:[#allocation5]]
    %v765 = vld [vmem:[#allocation2] sm:$0xff]
    %v766 = vld [vmem:[#allocation2 + $0x8] sm:$0xff]
    %v767 = vld [vmem:[#allocation2 + $0x10] sm:$0xff]
    %v768 = vld [vmem:[#allocation2 + $0x18] sm:$0xff]
    %v769 = vld [vmem:[#allocation2 + $0x20] sm:$0xff]
    %v770 = vld [vmem:[#allocation2 + $0x28] sm:$0xff]
    %v771 = vld [vmem:[#allocation2 + $0x30] sm:$0xff]
    %v772 = vld [vmem:[#allocation2 + $0x38] sm:$0xff]
    %v773 = vld [vmem:[#allocation2 + $0x40] sm:$0xff]
    %v774 = vld [vmem:[#allocation2 + $0x48] sm:$0xff]
    %v775 = vld [vmem:[#allocation2 + $0x50] sm:$0xff]
    %v776 = vld [vmem:[#allocation2 + $0x58] sm:$0xff]
    %v777 = vld [vmem:[#allocation2 + $0x60] sm:$0xff]
    %v778 = vld [vmem:[#allocation2 + $0x68] sm:$0xff]
    %v779 = vld [vmem:[#allocation2 + $0x70] sm:$0xff]
    %v780 = vld [vmem:[#allocation2 + $0x78] sm:$0xff]
    %v781 = vld [vmem:[#allocation2 + $0x80] sm:$0xff]
    %v782 = vld [vmem:[#allocation2 + $0x88] sm:$0xff]
    %v783 = vld [vmem:[#allocation2 + $0x90] sm:$0xff]
    %v784 = vld [vmem:[#allocation2 + $0x98] sm:$0xff]
    %v785 = vld [vmem:[#allocation2 + $0xa0] sm:$0xff]
    %v786 = vld [vmem:[#allocation2 + $0xa8] sm:$0xff]
    %v787 = vld [vmem:[#allocation2 + $0xb0] sm:$0xff]
    %v788 = vld [vmem:[#allocation2 + $0xb8] sm:$0xff]
    %v789 = vld [vmem:[#allocation2 + $0xc0] sm:$0xff]
    %v790 = vld [vmem:[#allocation2 + $0xc8] sm:$0xff]
    %v791 = vld [vmem:[#allocation2 + $0xd0] sm:$0xff]
    %v792 = vld [vmem:[#allocation2 + $0xd8] sm:$0xff]
    %v793 = vld [vmem:[#allocation2 + $0xe0] sm:$0xff]
    %v794 = vld [vmem:[#allocation2 + $0xe8] sm:$0xff]
    %v795 = vld [vmem:[#allocation2 + $0xf0] sm:$0xff]
    %v796 = vld [vmem:[#allocation2 + $0xf8] sm:$0xff]
    %v797 = vstv %s763
    %v798 = vmul.f32 %v765, %v797
    %v799 = vmul.f32 %v766, %v797
    %v800 = vmul.f32 %v767, %v797
    %v801 = vmul.f32 %v768, %v797
    %v802 = vmul.f32 %v769, %v797
    %v803 = vmul.f32 %v770, %v797
    %v804 = vmul.f32 %v771, %v797
    %v805 = vmul.f32 %v772, %v797
    %v806 = vmul.f32 %v773, %v797
    %v807 = vmul.f32 %v774, %v797
    %v808 = vmul.f32 %v775, %v797
    %v809 = vmul.f32 %v776, %v797
    %v810 = vmul.f32 %v777, %v797
    %v811 = vmul.f32 %v778, %v797
    %v812 = vmul.f32 %v779, %v797
    %v813 = vmul.f32 %v780, %v797
    %v814 = vmul.f32 %v781, %v797
    %v815 = vmul.f32 %v782, %v797
    %v816 = vmul.f32 %v783, %v797
    %v817 = vmul.f32 %v784, %v797
    %v818 = vmul.f32 %v785, %v797
    %v819 = vmul.f32 %v786, %v797
    %v820 = vmul.f32 %v787, %v797
    %v821 = vmul.f32 %v788, %v797
    %v822 = vmul.f32 %v789, %v797
    %v823 = vmul.f32 %v790, %v797
    %v824 = vmul.f32 %v791, %v797
    %v825 = vmul.f32 %v792, %v797
    %v826 = vmul.f32 %v793, %v797
    %v827 = vmul.f32 %v794, %v797
    %v828 = vmul.f32 %v795, %v797
    %v829 = vmul.f32 %v796, %v797
    %v831 = vperm.slane %v746, 0
    %v833 = vsub.f32 %v831, %v798
    %v834 = vsub.f32 %v831, %v799
    %v835 = vsub.f32 %v831, %v800
    %v836 = vsub.f32 %v831, %v801
    %v837 = vsub.f32 %v831, %v802
    %v838 = vsub.f32 %v831, %v803
    %v839 = vsub.f32 %v831, %v804
    %v840 = vsub.f32 %v831, %v805
    %v841 = vsub.f32 %v831, %v806
    %v842 = vsub.f32 %v831, %v807
    %v843 = vsub.f32 %v831, %v808
    %v844 = vsub.f32 %v831, %v809
    %v845 = vsub.f32 %v831, %v810
    %v846 = vsub.f32 %v831, %v811
    %v847 = vsub.f32 %v831, %v812
    %v848 = vsub.f32 %v831, %v813
    %v849 = vsub.f32 %v831, %v814
    %v850 = vsub.f32 %v831, %v815
    %v851 = vsub.f32 %v831, %v816
    %v852 = vsub.f32 %v831, %v817
    %v853 = vsub.f32 %v831, %v818
    %v854 = vsub.f32 %v831, %v819
    %v855 = vsub.f32 %v831, %v820
    %v856 = vsub.f32 %v831, %v821
    %v857 = vsub.f32 %v831, %v822
    %v858 = vsub.f32 %v831, %v823
    %v859 = vsub.f32 %v831, %v824
    %v860 = vsub.f32 %v831, %v825
    %v861 = vsub.f32 %v831, %v826
    %v862 = vsub.f32 %v831, %v827
    %v863 = vsub.f32 %v831, %v828
    %v864 = vsub.f32 %v831, %v829
    %865 = vmax.xlane.f32.xlu0 %v833
    %v866 = vpop.xlane.xlu0 %865
    %867 = vmax.xlane.f32.xlu0 %v834
    %v868 = vpop.xlane.xlu0 %867
    %869 = vmax.xlane.f32.xlu0 %v835
    %v870 = vpop.xlane.xlu0 %869
    %871 = vmax.xlane.f32.xlu0 %v836
    %v872 = vpop.xlane.xlu0 %871
    %873 = vmax.xlane.f32.xlu0 %v837
    %v874 = vpop.xlane.xlu0 %873
    %875 = vmax.xlane.f32.xlu0 %v838
    %v876 = vpop.xlane.xlu0 %875
    %877 = vmax.xlane.f32.xlu0 %v839
    %v878 = vpop.xlane.xlu0 %877
    %879 = vmax.xlane.f32.xlu0 %v840
    %v880 = vpop.xlane.xlu0 %879
    %881 = vmax.xlane.f32.xlu0 %v841
    %v882 = vpop.xlane.xlu0 %881
    %883 = vmax.xlane.f32.xlu0 %v842
    %v884 = vpop.xlane.xlu0 %883
    %885 = vmax.xlane.f32.xlu0 %v843
    %v886 = vpop.xlane.xlu0 %885
    %887 = vmax.xlane.f32.xlu0 %v844
    %v888 = vpop.xlane.xlu0 %887
    %889 = vmax.xlane.f32.xlu0 %v845
    %v890 = vpop.xlane.xlu0 %889
    %891 = vmax.xlane.f32.xlu0 %v846
    %v892 = vpop.xlane.xlu0 %891
    %893 = vmax.xlane.f32.xlu0 %v847
    %v894 = vpop.xlane.xlu0 %893
    %895 = vmax.xlane.f32.xlu0 %v848
    %v896 = vpop.xlane.xlu0 %895
    %897 = vmax.xlane.f32.xlu0 %v849
    %v898 = vpop.xlane.xlu0 %897
    %899 = vmax.xlane.f32.xlu0 %v850
    %v900 = vpop.xlane.xlu0 %899
    %901 = vmax.xlane.f32.xlu0 %v851
    %v902 = vpop.xlane.xlu0 %901
    %903 = vmax.xlane.f32.xlu0 %v852
    %v904 = vpop.xlane.xlu0 %903
    %905 = vmax.xlane.f32.xlu0 %v853
    %v906 = vpop.xlane.xlu0 %905
    %907 = vmax.xlane.f32.xlu0 %v854
    %v908 = vpop.xlane.xlu0 %907
    %909 = vmax.xlane.f32.xlu0 %v855
    %v910 = vpop.xlane.xlu0 %909
    %911 = vmax.xlane.f32.xlu0 %v856
    %v912 = vpop.xlane.xlu0 %911
    %913 = vmax.xlane.f32.xlu0 %v857
    %v914 = vpop.xlane.xlu0 %913
    %915 = vmax.xlane.f32.xlu0 %v858
    %v916 = vpop.xlane.xlu0 %915
    %917 = vmax.xlane.f32.xlu0 %v859
    %v918 = vpop.xlane.xlu0 %917
    %919 = vmax.xlane.f32.xlu0 %v860
    %v920 = vpop.xlane.xlu0 %919
    %921 = vmax.xlane.f32.xlu0 %v861
    %v922 = vpop.xlane.xlu0 %921
    %923 = vmax.xlane.f32.xlu0 %v862
    %v924 = vpop.xlane.xlu0 %923
    %925 = vmax.xlane.f32.xlu0 %v863
    %v926 = vpop.xlane.xlu0 %925
    %927 = vmax.xlane.f32.xlu0 %v864
    %v928 = vpop.xlane.xlu0 %927
    %v929 = vsub.f32 %v833, %v866
    %v930 = vsub.f32 %v834, %v868
    %v931 = vsub.f32 %v835, %v870
    %v932 = vsub.f32 %v836, %v872
    %v933 = vsub.f32 %v837, %v874
    %v934 = vsub.f32 %v838, %v876
    %v935 = vsub.f32 %v839, %v878
    %v936 = vsub.f32 %v840, %v880
    %v937 = vsub.f32 %v841, %v882
    %v938 = vsub.f32 %v842, %v884
    %v939 = vsub.f32 %v843, %v886
    %v940 = vsub.f32 %v844, %v888
    %v941 = vsub.f32 %v845, %v890
    %v942 = vsub.f32 %v846, %v892
    %v943 = vsub.f32 %v847, %v894
    %v944 = vsub.f32 %v848, %v896
    %v945 = vsub.f32 %v849, %v898
    %v946 = vsub.f32 %v850, %v900
    %v947 = vsub.f32 %v851, %v902
    %v948 = vsub.f32 %v852, %v904
    %v949 = vsub.f32 %v853, %v906
    %v950 = vsub.f32 %v854, %v908
    %v951 = vsub.f32 %v855, %v910
    %v952 = vsub.f32 %v856, %v912
    %v953 = vsub.f32 %v857, %v914
    %v954 = vsub.f32 %v858, %v916
    %v955 = vsub.f32 %v859, %v918
    %v956 = vsub.f32 %v860, %v920
    %v957 = vsub.f32 %v861, %v922
    %v958 = vsub.f32 %v862, %v924
    %v959 = vsub.f32 %v863, %v926
    %v960 = vsub.f32 %v864, %v928
    %v961 = vmul.f32 %v929, 1.442695
    %v962 = vpow.pop %v961
    %v963 = vmul.f32 %v930, 1.442695
    %v964 = vpow.pop %v963
    %v965 = vmul.f32 %v931, 1.442695
    %v966 = vpow.pop %v965
    %v967 = vmul.f32 %v932, 1.442695
    %v968 = vpow.pop %v967
    %v969 = vmul.f32 %v933, 1.442695
    %v970 = vpow.pop %v969
    %v971 = vmul.f32 %v934, 1.442695
    %v972 = vpow.pop %v971
    %v973 = vmul.f32 %v935, 1.442695
    %v974 = vpow.pop %v973
    %v975 = vmul.f32 %v936, 1.442695
    %v976 = vpow.pop %v975
    %v977 = vmul.f32 %v937, 1.442695
    %v978 = vpow.pop %v977
    %v979 = vmul.f32 %v938, 1.442695
    %v980 = vpow.pop %v979
    %v981 = vmul.f32 %v939, 1.442695
    %v982 = vpow.pop %v981
    %v983 = vmul.f32 %v940, 1.442695
    %v984 = vpow.pop %v983
    %v985 = vmul.f32 %v941, 1.442695
    %v986 = vpow.pop %v985
    %v987 = vmul.f32 %v942, 1.442695
    %v988 = vpow.pop %v987
    %v989 = vmul.f32 %v943, 1.442695
    %v990 = vpow.pop %v989
    %v991 = vmul.f32 %v944, 1.442695
    %v992 = vpow.pop %v991
    %v993 = vmul.f32 %v945, 1.442695
    %v994 = vpow.pop %v993
    %v995 = vmul.f32 %v946, 1.442695
    %v996 = vpow.pop %v995
    %v997 = vmul.f32 %v947, 1.442695
    %v998 = vpow.pop %v997
    %v999 = vmul.f32 %v948, 1.442695
    %v1000 = vpow.pop %v999
    %v1001 = vmul.f32 %v949, 1.442695
    %v1002 = vpow.pop %v1001
    %v1003 = vmul.f32 %v950, 1.442695
    %v1004 = vpow.pop %v1003
    %v1005 = vmul.f32 %v951, 1.442695
    %v1006 = vpow.pop %v1005
    %v1007 = vmul.f32 %v952, 1.442695
    %v1008 = vpow.pop %v1007
    %v1009 = vmul.f32 %v953, 1.442695
    %v1010 = vpow.pop %v1009
    %v1011 = vmul.f32 %v954, 1.442695
    %v1012 = vpow.pop %v1011
    %v1013 = vmul.f32 %v955, 1.442695
    %v1014 = vpow.pop %v1013
    %v1015 = vmul.f32 %v956, 1.442695
    %v1016 = vpow.pop %v1015
    %v1017 = vmul.f32 %v957, 1.442695
    %v1018 = vpow.pop %v1017
    %v1019 = vmul.f32 %v958, 1.442695
    %v1020 = vpow.pop %v1019
    %v1021 = vmul.f32 %v959, 1.442695
    %v1022 = vpow.pop %v1021
    %v1023 = vmul.f32 %v960, 1.442695
    %v1024 = vpow.pop %v1023
    %1025 = vadd.xlane.f32.xlu0 %v962
    %v1026 = vpop.xlane.xlu0 %1025
    %1027 = vadd.xlane.f32.xlu0 %v964
    %v1028 = vpop.xlane.xlu0 %1027
    %1029 = vadd.xlane.f32.xlu0 %v966
    %v1030 = vpop.xlane.xlu0 %1029
    %1031 = vadd.xlane.f32.xlu0 %v968
    %v1032 = vpop.xlane.xlu0 %1031
    %1033 = vadd.xlane.f32.xlu0 %v970
    %v1034 = vpop.xlane.xlu0 %1033
    %1035 = vadd.xlane.f32.xlu0 %v972
    %v1036 = vpop.xlane.xlu0 %1035
    %1037 = vadd.xlane.f32.xlu0 %v974
    %v1038 = vpop.xlane.xlu0 %1037
    %1039 = vadd.xlane.f32.xlu0 %v976
    %v1040 = vpop.xlane.xlu0 %1039
    %1041 = vadd.xlane.f32.xlu0 %v978
    %v1042 = vpop.xlane.xlu0 %1041
    %1043 = vadd.xlane.f32.xlu0 %v980
    %v1044 = vpop.xlane.xlu0 %1043
    %1045 = vadd.xlane.f32.xlu0 %v982
    %v1046 = vpop.xlane.xlu0 %1045
    %1047 = vadd.xlane.f32.xlu0 %v984
    %v1048 = vpop.xlane.xlu0 %1047
    %1049 = vadd.xlane.f32.xlu0 %v986
    %v1050 = vpop.xlane.xlu0 %1049
    %1051 = vadd.xlane.f32.xlu0 %v988
    %v1052 = vpop.xlane.xlu0 %1051
    %1053 = vadd.xlane.f32.xlu0 %v990
    %v1054 = vpop.xlane.xlu0 %1053
    %1055 = vadd.xlane.f32.xlu0 %v992
    %v1056 = vpop.xlane.xlu0 %1055
    %1057 = vadd.xlane.f32.xlu0 %v994
    %v1058 = vpop.xlane.xlu0 %1057
    %1059 = vadd.xlane.f32.xlu0 %v996
    %v1060 = vpop.xlane.xlu0 %1059
    %1061 = vadd.xlane.f32.xlu0 %v998
    %v1062 = vpop.xlane.xlu0 %1061
    %1063 = vadd.xlane.f32.xlu0 %v1000
    %v1064 = vpop.xlane.xlu0 %1063
    %1065 = vadd.xlane.f32.xlu0 %v1002
    %v1066 = vpop.xlane.xlu0 %1065
    %1067 = vadd.xlane.f32.xlu0 %v1004
    %v1068 = vpop.xlane.xlu0 %1067
    %1069 = vadd.xlane.f32.xlu0 %v1006
    %v1070 = vpop.xlane.xlu0 %1069
    %1071 = vadd.xlane.f32.xlu0 %v1008
    %v1072 = vpop.xlane.xlu0 %1071
    %1073 = vadd.xlane.f32.xlu0 %v1010
    %v1074 = vpop.xlane.xlu0 %1073
    %1075 = vadd.xlane.f32.xlu0 %v1012
    %v1076 = vpop.xlane.xlu0 %1075
    %1077 = vadd.xlane.f32.xlu0 %v1014
    %v1078 = vpop.xlane.xlu0 %1077
    %1079 = vadd.xlane.f32.xlu0 %v1016
    %v1080 = vpop.xlane.xlu0 %1079
    %1081 = vadd.xlane.f32.xlu0 %v1018
    %v1082 = vpop.xlane.xlu0 %1081
    %1083 = vadd.xlane.f32.xlu0 %v1020
    %v1084 = vpop.xlane.xlu0 %1083
    %1085 = vadd.xlane.f32.xlu0 %v1022
    %v1086 = vpop.xlane.xlu0 %1085
    %1087 = vadd.xlane.f32.xlu0 %v1024
    %v1088 = vpop.xlane.xlu0 %1087
    %s1089 = ssub.f32 0.0, %s747
    %v1090 = vlog2.pop %v1026
    %v1091 = vmul.f32 %v1090, 0.6931472
    %v1092 = vlog2.pop %v1028
    %v1093 = vmul.f32 %v1092, 0.6931472
    %v1094 = vlog2.pop %v1030
    %v1095 = vmul.f32 %v1094, 0.6931472
    %v1096 = vlog2.pop %v1032
    %v1097 = vmul.f32 %v1096, 0.6931472
    %v1098 = vlog2.pop %v1034
    %v1099 = vmul.f32 %v1098, 0.6931472
    %v1100 = vlog2.pop %v1036
    %v1101 = vmul.f32 %v1100, 0.6931472
    %v1102 = vlog2.pop %v1038
    %v1103 = vmul.f32 %v1102, 0.6931472
    %v1104 = vlog2.pop %v1040
    %v1105 = vmul.f32 %v1104, 0.6931472
    %v1106 = vlog2.pop %v1042
    %v1107 = vmul.f32 %v1106, 0.6931472
    %v1108 = vlog2.pop %v1044
    %v1109 = vmul.f32 %v1108, 0.6931472
    %v1110 = vlog2.pop %v1046
    %v1111 = vmul.f32 %v1110, 0.6931472
    %v1112 = vlog2.pop %v1048
    %v1113 = vmul.f32 %v1112, 0.6931472
    %v1114 = vlog2.pop %v1050
    %v1115 = vmul.f32 %v1114, 0.6931472
    %v1116 = vlog2.pop %v1052
    %v1117 = vmul.f32 %v1116, 0.6931472
    %v1118 = vlog2.pop %v1054
    %v1119 = vmul.f32 %v1118, 0.6931472
    %v1120 = vlog2.pop %v1056
    %v1121 = vmul.f32 %v1120, 0.6931472
    %v1122 = vlog2.pop %v1058
    %v1123 = vmul.f32 %v1122, 0.6931472
    %v1124 = vlog2.pop %v1060
    %v1125 = vmul.f32 %v1124, 0.6931472
    %v1126 = vlog2.pop %v1062
    %v1127 = vmul.f32 %v1126, 0.6931472
    %v1128 = vlog2.pop %v1064
    %v1129 = vmul.f32 %v1128, 0.6931472
    %v1130 = vlog2.pop %v1066
    %v1131 = vmul.f32 %v1130, 0.6931472
    %v1132 = vlog2.pop %v1068
    %v1133 = vmul.f32 %v1132, 0.6931472
    %v1134 = vlog2.pop %v1070
    %v1135 = vmul.f32 %v1134, 0.6931472
    %v1136 = vlog2.pop %v1072
    %v1137 = vmul.f32 %v1136, 0.6931472
    %v1138 = vlog2.pop %v1074
    %v1139 = vmul.f32 %v1138, 0.6931472
    %v1140 = vlog2.pop %v1076
    %v1141 = vmul.f32 %v1140, 0.6931472
    %v1142 = vlog2.pop %v1078
    %v1143 = vmul.f32 %v1142, 0.6931472
    %v1144 = vlog2.pop %v1080
    %v1145 = vmul.f32 %v1144, 0.6931472
    %v1146 = vlog2.pop %v1082
    %v1147 = vmul.f32 %v1146, 0.6931472
    %v1148 = vlog2.pop %v1084
    %v1149 = vmul.f32 %v1148, 0.6931472
    %v1150 = vlog2.pop %v1086
    %v1151 = vmul.f32 %v1150, 0.6931472
    %v1152 = vlog2.pop %v1088
    %v1153 = vmul.f32 %v1152, 0.6931472
    %v1154 = vadd.f32 %v866, %v1091
    %v1155 = vadd.f32 %v868, %v1093
    %v1156 = vadd.f32 %v870, %v1095
    %v1157 = vadd.f32 %v872, %v1097
    %v1158 = vadd.f32 %v874, %v1099
    %v1159 = vadd.f32 %v876, %v1101
    %v1160 = vadd.f32 %v878, %v1103
    %v1161 = vadd.f32 %v880, %v1105
    %v1162 = vadd.f32 %v882, %v1107
    %v1163 = vadd.f32 %v884, %v1109
    %v1164 = vadd.f32 %v886, %v1111
    %v1165 = vadd.f32 %v888, %v1113
    %v1166 = vadd.f32 %v890, %v1115
    %v1167 = vadd.f32 %v892, %v1117
    %v1168 = vadd.f32 %v894, %v1119
    %v1169 = vadd.f32 %v896, %v1121
    %v1170 = vadd.f32 %v898, %v1123
    %v1171 = vadd.f32 %v900, %v1125
    %v1172 = vadd.f32 %v902, %v1127
    %v1173 = vadd.f32 %v904, %v1129
    %v1174 = vadd.f32 %v906, %v1131
    %v1175 = vadd.f32 %v908, %v1133
    %v1176 = vadd.f32 %v910, %v1135
    %v1177 = vadd.f32 %v912, %v1137
    %v1178 = vadd.f32 %v914, %v1139
    %v1179 = vadd.f32 %v916, %v1141
    %v1180 = vadd.f32 %v918, %v1143
    %v1181 = vadd.f32 %v920, %v1145
    %v1182 = vadd.f32 %v922, %v1147
    %v1183 = vadd.f32 %v924, %v1149
    %v1184 = vadd.f32 %v926, %v1151
    %v1185 = vadd.f32 %v928, %v1153
    %v1186 = vstv %s1089
    %v1187 = vmul.f32 %v1186, %v1154
    %v1188 = vmul.f32 %v1186, %v1155
    %v1189 = vmul.f32 %v1186, %v1156
    %v1190 = vmul.f32 %v1186, %v1157
    %v1191 = vmul.f32 %v1186, %v1158
    %v1192 = vmul.f32 %v1186, %v1159
    %v1193 = vmul.f32 %v1186, %v1160
    %v1194 = vmul.f32 %v1186, %v1161
    %v1195 = vmul.f32 %v1186, %v1162
    %v1196 = vmul.f32 %v1186, %v1163
    %v1197 = vmul.f32 %v1186, %v1164
    %v1198 = vmul.f32 %v1186, %v1165
    %v1199 = vmul.f32 %v1186, %v1166
    %v1200 = vmul.f32 %v1186, %v1167
    %v1201 = vmul.f32 %v1186, %v1168
    %v1202 = vmul.f32 %v1186, %v1169
    %v1203 = vmul.f32 %v1186, %v1170
    %v1204 = vmul.f32 %v1186, %v1171
    %v1205 = vmul.f32 %v1186, %v1172
    %v1206 = vmul.f32 %v1186, %v1173
    %v1207 = vmul.f32 %v1186, %v1174
    %v1208 = vmul.f32 %v1186, %v1175
    %v1209 = vmul.f32 %v1186, %v1176
    %v1210 = vmul.f32 %v1186, %v1177
    %v1211 = vmul.f32 %v1186, %v1178
    %v1212 = vmul.f32 %v1186, %v1179
    %v1213 = vmul.f32 %v1186, %v1180
    %v1214 = vmul.f32 %v1186, %v1181
    %v1215 = vmul.f32 %v1186, %v1182
    %v1216 = vmul.f32 %v1186, %v1183
    %v1217 = vmul.f32 %v1186, %v1184
    %v1218 = vmul.f32 %v1186, %v1185
    %v1219 = vstv %s764
    %v1220 = vmul.f32 %v1219, %v1187
    %v1221 = vmul.f32 %v1219, %v1188
    %v1222 = vmul.f32 %v1219, %v1189
    %v1223 = vmul.f32 %v1219, %v1190
    %v1224 = vmul.f32 %v1219, %v1191
    %v1225 = vmul.f32 %v1219, %v1192
    %v1226 = vmul.f32 %v1219, %v1193
    %v1227 = vmul.f32 %v1219, %v1194
    %v1228 = vmul.f32 %v1219, %v1195
    %v1229 = vmul.f32 %v1219, %v1196
    %v1230 = vmul.f32 %v1219, %v1197
    %v1231 = vmul.f32 %v1219, %v1198
    %v1232 = vmul.f32 %v1219, %v1199
    %v1233 = vmul.f32 %v1219, %v1200
    %v1234 = vmul.f32 %v1219, %v1201
    %v1235 = vmul.f32 %v1219, %v1202
    %v1236 = vmul.f32 %v1219, %v1203
    %v1237 = vmul.f32 %v1219, %v1204
    %v1238 = vmul.f32 %v1219, %v1205
    %v1239 = vmul.f32 %v1219, %v1206
    %v1240 = vmul.f32 %v1219, %v1207
    %v1241 = vmul.f32 %v1219, %v1208
    %v1242 = vmul.f32 %v1219, %v1209
    %v1243 = vmul.f32 %v1219, %v1210
    %v1244 = vmul.f32 %v1219, %v1211
    %v1245 = vmul.f32 %v1219, %v1212
    %v1246 = vmul.f32 %v1219, %v1213
    %v1247 = vmul.f32 %v1219, %v1214
    %v1248 = vmul.f32 %v1219, %v1215
    %v1249 = vmul.f32 %v1219, %v1216
    %v1250 = vmul.f32 %v1219, %v1217
    %v1251 = vmul.f32 %v1219, %v1218
    %s1252 = sld [smem:[#allocation7]]
    %1254 = vset.pattern.permute.xlu0 0
    %1255 = vperm.xlu0 %1254, %v714
    %v1256 = vpop.permute.xlu0 %1255
    %1259 = vset.pattern.permute.xlu0 0
    %1260 = vperm.xlu0 %1259, %v715
    %v1261 = vpop.permute.xlu0 %1260
    %1264 = vset.pattern.permute.xlu0 0
    %1265 = vperm.xlu0 %1264, %v716
    %v1266 = vpop.permute.xlu0 %1265
    %1269 = vset.pattern.permute.xlu0 0
    %1270 = vperm.xlu0 %1269, %v717
    %v1271 = vpop.permute.xlu0 %1270
    %1274 = vset.pattern.permute.xlu0 0
    %1275 = vperm.xlu0 %1274, %v718
    %v1276 = vpop.permute.xlu0 %1275
    %1279 = vset.pattern.permute.xlu0 0
    %1280 = vperm.xlu0 %1279, %v719
    %v1281 = vpop.permute.xlu0 %1280
    %1284 = vset.pattern.permute.xlu0 0
    %1285 = vperm.xlu0 %1284, %v720
    %v1286 = vpop.permute.xlu0 %1285
    %1289 = vset.pattern.permute.xlu0 0
    %1290 = vperm.xlu0 %1289, %v721
    %v1291 = vpop.permute.xlu0 %1290
    %1294 = vset.pattern.permute.xlu0 0
    %1295 = vperm.xlu0 %1294, %v722
    %v1296 = vpop.permute.xlu0 %1295
    %1299 = vset.pattern.permute.xlu0 0
    %1300 = vperm.xlu0 %1299, %v723
    %v1301 = vpop.permute.xlu0 %1300
    %1304 = vset.pattern.permute.xlu0 0
    %1305 = vperm.xlu0 %1304, %v724
    %v1306 = vpop.permute.xlu0 %1305
    %1309 = vset.pattern.permute.xlu0 0
    %1310 = vperm.xlu0 %1309, %v725
    %v1311 = vpop.permute.xlu0 %1310
    %1314 = vset.pattern.permute.xlu0 0
    %1315 = vperm.xlu0 %1314, %v726
    %v1316 = vpop.permute.xlu0 %1315
    %1319 = vset.pattern.permute.xlu0 0
    %1320 = vperm.xlu0 %1319, %v727
    %v1321 = vpop.permute.xlu0 %1320
    %1324 = vset.pattern.permute.xlu0 0
    %1325 = vperm.xlu0 %1324, %v728
    %v1326 = vpop.permute.xlu0 %1325
    %1329 = vset.pattern.permute.xlu0 0
    %1330 = vperm.xlu0 %1329, %v729
    %v1331 = vpop.permute.xlu0 %1330
    %1334 = vset.pattern.permute.xlu0 0
    %1335 = vperm.xlu0 %1334, %v730
    %v1336 = vpop.permute.xlu0 %1335
    %1339 = vset.pattern.permute.xlu0 0
    %1340 = vperm.xlu0 %1339, %v731
    %v1341 = vpop.permute.xlu0 %1340
    %1344 = vset.pattern.permute.xlu0 0
    %1345 = vperm.xlu0 %1344, %v732
    %v1346 = vpop.permute.xlu0 %1345
    %1349 = vset.pattern.permute.xlu0 0
    %1350 = vperm.xlu0 %1349, %v733
    %v1351 = vpop.permute.xlu0 %1350
    %1354 = vset.pattern.permute.xlu0 0
    %1355 = vperm.xlu0 %1354, %v734
    %v1356 = vpop.permute.xlu0 %1355
    %1359 = vset.pattern.permute.xlu0 0
    %1360 = vperm.xlu0 %1359, %v735
    %v1361 = vpop.permute.xlu0 %1360
    %1364 = vset.pattern.permute.xlu0 0
    %1365 = vperm.xlu0 %1364, %v736
    %v1366 = vpop.permute.xlu0 %1365
    %1369 = vset.pattern.permute.xlu0 0
    %1370 = vperm.xlu0 %1369, %v737
    %v1371 = vpop.permute.xlu0 %1370
    %1374 = vset.pattern.permute.xlu0 0
    %1375 = vperm.xlu0 %1374, %v738
    %v1376 = vpop.permute.xlu0 %1375
    %1379 = vset.pattern.permute.xlu0 0
    %1380 = vperm.xlu0 %1379, %v739
    %v1381 = vpop.permute.xlu0 %1380
    %1384 = vset.pattern.permute.xlu0 0
    %1385 = vperm.xlu0 %1384, %v740
    %v1386 = vpop.permute.xlu0 %1385
    %1389 = vset.pattern.permute.xlu0 0
    %1390 = vperm.xlu0 %1389, %v741
    %v1391 = vpop.permute.xlu0 %1390
    %1394 = vset.pattern.permute.xlu0 0
    %1395 = vperm.xlu0 %1394, %v742
    %v1396 = vpop.permute.xlu0 %1395
    %1399 = vset.pattern.permute.xlu0 0
    %1400 = vperm.xlu0 %1399, %v743
    %v1401 = vpop.permute.xlu0 %1400
    %1404 = vset.pattern.permute.xlu0 0
    %1405 = vperm.xlu0 %1404, %v744
    %v1406 = vpop.permute.xlu0 %1405
    %1409 = vset.pattern.permute.xlu0 0
    %1410 = vperm.xlu0 %1409, %v745
    %v1411 = vpop.permute.xlu0 %1410
    %v1413 = vsub.f32 %v1256, %v798
    %v1414 = vsub.f32 %v1261, %v799
    %v1415 = vsub.f32 %v1266, %v800
    %v1416 = vsub.f32 %v1271, %v801
    %v1417 = vsub.f32 %v1276, %v802
    %v1418 = vsub.f32 %v1281, %v803
    %v1419 = vsub.f32 %v1286, %v804
    %v1420 = vsub.f32 %v1291, %v805
    %v1421 = vsub.f32 %v1296, %v806
    %v1422 = vsub.f32 %v1301, %v807
    %v1423 = vsub.f32 %v1306, %v808
    %v1424 = vsub.f32 %v1311, %v809
    %v1425 = vsub.f32 %v1316, %v810
    %v1426 = vsub.f32 %v1321, %v811
    %v1427 = vsub.f32 %v1326, %v812
    %v1428 = vsub.f32 %v1331, %v813
    %v1429 = vsub.f32 %v1336, %v814
    %v1430 = vsub.f32 %v1341, %v815
    %v1431 = vsub.f32 %v1346, %v816
    %v1432 = vsub.f32 %v1351, %v817
    %v1433 = vsub.f32 %v1356, %v818
    %v1434 = vsub.f32 %v1361, %v819
    %v1435 = vsub.f32 %v1366, %v820
    %v1436 = vsub.f32 %v1371, %v821
    %v1437 = vsub.f32 %v1376, %v822
    %v1438 = vsub.f32 %v1381, %v823
    %v1439 = vsub.f32 %v1386, %v824
    %v1440 = vsub.f32 %v1391, %v825
    %v1441 = vsub.f32 %v1396, %v826
    %v1442 = vsub.f32 %v1401, %v827
    %v1443 = vsub.f32 %v1406, %v828
    %v1444 = vsub.f32 %v1411, %v829
    %v1445 = vmax.f32 %v1413, %v1417
    %v1446 = vmax.f32 %v1414, %v1418
    %v1447 = vmax.f32 %v1415, %v1419
    %v1448 = vmax.f32 %v1416, %v1420
    %v1449 = vmax.f32 %v1445, %v1421
    %v1450 = vmax.f32 %v1446, %v1422
    %v1451 = vmax.f32 %v1447, %v1423
    %v1452 = vmax.f32 %v1448, %v1424
    %v1453 = vmax.f32 %v1449, %v1425
    %v1454 = vmax.f32 %v1450, %v1426
    %v1455 = vmax.f32 %v1451, %v1427
    %v1456 = vmax.f32 %v1452, %v1428
    %v1457 = vmax.f32 %v1453, %v1429
    %v1458 = vmax.f32 %v1454, %v1430
    %v1459 = vmax.f32 %v1455, %v1431
    %v1460 = vmax.f32 %v1456, %v1432
    %v1461 = vmax.f32 %v1457, %v1433
    %v1462 = vmax.f32 %v1458, %v1434
    %v1463 = vmax.f32 %v1459, %v1435
    %v1464 = vmax.f32 %v1460, %v1436
    %v1465 = vmax.f32 %v1461, %v1437
    %v1466 = vmax.f32 %v1462, %v1438
    %v1467 = vmax.f32 %v1463, %v1439
    %v1468 = vmax.f32 %v1464, %v1440
    %v1469 = vmax.f32 %v1465, %v1441
    %v1470 = vmax.f32 %v1466, %v1442
    %v1471 = vmax.f32 %v1467, %v1443
    %v1472 = vmax.f32 %v1468, %v1444
    %v1473 = vmax.f32 %v1469, %v1470
    %v1474 = vmax.f32 %v1471, %v1472
    %v1475 = vmax.f32 %v1473, %v1474
    %v1476 = vrot.slane %v1475, 4
    %v1477 = vmax.f32 %v1475, %v1476
    %v1478 = vrot.slane %v1477, 2
    %v1479 = vmax.f32 %v1477, %v1478
    %v1480 = vrot.slane %v1479, 1
    %v1481 = vmax.f32 %v1479, %v1480
    %v1482 = vsub.f32 %v1413, %v1481
    %v1483 = vsub.f32 %v1414, %v1481
    %v1484 = vsub.f32 %v1415, %v1481
    %v1485 = vsub.f32 %v1416, %v1481
    %v1486 = vsub.f32 %v1417, %v1481
    %v1487 = vsub.f32 %v1418, %v1481
    %v1488 = vsub.f32 %v1419, %v1481
    %v1489 = vsub.f32 %v1420, %v1481
    %v1490 = vsub.f32 %v1421, %v1481
    %v1491 = vsub.f32 %v1422, %v1481
    %v1492 = vsub.f32 %v1423, %v1481
    %v1493 = vsub.f32 %v1424, %v1481
    %v1494 = vsub.f32 %v1425, %v1481
    %v1495 = vsub.f32 %v1426, %v1481
    %v1496 = vsub.f32 %v1427, %v1481
    %v1497 = vsub.f32 %v1428, %v1481
    %v1498 = vsub.f32 %v1429, %v1481
    %v1499 = vsub.f32 %v1430, %v1481
    %v1500 = vsub.f32 %v1431, %v1481
    %v1501 = vsub.f32 %v1432, %v1481
    %v1502 = vsub.f32 %v1433, %v1481
    %v1503 = vsub.f32 %v1434, %v1481
    %v1504 = vsub.f32 %v1435, %v1481
    %v1505 = vsub.f32 %v1436, %v1481
    %v1506 = vsub.f32 %v1437, %v1481
    %v1507 = vsub.f32 %v1438, %v1481
    %v1508 = vsub.f32 %v1439, %v1481
    %v1509 = vsub.f32 %v1440, %v1481
    %v1510 = vsub.f32 %v1441, %v1481
    %v1511 = vsub.f32 %v1442, %v1481
    %v1512 = vsub.f32 %v1443, %v1481
    %v1513 = vsub.f32 %v1444, %v1481
    %v1514 = vmul.f32 %v1482, 1.442695
    %v1515 = vpow.pop %v1514
    %v1516 = vmul.f32 %v1483, 1.442695
    %v1517 = vpow.pop %v1516
    %v1518 = vmul.f32 %v1484, 1.442695
    %v1519 = vpow.pop %v1518
    %v1520 = vmul.f32 %v1485, 1.442695
    %v1521 = vpow.pop %v1520
    %v1522 = vmul.f32 %v1486, 1.442695
    %v1523 = vpow.pop %v1522
    %v1524 = vmul.f32 %v1487, 1.442695
    %v1525 = vpow.pop %v1524
    %v1526 = vmul.f32 %v1488, 1.442695
    %v1527 = vpow.pop %v1526
    %v1528 = vmul.f32 %v1489, 1.442695
    %v1529 = vpow.pop %v1528
    %v1530 = vmul.f32 %v1490, 1.442695
    %v1531 = vpow.pop %v1530
    %v1532 = vmul.f32 %v1491, 1.442695
    %v1533 = vpow.pop %v1532
    %v1534 = vmul.f32 %v1492, 1.442695
    %v1535 = vpow.pop %v1534
    %v1536 = vmul.f32 %v1493, 1.442695
    %v1537 = vpow.pop %v1536
    %v1538 = vmul.f32 %v1494, 1.442695
    %v1539 = vpow.pop %v1538
    %v1540 = vmul.f32 %v1495, 1.442695
    %v1541 = vpow.pop %v1540
    %v1542 = vmul.f32 %v1496, 1.442695
    %v1543 = vpow.pop %v1542
    %v1544 = vmul.f32 %v1497, 1.442695
    %v1545 = vpow.pop %v1544
    %v1546 = vmul.f32 %v1498, 1.442695
    %v1547 = vpow.pop %v1546
    %v1548 = vmul.f32 %v1499, 1.442695
    %v1549 = vpow.pop %v1548
    %v1550 = vmul.f32 %v1500, 1.442695
    %v1551 = vpow.pop %v1550
    %v1552 = vmul.f32 %v1501, 1.442695
    %v1553 = vpow.pop %v1552
    %v1554 = vmul.f32 %v1502, 1.442695
    %v1555 = vpow.pop %v1554
    %v1556 = vmul.f32 %v1503, 1.442695
    %v1557 = vpow.pop %v1556
    %v1558 = vmul.f32 %v1504, 1.442695
    %v1559 = vpow.pop %v1558
    %v1560 = vmul.f32 %v1505, 1.442695
    %v1561 = vpow.pop %v1560
    %v1562 = vmul.f32 %v1506, 1.442695
    %v1563 = vpow.pop %v1562
    %v1564 = vmul.f32 %v1507, 1.442695
    %v1565 = vpow.pop %v1564
    %v1566 = vmul.f32 %v1508, 1.442695
    %v1567 = vpow.pop %v1566
    %v1568 = vmul.f32 %v1509, 1.442695
    %v1569 = vpow.pop %v1568
    %v1570 = vmul.f32 %v1510, 1.442695
    %v1571 = vpow.pop %v1570
    %v1572 = vmul.f32 %v1511, 1.442695
    %v1573 = vpow.pop %v1572
    %v1574 = vmul.f32 %v1512, 1.442695
    %v1575 = vpow.pop %v1574
    %v1576 = vmul.f32 %v1513, 1.442695
    %v1577 = vpow.pop %v1576
    %v1578 = vadd.f32 %v1515, %v1517
    %v1579 = vadd.f32 %v1578, %v1519
    %v1580 = vadd.f32 %v1579, %v1521
    %v1581 = vadd.f32 %v1580, %v1523
    %v1582 = vadd.f32 %v1581, %v1525
    %v1583 = vadd.f32 %v1582, %v1527
    %v1584 = vadd.f32 %v1583, %v1529
    %v1585 = vadd.f32 %v1584, %v1531
    %v1586 = vadd.f32 %v1585, %v1533
    %v1587 = vadd.f32 %v1586, %v1535
    %v1588 = vadd.f32 %v1587, %v1537
    %v1589 = vadd.f32 %v1588, %v1539
    %v1590 = vadd.f32 %v1589, %v1541
    %v1591 = vadd.f32 %v1590, %v1543
    %v1592 = vadd.f32 %v1591, %v1545
    %v1593 = vadd.f32 %v1592, %v1547
    %v1594 = vadd.f32 %v1593, %v1549
    %v1595 = vadd.f32 %v1594, %v1551
    %v1596 = vadd.f32 %v1595, %v1553
    %v1597 = vadd.f32 %v1596, %v1555
    %v1598 = vadd.f32 %v1597, %v1557
    %v1599 = vadd.f32 %v1598, %v1559
    %v1600 = vadd.f32 %v1599, %v1561
    %v1601 = vadd.f32 %v1600, %v1563
    %v1602 = vadd.f32 %v1601, %v1565
    %v1603 = vadd.f32 %v1602, %v1567
    %v1604 = vadd.f32 %v1603, %v1569
    %v1605 = vadd.f32 %v1604, %v1571
    %v1606 = vadd.f32 %v1605, %v1573
    %v1607 = vadd.f32 %v1606, %v1575
    %v1608 = vadd.f32 %v1607, %v1577
    %v1609 = vrot.slane %v1608, 4
    %v1610 = vadd.f32 %v1608, %v1609
    %v1611 = vrot.slane %v1610, 2
    %v1612 = vadd.f32 %v1610, %v1611
    %v1613 = vrot.slane %v1612, 1
    %v1614 = vadd.f32 %v1612, %v1613
    %v1615 = vlog2.pop %v1614
    %v1616 = vmul.f32 %v1615, 0.6931472
    %v1617 = vadd.f32 %v1481, %v1616
    %v1618 = vmul.f32 %v1186, %v1617
    %v1619 = vstv %s1252
    %v1620 = vmul.f32 %v1619, %v1618
    loop: start=0, step=1, limit=102
    $region42: #{_sinkhorn_apply.1} parent=1 // loop_pre_header
      _
    $region43: #{_sinkhorn_apply.1} parent=1 // loop_header
      %s1622 = sphi 0, %s1626
      %p1623 = scmp.ge.s32.totalorder %s1622, 102
      %v1627 = vphi %v1220, %v2632
      %v1628 = vphi %v1221, %v2633
      %v1629 = vphi %v1222, %v2634
      %v1630 = vphi %v1223, %v2635
      %v1631 = vphi %v1224, %v2636
      %v1632 = vphi %v1225, %v2637
      %v1633 = vphi %v1226, %v2638
      %v1634 = vphi %v1227, %v2639
      %v1635 = vphi %v1228, %v2640
      %v1636 = vphi %v1229, %v2641
      %v1637 = vphi %v1230, %v2642
      %v1638 = vphi %v1231, %v2643
      %v1639 = vphi %v1232, %v2644
      %v1640 = vphi %v1233, %v2645
      %v1641 = vphi %v1234, %v2646
      %v1642 = vphi %v1235, %v2647
      %v1643 = vphi %v1236, %v2648
      %v1644 = vphi %v1237, %v2649
      %v1645 = vphi %v1238, %v2650
      %v1646 = vphi %v1239, %v2651
      %v1647 = vphi %v1240, %v2652
      %v1648 = vphi %v1241, %v2653
      %v1649 = vphi %v1242, %v2654
      %v1650 = vphi %v1243, %v2655
      %v1651 = vphi %v1244, %v2656
      %v1652 = vphi %v1245, %v2657
      %v1653 = vphi %v1246, %v2658
      %v1654 = vphi %v1247, %v2659
      %v1655 = vphi %v1248, %v2660
      %v1656 = vphi %v1249, %v2661
      %v1657 = vphi %v1250, %v2662
      %v1658 = vphi %v1251, %v2663
      %v1659 = vphi %v1620, %v2665
    $region44: #{_sinkhorn_apply.1} parent=1 // loop_header_branch
      %1625 = sbr.rel (%p1623) target = $region48
    $region45: #{_sinkhorn_apply.1} parent=1 // loop_body
      %s1660 = sld [smem:[#allocation3 + %s1622]]
      %v1661 = vstv %s1660
      %v1662 = vrcp.pop %v1661
      %v1663 = vmul.f32 %v1661, %v1662
      %v1664 = vsub.f32 1.0, %v1663
      %v1665 = vmul.f32 %v1662, %v1664
      %v1666 = vadd.f32 %v1662, %v1665
      %vm1667 = vweird.f32 %v1661
      %vm1668 = vweird.f32 %v1662
      %vm1669 = vmor %vm1667, %vm1668
      %v1670 = vsel %vm1669, %v1662, %v1666
      %v1671 = vand.u32 2147483647, %v1661
      %vm1672 = vcmp.eq.f32.partialorder %v1671, 8.507059e+37
      %v1673 = vand.u32 %v1661, 2147483648
      %v1674 = vor.u32 1.1754944e-38, %v1673
      %v1675 = vsel %vm1672, %v1674, %v1670
      %s1676 = vtos %v1675
      %s1677 = sld [smem:[#allocation5 + %s1622]]
      %v1678 = vstv %s1676
      %v1679 = vmul.f32 %v1659, %v1678
      %v1680 = vadd.f32 %v746, %v1679
      %v1681 = vld [vmem:[#allocation2] sm:$0xff]
      %v1682 = vld [vmem:[#allocation2 + $0x8] sm:$0xff]
      %v1683 = vld [vmem:[#allocation2 + $0x10] sm:$0xff]
      %v1684 = vld [vmem:[#allocation2 + $0x18] sm:$0xff]
      %v1685 = vld [vmem:[#allocation2 + $0x20] sm:$0xff]
      %v1686 = vld [vmem:[#allocation2 + $0x28] sm:$0xff]
      %v1687 = vld [vmem:[#allocation2 + $0x30] sm:$0xff]
      %v1688 = vld [vmem:[#allocation2 + $0x38] sm:$0xff]
      %v1689 = vld [vmem:[#allocation2 + $0x40] sm:$0xff]
      %v1690 = vld [vmem:[#allocation2 + $0x48] sm:$0xff]
      %v1691 = vld [vmem:[#allocation2 + $0x50] sm:$0xff]
      %v1692 = vld [vmem:[#allocation2 + $0x58] sm:$0xff]
      %v1693 = vld [vmem:[#allocation2 + $0x60] sm:$0xff]
      %v1694 = vld [vmem:[#allocation2 + $0x68] sm:$0xff]
      %v1695 = vld [vmem:[#allocation2 + $0x70] sm:$0xff]
      %v1696 = vld [vmem:[#allocation2 + $0x78] sm:$0xff]
      %v1697 = vld [vmem:[#allocation2 + $0x80] sm:$0xff]
      %v1698 = vld [vmem:[#allocation2 + $0x88] sm:$0xff]
      %v1699 = vld [vmem:[#allocation2 + $0x90] sm:$0xff]
      %v1700 = vld [vmem:[#allocation2 + $0x98] sm:$0xff]
      %v1701 = vld [vmem:[#allocation2 + $0xa0] sm:$0xff]
      %v1702 = vld [vmem:[#allocation2 + $0xa8] sm:$0xff]
      %v1703 = vld [vmem:[#allocation2 + $0xb0] sm:$0xff]
      %v1704 = vld [vmem:[#allocation2 + $0xb8] sm:$0xff]
      %v1705 = vld [vmem:[#allocation2 + $0xc0] sm:$0xff]
      %v1706 = vld [vmem:[#allocation2 + $0xc8] sm:$0xff]
      %v1707 = vld [vmem:[#allocation2 + $0xd0] sm:$0xff]
      %v1708 = vld [vmem:[#allocation2 + $0xd8] sm:$0xff]
      %v1709 = vld [vmem:[#allocation2 + $0xe0] sm:$0xff]
      %v1710 = vld [vmem:[#allocation2 + $0xe8] sm:$0xff]
      %v1711 = vld [vmem:[#allocation2 + $0xf0] sm:$0xff]
      %v1712 = vld [vmem:[#allocation2 + $0xf8] sm:$0xff]
      %v1713 = vmul.f32 %v1681, %v1678
      %v1714 = vmul.f32 %v1682, %v1678
      %v1715 = vmul.f32 %v1683, %v1678
      %v1716 = vmul.f32 %v1684, %v1678
      %v1717 = vmul.f32 %v1685, %v1678
      %v1718 = vmul.f32 %v1686, %v1678
      %v1719 = vmul.f32 %v1687, %v1678
      %v1720 = vmul.f32 %v1688, %v1678
      %v1721 = vmul.f32 %v1689, %v1678
      %v1722 = vmul.f32 %v1690, %v1678
      %v1723 = vmul.f32 %v1691, %v1678
      %v1724 = vmul.f32 %v1692, %v1678
      %v1725 = vmul.f32 %v1693, %v1678
      %v1726 = vmul.f32 %v1694, %v1678
      %v1727 = vmul.f32 %v1695, %v1678
      %v1728 = vmul.f32 %v1696, %v1678
      %v1729 = vmul.f32 %v1697, %v1678
      %v1730 = vmul.f32 %v1698, %v1678
      %v1731 = vmul.f32 %v1699, %v1678
      %v1732 = vmul.f32 %v1700, %v1678
      %v1733 = vmul.f32 %v1701, %v1678
      %v1734 = vmul.f32 %v1702, %v1678
      %v1735 = vmul.f32 %v1703, %v1678
      %v1736 = vmul.f32 %v1704, %v1678
      %v1737 = vmul.f32 %v1705, %v1678
      %v1738 = vmul.f32 %v1706, %v1678
      %v1739 = vmul.f32 %v1707, %v1678
      %v1740 = vmul.f32 %v1708, %v1678
      %v1741 = vmul.f32 %v1709, %v1678
      %v1742 = vmul.f32 %v1710, %v1678
      %v1743 = vmul.f32 %v1711, %v1678
      %v1744 = vmul.f32 %v1712, %v1678
      %v1746 = vperm.slane %v1680, 0
      %v1748 = vsub.f32 %v1746, %v1713
      %v1749 = vsub.f32 %v1746, %v1714
      %v1750 = vsub.f32 %v1746, %v1715
      %v1751 = vsub.f32 %v1746, %v1716
      %v1752 = vsub.f32 %v1746, %v1717
      %v1753 = vsub.f32 %v1746, %v1718
      %v1754 = vsub.f32 %v1746, %v1719
      %v1755 = vsub.f32 %v1746, %v1720
      %v1756 = vsub.f32 %v1746, %v1721
      %v1757 = vsub.f32 %v1746, %v1722
      %v1758 = vsub.f32 %v1746, %v1723
      %v1759 = vsub.f32 %v1746, %v1724
      %v1760 = vsub.f32 %v1746, %v1725
      %v1761 = vsub.f32 %v1746, %v1726
      %v1762 = vsub.f32 %v1746, %v1727
      %v1763 = vsub.f32 %v1746, %v1728
      %v1764 = vsub.f32 %v1746, %v1729
      %v1765 = vsub.f32 %v1746, %v1730
      %v1766 = vsub.f32 %v1746, %v1731
      %v1767 = vsub.f32 %v1746, %v1732
      %v1768 = vsub.f32 %v1746, %v1733
      %v1769 = vsub.f32 %v1746, %v1734
      %v1770 = vsub.f32 %v1746, %v1735
      %v1771 = vsub.f32 %v1746, %v1736
      %v1772 = vsub.f32 %v1746, %v1737
      %v1773 = vsub.f32 %v1746, %v1738
      %v1774 = vsub.f32 %v1746, %v1739
      %v1775 = vsub.f32 %v1746, %v1740
      %v1776 = vsub.f32 %v1746, %v1741
      %v1777 = vsub.f32 %v1746, %v1742
      %v1778 = vsub.f32 %v1746, %v1743
      %v1779 = vsub.f32 %v1746, %v1744
      %1780 = vmax.xlane.f32.xlu0 %v1748
      %v1781 = vpop.xlane.xlu0 %1780
      %1782 = vmax.xlane.f32.xlu0 %v1749
      %v1783 = vpop.xlane.xlu0 %1782
      %1784 = vmax.xlane.f32.xlu0 %v1750
      %v1785 = vpop.xlane.xlu0 %1784
      %1786 = vmax.xlane.f32.xlu0 %v1751
      %v1787 = vpop.xlane.xlu0 %1786
      %1788 = vmax.xlane.f32.xlu0 %v1752
      %v1789 = vpop.xlane.xlu0 %1788
      %1790 = vmax.xlane.f32.xlu0 %v1753
      %v1791 = vpop.xlane.xlu0 %1790
      %1792 = vmax.xlane.f32.xlu0 %v1754
      %v1793 = vpop.xlane.xlu0 %1792
      %1794 = vmax.xlane.f32.xlu0 %v1755
      %v1795 = vpop.xlane.xlu0 %1794
      %1796 = vmax.xlane.f32.xlu0 %v1756
      %v1797 = vpop.xlane.xlu0 %1796
      %1798 = vmax.xlane.f32.xlu0 %v1757
      %v1799 = vpop.xlane.xlu0 %1798
      %1800 = vmax.xlane.f32.xlu0 %v1758
      %v1801 = vpop.xlane.xlu0 %1800
      %1802 = vmax.xlane.f32.xlu0 %v1759
      %v1803 = vpop.xlane.xlu0 %1802
      %1804 = vmax.xlane.f32.xlu0 %v1760
      %v1805 = vpop.xlane.xlu0 %1804
      %1806 = vmax.xlane.f32.xlu0 %v1761
      %v1807 = vpop.xlane.xlu0 %1806
      %1808 = vmax.xlane.f32.xlu0 %v1762
      %v1809 = vpop.xlane.xlu0 %1808
      %1810 = vmax.xlane.f32.xlu0 %v1763
      %v1811 = vpop.xlane.xlu0 %1810
      %1812 = vmax.xlane.f32.xlu0 %v1764
      %v1813 = vpop.xlane.xlu0 %1812
      %1814 = vmax.xlane.f32.xlu0 %v1765
      %v1815 = vpop.xlane.xlu0 %1814
      %1816 = vmax.xlane.f32.xlu0 %v1766
      %v1817 = vpop.xlane.xlu0 %1816
      %1818 = vmax.xlane.f32.xlu0 %v1767
      %v1819 = vpop.xlane.xlu0 %1818
      %1820 = vmax.xlane.f32.xlu0 %v1768
      %v1821 = vpop.xlane.xlu0 %1820
      %1822 = vmax.xlane.f32.xlu0 %v1769
      %v1823 = vpop.xlane.xlu0 %1822
      %1824 = vmax.xlane.f32.xlu0 %v1770
      %v1825 = vpop.xlane.xlu0 %1824
      %1826 = vmax.xlane.f32.xlu0 %v1771
      %v1827 = vpop.xlane.xlu0 %1826
      %1828 = vmax.xlane.f32.xlu0 %v1772
      %v1829 = vpop.xlane.xlu0 %1828
      %1830 = vmax.xlane.f32.xlu0 %v1773
      %v1831 = vpop.xlane.xlu0 %1830
      %1832 = vmax.xlane.f32.xlu0 %v1774
      %v1833 = vpop.xlane.xlu0 %1832
      %1834 = vmax.xlane.f32.xlu0 %v1775
      %v1835 = vpop.xlane.xlu0 %1834
      %1836 = vmax.xlane.f32.xlu0 %v1776
      %v1837 = vpop.xlane.xlu0 %1836
      %1838 = vmax.xlane.f32.xlu0 %v1777
      %v1839 = vpop.xlane.xlu0 %1838
      %1840 = vmax.xlane.f32.xlu0 %v1778
      %v1841 = vpop.xlane.xlu0 %1840
      %1842 = vmax.xlane.f32.xlu0 %v1779
      %v1843 = vpop.xlane.xlu0 %1842
      %v1844 = vsub.f32 %v1748, %v1781
      %v1845 = vsub.f32 %v1749, %v1783
      %v1846 = vsub.f32 %v1750, %v1785
      %v1847 = vsub.f32 %v1751, %v1787
      %v1848 = vsub.f32 %v1752, %v1789
      %v1849 = vsub.f32 %v1753, %v1791
      %v1850 = vsub.f32 %v1754, %v1793
      %v1851 = vsub.f32 %v1755, %v1795
      %v1852 = vsub.f32 %v1756, %v1797
      %v1853 = vsub.f32 %v1757, %v1799
      %v1854 = vsub.f32 %v1758, %v1801
      %v1855 = vsub.f32 %v1759, %v1803
      %v1856 = vsub.f32 %v1760, %v1805
      %v1857 = vsub.f32 %v1761, %v1807
      %v1858 = vsub.f32 %v1762, %v1809
      %v1859 = vsub.f32 %v1763, %v1811
      %v1860 = vsub.f32 %v1764, %v1813
      %v1861 = vsub.f32 %v1765, %v1815
      %v1862 = vsub.f32 %v1766, %v1817
      %v1863 = vsub.f32 %v1767, %v1819
      %v1864 = vsub.f32 %v1768, %v1821
      %v1865 = vsub.f32 %v1769, %v1823
      %v1866 = vsub.f32 %v1770, %v1825
      %v1867 = vsub.f32 %v1771, %v1827
      %v1868 = vsub.f32 %v1772, %v1829
      %v1869 = vsub.f32 %v1773, %v1831
      %v1870 = vsub.f32 %v1774, %v1833
      %v1871 = vsub.f32 %v1775, %v1835
      %v1872 = vsub.f32 %v1776, %v1837
      %v1873 = vsub.f32 %v1777, %v1839
      %v1874 = vsub.f32 %v1778, %v1841
      %v1875 = vsub.f32 %v1779, %v1843
      %v1876 = vmul.f32 %v1844, 1.442695
      %v1877 = vpow.pop %v1876
      %v1878 = vmul.f32 %v1845, 1.442695
      %v1879 = vpow.pop %v1878
      %v1880 = vmul.f32 %v1846, 1.442695
      %v1881 = vpow.pop %v1880
      %v1882 = vmul.f32 %v1847, 1.442695
      %v1883 = vpow.pop %v1882
      %v1884 = vmul.f32 %v1848, 1.442695
      %v1885 = vpow.pop %v1884
      %v1886 = vmul.f32 %v1849, 1.442695
      %v1887 = vpow.pop %v1886
      %v1888 = vmul.f32 %v1850, 1.442695
      %v1889 = vpow.pop %v1888
      %v1890 = vmul.f32 %v1851, 1.442695
      %v1891 = vpow.pop %v1890
      %v1892 = vmul.f32 %v1852, 1.442695
      %v1893 = vpow.pop %v1892
      %v1894 = vmul.f32 %v1853, 1.442695
      %v1895 = vpow.pop %v1894
      %v1896 = vmul.f32 %v1854, 1.442695
      %v1897 = vpow.pop %v1896
      %v1898 = vmul.f32 %v1855, 1.442695
      %v1899 = vpow.pop %v1898
      %v1900 = vmul.f32 %v1856, 1.442695
      %v1901 = vpow.pop %v1900
      %v1902 = vmul.f32 %v1857, 1.442695
      %v1903 = vpow.pop %v1902
      %v1904 = vmul.f32 %v1858, 1.442695
      %v1905 = vpow.pop %v1904
      %v1906 = vmul.f32 %v1859, 1.442695
      %v1907 = vpow.pop %v1906
      %v1908 = vmul.f32 %v1860, 1.442695
      %v1909 = vpow.pop %v1908
      %v1910 = vmul.f32 %v1861, 1.442695
      %v1911 = vpow.pop %v1910
      %v1912 = vmul.f32 %v1862, 1.442695
      %v1913 = vpow.pop %v1912
      %v1914 = vmul.f32 %v1863, 1.442695
      %v1915 = vpow.pop %v1914
      %v1916 = vmul.f32 %v1864, 1.442695
      %v1917 = vpow.pop %v1916
      %v1918 = vmul.f32 %v1865, 1.442695
      %v1919 = vpow.pop %v1918
      %v1920 = vmul.f32 %v1866, 1.442695
      %v1921 = vpow.pop %v1920
      %v1922 = vmul.f32 %v1867, 1.442695
      %v1923 = vpow.pop %v1922
      %v1924 = vmul.f32 %v1868, 1.442695
      %v1925 = vpow.pop %v1924
      %v1926 = vmul.f32 %v1869, 1.442695
      %v1927 = vpow.pop %v1926
      %v1928 = vmul.f32 %v1870, 1.442695
      %v1929 = vpow.pop %v1928
      %v1930 = vmul.f32 %v1871, 1.442695
      %v1931 = vpow.pop %v1930
      %v1932 = vmul.f32 %v1872, 1.442695
      %v1933 = vpow.pop %v1932
      %v1934 = vmul.f32 %v1873, 1.442695
      %v1935 = vpow.pop %v1934
      %v1936 = vmul.f32 %v1874, 1.442695
      %v1937 = vpow.pop %v1936
      %v1938 = vmul.f32 %v1875, 1.442695
      %v1939 = vpow.pop %v1938
      %1940 = vadd.xlane.f32.xlu0 %v1877
      %v1941 = vpop.xlane.xlu0 %1940
      %1942 = vadd.xlane.f32.xlu0 %v1879
      %v1943 = vpop.xlane.xlu0 %1942
      %1944 = vadd.xlane.f32.xlu0 %v1881
      %v1945 = vpop.xlane.xlu0 %1944
      %1946 = vadd.xlane.f32.xlu0 %v1883
      %v1947 = vpop.xlane.xlu0 %1946
      %1948 = vadd.xlane.f32.xlu0 %v1885
      %v1949 = vpop.xlane.xlu0 %1948
      %1950 = vadd.xlane.f32.xlu0 %v1887
      %v1951 = vpop.xlane.xlu0 %1950
      %1952 = vadd.xlane.f32.xlu0 %v1889
      %v1953 = vpop.xlane.xlu0 %1952
      %1954 = vadd.xlane.f32.xlu0 %v1891
      %v1955 = vpop.xlane.xlu0 %1954
      %1956 = vadd.xlane.f32.xlu0 %v1893
      %v1957 = vpop.xlane.xlu0 %1956
      %1958 = vadd.xlane.f32.xlu0 %v1895
      %v1959 = vpop.xlane.xlu0 %1958
      %1960 = vadd.xlane.f32.xlu0 %v1897
      %v1961 = vpop.xlane.xlu0 %1960
      %1962 = vadd.xlane.f32.xlu0 %v1899
      %v1963 = vpop.xlane.xlu0 %1962
      %1964 = vadd.xlane.f32.xlu0 %v1901
      %v1965 = vpop.xlane.xlu0 %1964
      %1966 = vadd.xlane.f32.xlu0 %v1903
      %v1967 = vpop.xlane.xlu0 %1966
      %1968 = vadd.xlane.f32.xlu0 %v1905
      %v1969 = vpop.xlane.xlu0 %1968
      %1970 = vadd.xlane.f32.xlu0 %v1907
      %v1971 = vpop.xlane.xlu0 %1970
      %1972 = vadd.xlane.f32.xlu0 %v1909
      %v1973 = vpop.xlane.xlu0 %1972
      %1974 = vadd.xlane.f32.xlu0 %v1911
      %v1975 = vpop.xlane.xlu0 %1974
      %1976 = vadd.xlane.f32.xlu0 %v1913
      %v1977 = vpop.xlane.xlu0 %1976
      %1978 = vadd.xlane.f32.xlu0 %v1915
      %v1979 = vpop.xlane.xlu0 %1978
      %1980 = vadd.xlane.f32.xlu0 %v1917
      %v1981 = vpop.xlane.xlu0 %1980
      %1982 = vadd.xlane.f32.xlu0 %v1919
      %v1983 = vpop.xlane.xlu0 %1982
      %1984 = vadd.xlane.f32.xlu0 %v1921
      %v1985 = vpop.xlane.xlu0 %1984
      %1986 = vadd.xlane.f32.xlu0 %v1923
      %v1987 = vpop.xlane.xlu0 %1986
      %1988 = vadd.xlane.f32.xlu0 %v1925
      %v1989 = vpop.xlane.xlu0 %1988
      %1990 = vadd.xlane.f32.xlu0 %v1927
      %v1991 = vpop.xlane.xlu0 %1990
      %1992 = vadd.xlane.f32.xlu0 %v1929
      %v1993 = vpop.xlane.xlu0 %1992
      %1994 = vadd.xlane.f32.xlu0 %v1931
      %v1995 = vpop.xlane.xlu0 %1994
      %1996 = vadd.xlane.f32.xlu0 %v1933
      %v1997 = vpop.xlane.xlu0 %1996
      %1998 = vadd.xlane.f32.xlu0 %v1935
      %v1999 = vpop.xlane.xlu0 %1998
      %2000 = vadd.xlane.f32.xlu0 %v1937
      %v2001 = vpop.xlane.xlu0 %2000
      %2002 = vadd.xlane.f32.xlu0 %v1939
      %v2003 = vpop.xlane.xlu0 %2002
      %s2004 = ssub.f32 0.0, %s1660
      %v2005 = vlog2.pop %v1941
      %v2006 = vmul.f32 %v2005, 0.6931472
      %v2007 = vlog2.pop %v1943
      %v2008 = vmul.f32 %v2007, 0.6931472
      %v2009 = vlog2.pop %v1945
      %v2010 = vmul.f32 %v2009, 0.6931472
      %v2011 = vlog2.pop %v1947
      %v2012 = vmul.f32 %v2011, 0.6931472
      %v2013 = vlog2.pop %v1949
      %v2014 = vmul.f32 %v2013, 0.6931472
      %v2015 = vlog2.pop %v1951
      %v2016 = vmul.f32 %v2015, 0.6931472
      %v2017 = vlog2.pop %v1953
      %v2018 = vmul.f32 %v2017, 0.6931472
      %v2019 = vlog2.pop %v1955
      %v2020 = vmul.f32 %v2019, 0.6931472
      %v2021 = vlog2.pop %v1957
      %v2022 = vmul.f32 %v2021, 0.6931472
      %v2023 = vlog2.pop %v1959
      %v2024 = vmul.f32 %v2023, 0.6931472
      %v2025 = vlog2.pop %v1961
      %v2026 = vmul.f32 %v2025, 0.6931472
      %v2027 = vlog2.pop %v1963
      %v2028 = vmul.f32 %v2027, 0.6931472
      %v2029 = vlog2.pop %v1965
      %v2030 = vmul.f32 %v2029, 0.6931472
      %v2031 = vlog2.pop %v1967
      %v2032 = vmul.f32 %v2031, 0.6931472
      %v2033 = vlog2.pop %v1969
      %v2034 = vmul.f32 %v2033, 0.6931472
      %v2035 = vlog2.pop %v1971
      %v2036 = vmul.f32 %v2035, 0.6931472
      %v2037 = vlog2.pop %v1973
      %v2038 = vmul.f32 %v2037, 0.6931472
      %v2039 = vlog2.pop %v1975
      %v2040 = vmul.f32 %v2039, 0.6931472
      %v2041 = vlog2.pop %v1977
      %v2042 = vmul.f32 %v2041, 0.6931472
      %v2043 = vlog2.pop %v1979
      %v2044 = vmul.f32 %v2043, 0.6931472
      %v2045 = vlog2.pop %v1981
      %v2046 = vmul.f32 %v2045, 0.6931472
      %v2047 = vlog2.pop %v1983
      %v2048 = vmul.f32 %v2047, 0.6931472
      %v2049 = vlog2.pop %v1985
      %v2050 = vmul.f32 %v2049, 0.6931472
      %v2051 = vlog2.pop %v1987
      %v2052 = vmul.f32 %v2051, 0.6931472
      %v2053 = vlog2.pop %v1989
      %v2054 = vmul.f32 %v2053, 0.6931472
      %v2055 = vlog2.pop %v1991
      %v2056 = vmul.f32 %v2055, 0.6931472
      %v2057 = vlog2.pop %v1993
      %v2058 = vmul.f32 %v2057, 0.6931472
      %v2059 = vlog2.pop %v1995
      %v2060 = vmul.f32 %v2059, 0.6931472
      %v2061 = vlog2.pop %v1997
      %v2062 = vmul.f32 %v2061, 0.6931472
      %v2063 = vlog2.pop %v1999
      %v2064 = vmul.f32 %v2063, 0.6931472
      %v2065 = vlog2.pop %v2001
      %v2066 = vmul.f32 %v2065, 0.6931472
      %v2067 = vlog2.pop %v2003
      %v2068 = vmul.f32 %v2067, 0.6931472
      %v2069 = vadd.f32 %v1781, %v2006
      %v2070 = vadd.f32 %v1783, %v2008
      %v2071 = vadd.f32 %v1785, %v2010
      %v2072 = vadd.f32 %v1787, %v2012
      %v2073 = vadd.f32 %v1789, %v2014
      %v2074 = vadd.f32 %v1791, %v2016
      %v2075 = vadd.f32 %v1793, %v2018
      %v2076 = vadd.f32 %v1795, %v2020
      %v2077 = vadd.f32 %v1797, %v2022
      %v2078 = vadd.f32 %v1799, %v2024
      %v2079 = vadd.f32 %v1801, %v2026
      %v2080 = vadd.f32 %v1803, %v2028
      %v2081 = vadd.f32 %v1805, %v2030
      %v2082 = vadd.f32 %v1807, %v2032
      %v2083 = vadd.f32 %v1809, %v2034
      %v2084 = vadd.f32 %v1811, %v2036
      %v2085 = vadd.f32 %v1813, %v2038
      %v2086 = vadd.f32 %v1815, %v2040
      %v2087 = vadd.f32 %v1817, %v2042
      %v2088 = vadd.f32 %v1819, %v2044
      %v2089 = vadd.f32 %v1821, %v2046
      %v2090 = vadd.f32 %v1823, %v2048
      %v2091 = vadd.f32 %v1825, %v2050
      %v2092 = vadd.f32 %v1827, %v2052
      %v2093 = vadd.f32 %v1829, %v2054
      %v2094 = vadd.f32 %v1831, %v2056
      %v2095 = vadd.f32 %v1833, %v2058
      %v2096 = vadd.f32 %v1835, %v2060
      %v2097 = vadd.f32 %v1837, %v2062
      %v2098 = vadd.f32 %v1839, %v2064
      %v2099 = vadd.f32 %v1841, %v2066
      %v2100 = vadd.f32 %v1843, %v2068
      %v2101 = vstv %s2004
      %v2102 = vmul.f32 %v2101, %v2069
      %v2103 = vmul.f32 %v2101, %v2070
      %v2104 = vmul.f32 %v2101, %v2071
      %v2105 = vmul.f32 %v2101, %v2072
      %v2106 = vmul.f32 %v2101, %v2073
      %v2107 = vmul.f32 %v2101, %v2074
      %v2108 = vmul.f32 %v2101, %v2075
      %v2109 = vmul.f32 %v2101, %v2076
      %v2110 = vmul.f32 %v2101, %v2077
      %v2111 = vmul.f32 %v2101, %v2078
      %v2112 = vmul.f32 %v2101, %v2079
      %v2113 = vmul.f32 %v2101, %v2080
      %v2114 = vmul.f32 %v2101, %v2081
      %v2115 = vmul.f32 %v2101, %v2082
      %v2116 = vmul.f32 %v2101, %v2083
      %v2117 = vmul.f32 %v2101, %v2084
      %v2118 = vmul.f32 %v2101, %v2085
      %v2119 = vmul.f32 %v2101, %v2086
      %v2120 = vmul.f32 %v2101, %v2087
      %v2121 = vmul.f32 %v2101, %v2088
      %v2122 = vmul.f32 %v2101, %v2089
      %v2123 = vmul.f32 %v2101, %v2090
      %v2124 = vmul.f32 %v2101, %v2091
      %v2125 = vmul.f32 %v2101, %v2092
      %v2126 = vmul.f32 %v2101, %v2093
      %v2127 = vmul.f32 %v2101, %v2094
      %v2128 = vmul.f32 %v2101, %v2095
      %v2129 = vmul.f32 %v2101, %v2096
      %v2130 = vmul.f32 %v2101, %v2097
      %v2131 = vmul.f32 %v2101, %v2098
      %v2132 = vmul.f32 %v2101, %v2099
      %v2133 = vmul.f32 %v2101, %v2100
      %v2134 = vstv %s1677
      %v2135 = vmul.f32 %v2134, %v2102
      %v2136 = vmul.f32 %v2134, %v2103
      %v2137 = vmul.f32 %v2134, %v2104
      %v2138 = vmul.f32 %v2134, %v2105
      %v2139 = vmul.f32 %v2134, %v2106
      %v2140 = vmul.f32 %v2134, %v2107
      %v2141 = vmul.f32 %v2134, %v2108
      %v2142 = vmul.f32 %v2134, %v2109
      %v2143 = vmul.f32 %v2134, %v2110
      %v2144 = vmul.f32 %v2134, %v2111
      %v2145 = vmul.f32 %v2134, %v2112
      %v2146 = vmul.f32 %v2134, %v2113
      %v2147 = vmul.f32 %v2134, %v2114
      %v2148 = vmul.f32 %v2134, %v2115
      %v2149 = vmul.f32 %v2134, %v2116
      %v2150 = vmul.f32 %v2134, %v2117
      %v2151 = vmul.f32 %v2134, %v2118
      %v2152 = vmul.f32 %v2134, %v2119
      %v2153 = vmul.f32 %v2134, %v2120
      %v2154 = vmul.f32 %v2134, %v2121
      %v2155 = vmul.f32 %v2134, %v2122
      %v2156 = vmul.f32 %v2134, %v2123
      %v2157 = vmul.f32 %v2134, %v2124
      %v2158 = vmul.f32 %v2134, %v2125
      %v2159 = vmul.f32 %v2134, %v2126
      %v2160 = vmul.f32 %v2134, %v2127
      %v2161 = vmul.f32 %v2134, %v2128
      %v2162 = vmul.f32 %v2134, %v2129
      %v2163 = vmul.f32 %v2134, %v2130
      %v2164 = vmul.f32 %v2134, %v2131
      %v2165 = vmul.f32 %v2134, %v2132
      %v2166 = vmul.f32 %v2134, %v2133
      %s2167 = sld [smem:[#allocation7 + %s1622]]
      %v2168 = vmul.f32 %v1627, %v1678
      %v2169 = vmul.f32 %v1628, %v1678
      %v2170 = vmul.f32 %v1629, %v1678
      %v2171 = vmul.f32 %v1630, %v1678
      %v2172 = vmul.f32 %v1631, %v1678
      %v2173 = vmul.f32 %v1632, %v1678
      %v2174 = vmul.f32 %v1633, %v1678
      %v2175 = vmul.f32 %v1634, %v1678
      %v2176 = vmul.f32 %v1635, %v1678
      %v2177 = vmul.f32 %v1636, %v1678
      %v2178 = vmul.f32 %v1637, %v1678
      %v2179 = vmul.f32 %v1638, %v1678
      %v2180 = vmul.f32 %v1639, %v1678
      %v2181 = vmul.f32 %v1640, %v1678
      %v2182 = vmul.f32 %v1641, %v1678
      %v2183 = vmul.f32 %v1642, %v1678
      %v2184 = vmul.f32 %v1643, %v1678
      %v2185 = vmul.f32 %v1644, %v1678
      %v2186 = vmul.f32 %v1645, %v1678
      %v2187 = vmul.f32 %v1646, %v1678
      %v2188 = vmul.f32 %v1647, %v1678
      %v2189 = vmul.f32 %v1648, %v1678
      %v2190 = vmul.f32 %v1649, %v1678
      %v2191 = vmul.f32 %v1650, %v1678
      %v2192 = vmul.f32 %v1651, %v1678
      %v2193 = vmul.f32 %v1652, %v1678
      %v2194 = vmul.f32 %v1653, %v1678
      %v2195 = vmul.f32 %v1654, %v1678
      %v2196 = vmul.f32 %v1655, %v1678
      %v2197 = vmul.f32 %v1656, %v1678
      %v2198 = vmul.f32 %v1657, %v1678
      %v2199 = vmul.f32 %v1658, %v1678
      %v2200 = vadd.f32 %v714, %v2168
      %v2201 = vadd.f32 %v715, %v2169
      %v2202 = vadd.f32 %v716, %v2170
      %v2203 = vadd.f32 %v717, %v2171
      %v2204 = vadd.f32 %v718, %v2172
      %v2205 = vadd.f32 %v719, %v2173
      %v2206 = vadd.f32 %v720, %v2174
      %v2207 = vadd.f32 %v721, %v2175
      %v2208 = vadd.f32 %v722, %v2176
      %v2209 = vadd.f32 %v723, %v2177
      %v2210 = vadd.f32 %v724, %v2178
      %v2211 = vadd.f32 %v725, %v2179
      %v2212 = vadd.f32 %v726, %v2180
      %v2213 = vadd.f32 %v727, %v2181
      %v2214 = vadd.f32 %v728, %v2182
      %v2215 = vadd.f32 %v729, %v2183
      %v2216 = vadd.f32 %v730, %v2184
      %v2217 = vadd.f32 %v731, %v2185
      %v2218 = vadd.f32 %v732, %v2186
      %v2219 = vadd.f32 %v733, %v2187
      %v2220 = vadd.f32 %v734, %v2188
      %v2221 = vadd.f32 %v735, %v2189
      %v2222 = vadd.f32 %v736, %v2190
      %v2223 = vadd.f32 %v737, %v2191
      %v2224 = vadd.f32 %v738, %v2192
      %v2225 = vadd.f32 %v739, %v2193
      %v2226 = vadd.f32 %v740, %v2194
      %v2227 = vadd.f32 %v741, %v2195
      %v2228 = vadd.f32 %v742, %v2196
      %v2229 = vadd.f32 %v743, %v2197
      %v2230 = vadd.f32 %v744, %v2198
      %v2231 = vadd.f32 %v745, %v2199
      %2233 = vset.pattern.permute.xlu0 0
      %2234 = vperm.xlu0 %2233, %v2200
      %v2235 = vpop.permute.xlu0 %2234
      %2238 = vset.pattern.permute.xlu0 0
      %2239 = vperm.xlu0 %2238, %v2201
      %v2240 = vpop.permute.xlu0 %2239
      %2243 = vset.pattern.permute.xlu0 0
      %2244 = vperm.xlu0 %2243, %v2202
      %v2245 = vpop.permute.xlu0 %2244
      %2248 = vset.pattern.permute.xlu0 0
      %2249 = vperm.xlu0 %2248, %v2203
      %v2250 = vpop.permute.xlu0 %2249
      %2253 = vset.pattern.permute.xlu0 0
      %2254 = vperm.xlu0 %2253, %v2204
      %v2255 = vpop.permute.xlu0 %2254
      %2258 = vset.pattern.permute.xlu0 0
      %2259 = vperm.xlu0 %2258, %v2205
      %v2260 = vpop.permute.xlu0 %2259
      %2263 = vset.pattern.permute.xlu0 0
      %2264 = vperm.xlu0 %2263, %v2206
      %v2265 = vpop.permute.xlu0 %2264
      %2268 = vset.pattern.permute.xlu0 0
      %2269 = vperm.xlu0 %2268, %v2207
      %v2270 = vpop.permute.xlu0 %2269
      %2273 = vset.pattern.permute.xlu0 0
      %2274 = vperm.xlu0 %2273, %v2208
      %v2275 = vpop.permute.xlu0 %2274
      %2278 = vset.pattern.permute.xlu0 0
      %2279 = vperm.xlu0 %2278, %v2209
      %v2280 = vpop.permute.xlu0 %2279
      %2283 = vset.pattern.permute.xlu0 0
      %2284 = vperm.xlu0 %2283, %v2210
      %v2285 = vpop.permute.xlu0 %2284
      %2288 = vset.pattern.permute.xlu0 0
      %2289 = vperm.xlu0 %2288, %v2211
      %v2290 = vpop.permute.xlu0 %2289
      %2293 = vset.pattern.permute.xlu0 0
      %2294 = vperm.xlu0 %2293, %v2212
      %v2295 = vpop.permute.xlu0 %2294
      %2298 = vset.pattern.permute.xlu0 0
      %2299 = vperm.xlu0 %2298, %v2213
      %v2300 = vpop.permute.xlu0 %2299
      %2303 = vset.pattern.permute.xlu0 0
      %2304 = vperm.xlu0 %2303, %v2214
      %v2305 = vpop.permute.xlu0 %2304
      %2308 = vset.pattern.permute.xlu0 0
      %2309 = vperm.xlu0 %2308, %v2215
      %v2310 = vpop.permute.xlu0 %2309
      %2313 = vset.pattern.permute.xlu0 0
      %2314 = vperm.xlu0 %2313, %v2216
      %v2315 = vpop.permute.xlu0 %2314
      %2318 = vset.pattern.permute.xlu0 0
      %2319 = vperm.xlu0 %2318, %v2217
      %v2320 = vpop.permute.xlu0 %2319
      %2323 = vset.pattern.permute.xlu0 0
      %2324 = vperm.xlu0 %2323, %v2218
      %v2325 = vpop.permute.xlu0 %2324
      %2328 = vset.pattern.permute.xlu0 0
      %2329 = vperm.xlu0 %2328, %v2219
      %v2330 = vpop.permute.xlu0 %2329
      %2333 = vset.pattern.permute.xlu0 0
      %2334 = vperm.xlu0 %2333, %v2220
      %v2335 = vpop.permute.xlu0 %2334
      %2338 = vset.pattern.permute.xlu0 0
      %2339 = vperm.xlu0 %2338, %v2221
      %v2340 = vpop.permute.xlu0 %2339
      %2343 = vset.pattern.permute.xlu0 0
      %2344 = vperm.xlu0 %2343, %v2222
      %v2345 = vpop.permute.xlu0 %2344
      %2348 = vset.pattern.permute.xlu0 0
      %2349 = vperm.xlu0 %2348, %v2223
      %v2350 = vpop.permute.xlu0 %2349
      %2353 = vset.pattern.permute.xlu0 0
      %2354 = vperm.xlu0 %2353, %v2224
      %v2355 = vpop.permute.xlu0 %2354
      %2358 = vset.pattern.permute.xlu0 0
      %2359 = vperm.xlu0 %2358, %v2225
      %v2360 = vpop.permute.xlu0 %2359
      %2363 = vset.pattern.permute.xlu0 0
      %2364 = vperm.xlu0 %2363, %v2226
      %v2365 = vpop.permute.xlu0 %2364
      %2368 = vset.pattern.permute.xlu0 0
      %2369 = vperm.xlu0 %2368, %v2227
      %v2370 = vpop.permute.xlu0 %2369
      %2373 = vset.pattern.permute.xlu0 0
      %2374 = vperm.xlu0 %2373, %v2228
      %v2375 = vpop.permute.xlu0 %2374
      %2378 = vset.pattern.permute.xlu0 0
      %2379 = vperm.xlu0 %2378, %v2229
      %v2380 = vpop.permute.xlu0 %2379
      %2383 = vset.pattern.permute.xlu0 0
      %2384 = vperm.xlu0 %2383, %v2230
      %v2385 = vpop.permute.xlu0 %2384
      %2388 = vset.pattern.permute.xlu0 0
      %2389 = vperm.xlu0 %2388, %v2231
      %v2390 = vpop.permute.xlu0 %2389
      %v2392 = vsub.f32 %v2235, %v1713
      %v2393 = vsub.f32 %v2240, %v1714
      %v2394 = vsub.f32 %v2245, %v1715
      %v2395 = vsub.f32 %v2250, %v1716
      %v2396 = vsub.f32 %v2255, %v1717
      %v2397 = vsub.f32 %v2260, %v1718
      %v2398 = vsub.f32 %v2265, %v1719
      %v2399 = vsub.f32 %v2270, %v1720
      %v2400 = vsub.f32 %v2275, %v1721
      %v2401 = vsub.f32 %v2280, %v1722
      %v2402 = vsub.f32 %v2285, %v1723
      %v2403 = vsub.f32 %v2290, %v1724
      %v2404 = vsub.f32 %v2295, %v1725
      %v2405 = vsub.f32 %v2300, %v1726
      %v2406 = vsub.f32 %v2305, %v1727
      %v2407 = vsub.f32 %v2310, %v1728
      %v2408 = vsub.f32 %v2315, %v1729
      %v2409 = vsub.f32 %v2320, %v1730
      %v2410 = vsub.f32 %v2325, %v1731
      %v2411 = vsub.f32 %v2330, %v1732
      %v2412 = vsub.f32 %v2335, %v1733
      %v2413 = vsub.f32 %v2340, %v1734
      %v2414 = vsub.f32 %v2345, %v1735
      %v2415 = vsub.f32 %v2350, %v1736
      %v2416 = vsub.f32 %v2355, %v1737
      %v2417 = vsub.f32 %v2360, %v1738
      %v2418 = vsub.f32 %v2365, %v1739
      %v2419 = vsub.f32 %v2370, %v1740
      %v2420 = vsub.f32 %v2375, %v1741
      %v2421 = vsub.f32 %v2380, %v1742
      %v2422 = vsub.f32 %v2385, %v1743
      %v2423 = vsub.f32 %v2390, %v1744
      %v2424 = vmax.f32 %v2392, %v2396
      %v2425 = vmax.f32 %v2393, %v2397
      %v2426 = vmax.f32 %v2394, %v2398
      %v2427 = vmax.f32 %v2395, %v2399
      %v2428 = vmax.f32 %v2424, %v2400
      %v2429 = vmax.f32 %v2425, %v2401
      %v2430 = vmax.f32 %v2426, %v2402
      %v2431 = vmax.f32 %v2427, %v2403
      %v2432 = vmax.f32 %v2428, %v2404
      %v2433 = vmax.f32 %v2429, %v2405
      %v2434 = vmax.f32 %v2430, %v2406
      %v2435 = vmax.f32 %v2431, %v2407
      %v2436 = vmax.f32 %v2432, %v2408
      %v2437 = vmax.f32 %v2433, %v2409
      %v2438 = vmax.f32 %v2434, %v2410
      %v2439 = vmax.f32 %v2435, %v2411
      %v2440 = vmax.f32 %v2436, %v2412
      %v2441 = vmax.f32 %v2437, %v2413
      %v2442 = vmax.f32 %v2438, %v2414
      %v2443 = vmax.f32 %v2439, %v2415
      %v2444 = vmax.f32 %v2440, %v2416
      %v2445 = vmax.f32 %v2441, %v2417
      %v2446 = vmax.f32 %v2442, %v2418
      %v2447 = vmax.f32 %v2443, %v2419
      %v2448 = vmax.f32 %v2444, %v2420
      %v2449 = vmax.f32 %v2445, %v2421
      %v2450 = vmax.f32 %v2446, %v2422
      %v2451 = vmax.f32 %v2447, %v2423
      %v2452 = vmax.f32 %v2448, %v2449
      %v2453 = vmax.f32 %v2450, %v2451
      %v2454 = vmax.f32 %v2452, %v2453
      %v2455 = vrot.slane %v2454, 4
      %v2456 = vmax.f32 %v2454, %v2455
      %v2457 = vrot.slane %v2456, 2
      %v2458 = vmax.f32 %v2456, %v2457
      %v2459 = vrot.slane %v2458, 1
      %v2460 = vmax.f32 %v2458, %v2459
      %v2461 = vsub.f32 %v2392, %v2460
      %v2462 = vsub.f32 %v2393, %v2460
      %v2463 = vsub.f32 %v2394, %v2460
      %v2464 = vsub.f32 %v2395, %v2460
      %v2465 = vsub.f32 %v2396, %v2460
      %v2466 = vsub.f32 %v2397, %v2460
      %v2467 = vsub.f32 %v2398, %v2460
      %v2468 = vsub.f32 %v2399, %v2460
      %v2469 = vsub.f32 %v2400, %v2460
      %v2470 = vsub.f32 %v2401, %v2460
      %v2471 = vsub.f32 %v2402, %v2460
      %v2472 = vsub.f32 %v2403, %v2460
      %v2473 = vsub.f32 %v2404, %v2460
      %v2474 = vsub.f32 %v2405, %v2460
      %v2475 = vsub.f32 %v2406, %v2460
      %v2476 = vsub.f32 %v2407, %v2460
      %v2477 = vsub.f32 %v2408, %v2460
      %v2478 = vsub.f32 %v2409, %v2460
      %v2479 = vsub.f32 %v2410, %v2460
      %v2480 = vsub.f32 %v2411, %v2460
      %v2481 = vsub.f32 %v2412, %v2460
      %v2482 = vsub.f32 %v2413, %v2460
      %v2483 = vsub.f32 %v2414, %v2460
      %v2484 = vsub.f32 %v2415, %v2460
      %v2485 = vsub.f32 %v2416, %v2460
      %v2486 = vsub.f32 %v2417, %v2460
      %v2487 = vsub.f32 %v2418, %v2460
      %v2488 = vsub.f32 %v2419, %v2460
      %v2489 = vsub.f32 %v2420, %v2460
      %v2490 = vsub.f32 %v2421, %v2460
      %v2491 = vsub.f32 %v2422, %v2460
      %v2492 = vsub.f32 %v2423, %v2460
      %v2493 = vmul.f32 %v2461, 1.442695
      %v2494 = vpow.pop %v2493
      %v2495 = vmul.f32 %v2462, 1.442695
      %v2496 = vpow.pop %v2495
      %v2497 = vmul.f32 %v2463, 1.442695
      %v2498 = vpow.pop %v2497
      %v2499 = vmul.f32 %v2464, 1.442695
      %v2500 = vpow.pop %v2499
      %v2501 = vmul.f32 %v2465, 1.442695
      %v2502 = vpow.pop %v2501
      %v2503 = vmul.f32 %v2466, 1.442695
      %v2504 = vpow.pop %v2503
      %v2505 = vmul.f32 %v2467, 1.442695
      %v2506 = vpow.pop %v2505
      %v2507 = vmul.f32 %v2468, 1.442695
      %v2508 = vpow.pop %v2507
      %v2509 = vmul.f32 %v2469, 1.442695
      %v2510 = vpow.pop %v2509
      %v2511 = vmul.f32 %v2470, 1.442695
      %v2512 = vpow.pop %v2511
      %v2513 = vmul.f32 %v2471, 1.442695
      %v2514 = vpow.pop %v2513
      %v2515 = vmul.f32 %v2472, 1.442695
      %v2516 = vpow.pop %v2515
      %v2517 = vmul.f32 %v2473, 1.442695
      %v2518 = vpow.pop %v2517
      %v2519 = vmul.f32 %v2474, 1.442695
      %v2520 = vpow.pop %v2519
      %v2521 = vmul.f32 %v2475, 1.442695
      %v2522 = vpow.pop %v2521
      %v2523 = vmul.f32 %v2476, 1.442695
      %v2524 = vpow.pop %v2523
      %v2525 = vmul.f32 %v2477, 1.442695
      %v2526 = vpow.pop %v2525
      %v2527 = vmul.f32 %v2478, 1.442695
      %v2528 = vpow.pop %v2527
      %v2529 = vmul.f32 %v2479, 1.442695
      %v2530 = vpow.pop %v2529
      %v2531 = vmul.f32 %v2480, 1.442695
      %v2532 = vpow.pop %v2531
      %v2533 = vmul.f32 %v2481, 1.442695
      %v2534 = vpow.pop %v2533
      %v2535 = vmul.f32 %v2482, 1.442695
      %v2536 = vpow.pop %v2535
      %v2537 = vmul.f32 %v2483, 1.442695
      %v2538 = vpow.pop %v2537
      %v2539 = vmul.f32 %v2484, 1.442695
      %v2540 = vpow.pop %v2539
      %v2541 = vmul.f32 %v2485, 1.442695
      %v2542 = vpow.pop %v2541
      %v2543 = vmul.f32 %v2486, 1.442695
      %v2544 = vpow.pop %v2543
      %v2545 = vmul.f32 %v2487, 1.442695
      %v2546 = vpow.pop %v2545
      %v2547 = vmul.f32 %v2488, 1.442695
      %v2548 = vpow.pop %v2547
      %v2549 = vmul.f32 %v2489, 1.442695
      %v2550 = vpow.pop %v2549
      %v2551 = vmul.f32 %v2490, 1.442695
      %v2552 = vpow.pop %v2551
      %v2553 = vmul.f32 %v2491, 1.442695
      %v2554 = vpow.pop %v2553
      %v2555 = vmul.f32 %v2492, 1.442695
      %v2556 = vpow.pop %v2555
      %v2557 = vadd.f32 %v2494, %v2496
      %v2558 = vadd.f32 %v2557, %v2498
      %v2559 = vadd.f32 %v2558, %v2500
      %v2560 = vadd.f32 %v2559, %v2502
      %v2561 = vadd.f32 %v2560, %v2504
      %v2562 = vadd.f32 %v2561, %v2506
      %v2563 = vadd.f32 %v2562, %v2508
      %v2564 = vadd.f32 %v2563, %v2510
      %v2565 = vadd.f32 %v2564, %v2512
      %v2566 = vadd.f32 %v2565, %v2514
      %v2567 = vadd.f32 %v2566, %v2516
      %v2568 = vadd.f32 %v2567, %v2518
      %v2569 = vadd.f32 %v2568, %v2520
      %v2570 = vadd.f32 %v2569, %v2522
      %v2571 = vadd.f32 %v2570, %v2524
      %v2572 = vadd.f32 %v2571, %v2526
      %v2573 = vadd.f32 %v2572, %v2528
      %v2574 = vadd.f32 %v2573, %v2530
      %v2575 = vadd.f32 %v2574, %v2532
      %v2576 = vadd.f32 %v2575, %v2534
      %v2577 = vadd.f32 %v2576, %v2536
      %v2578 = vadd.f32 %v2577, %v2538
      %v2579 = vadd.f32 %v2578, %v2540
      %v2580 = vadd.f32 %v2579, %v2542
      %v2581 = vadd.f32 %v2580, %v2544
      %v2582 = vadd.f32 %v2581, %v2546
      %v2583 = vadd.f32 %v2582, %v2548
      %v2584 = vadd.f32 %v2583, %v2550
      %v2585 = vadd.f32 %v2584, %v2552
      %v2586 = vadd.f32 %v2585, %v2554
      %v2587 = vadd.f32 %v2586, %v2556
      %v2588 = vrot.slane %v2587, 4
      %v2589 = vadd.f32 %v2587, %v2588
      %v2590 = vrot.slane %v2589, 2
      %v2591 = vadd.f32 %v2589, %v2590
      %v2592 = vrot.slane %v2591, 1
      %v2593 = vadd.f32 %v2591, %v2592
      %v2594 = vlog2.pop %v2593
      %v2595 = vmul.f32 %v2594, 0.6931472
      %v2596 = vadd.f32 %v2460, %v2595
      %v2597 = vmul.f32 %v2101, %v2596
      %v2598 = vstv %s2167
      %v2599 = vmul.f32 %v2598, %v2597
      %v2600 = vadd.f32 %v1627, %v2135
      %v2601 = vadd.f32 %v1628, %v2136
      %v2602 = vadd.f32 %v1629, %v2137
      %v2603 = vadd.f32 %v1630, %v2138
      %v2604 = vadd.f32 %v1631, %v2139
      %v2605 = vadd.f32 %v1632, %v2140
      %v2606 = vadd.f32 %v1633, %v2141
      %v2607 = vadd.f32 %v1634, %v2142
      %v2608 = vadd.f32 %v1635, %v2143
      %v2609 = vadd.f32 %v1636, %v2144
      %v2610 = vadd.f32 %v1637, %v2145
      %v2611 = vadd.f32 %v1638, %v2146
      %v2612 = vadd.f32 %v1639, %v2147
      %v2613 = vadd.f32 %v1640, %v2148
      %v2614 = vadd.f32 %v1641, %v2149
      %v2615 = vadd.f32 %v1642, %v2150
      %v2616 = vadd.f32 %v1643, %v2151
      %v2617 = vadd.f32 %v1644, %v2152
      %v2618 = vadd.f32 %v1645, %v2153
      %v2619 = vadd.f32 %v1646, %v2154
      %v2620 = vadd.f32 %v1647, %v2155
      %v2621 = vadd.f32 %v1648, %v2156
      %v2622 = vadd.f32 %v1649, %v2157
      %v2623 = vadd.f32 %v1650, %v2158
      %v2624 = vadd.f32 %v1651, %v2159
      %v2625 = vadd.f32 %v1652, %v2160
      %v2626 = vadd.f32 %v1653, %v2161
      %v2627 = vadd.f32 %v1654, %v2162
      %v2628 = vadd.f32 %v1655, %v2163
      %v2629 = vadd.f32 %v1656, %v2164
      %v2630 = vadd.f32 %v1657, %v2165
      %v2631 = vadd.f32 %v1658, %v2166
      %v2632 = vmul.f32 %v2600, 0.5
      %v2633 = vmul.f32 %v2601, 0.5
      %v2634 = vmul.f32 %v2602, 0.5
      %v2635 = vmul.f32 %v2603, 0.5
      %v2636 = vmul.f32 %v2604, 0.5
      %v2637 = vmul.f32 %v2605, 0.5
      %v2638 = vmul.f32 %v2606, 0.5
      %v2639 = vmul.f32 %v2607, 0.5
      %v2640 = vmul.f32 %v2608, 0.5
      %v2641 = vmul.f32 %v2609, 0.5
      %v2642 = vmul.f32 %v2610, 0.5
      %v2643 = vmul.f32 %v2611, 0.5
      %v2644 = vmul.f32 %v2612, 0.5
      %v2645 = vmul.f32 %v2613, 0.5
      %v2646 = vmul.f32 %v2614, 0.5
      %v2647 = vmul.f32 %v2615, 0.5
      %v2648 = vmul.f32 %v2616, 0.5
      %v2649 = vmul.f32 %v2617, 0.5
      %v2650 = vmul.f32 %v2618, 0.5
      %v2651 = vmul.f32 %v2619, 0.5
      %v2652 = vmul.f32 %v2620, 0.5
      %v2653 = vmul.f32 %v2621, 0.5
      %v2654 = vmul.f32 %v2622, 0.5
      %v2655 = vmul.f32 %v2623, 0.5
      %v2656 = vmul.f32 %v2624, 0.5
      %v2657 = vmul.f32 %v2625, 0.5
      %v2658 = vmul.f32 %v2626, 0.5
      %v2659 = vmul.f32 %v2627, 0.5
      %v2660 = vmul.f32 %v2628, 0.5
      %v2661 = vmul.f32 %v2629, 0.5
      %v2662 = vmul.f32 %v2630, 0.5
      %v2663 = vmul.f32 %v2631, 0.5
      %v2664 = vadd.f32 %v1659, %v2599
      %v2665 = vmul.f32 %v2664, 0.5
    $region46: #{_sinkhorn_apply.1} parent=1 // loop_footer
      %s1626 = sadd.s32 1, %s1622
    $region47: #{_sinkhorn_apply.1} parent=1 // loop_footer_branch
      %1621 = sbr.rel target = $region43
    $region48: #{_sinkhorn_apply.1} parent=1 // loop_exit
      _
    %s2666 = sld [smem:[#allocation3 + $0x65]]
    %v2667 = vstv %s2666
    %v2668 = vrcp.pop %v2667
    %v2669 = vmul.f32 %v2667, %v2668
    %v2670 = vsub.f32 1.0, %v2669
    %v2671 = vmul.f32 %v2668, %v2670
    %v2672 = vadd.f32 %v2668, %v2671
    %vm2673 = vweird.f32 %v2667
    %vm2674 = vweird.f32 %v2668
    %vm2675 = vmor %vm2673, %vm2674
    %v2676 = vsel %vm2675, %v2668, %v2672
    %v2677 = vand.u32 2147483647, %v2667
    %vm2678 = vcmp.eq.f32.partialorder %v2677, 8.507059e+37
    %v2679 = vand.u32 %v2667, 2147483648
    %v2680 = vor.u32 1.1754944e-38, %v2679
    %v2681 = vsel %vm2678, %v2680, %v2676
    %s2682 = vtos %v2681
    %s2683 = sld [smem:[#allocation5 + $0x65]]
    %v2684 = vstv %s2682
    %v2685 = vmul.f32 %v1659, %v2684
    %v2686 = vadd.f32 %v746, %v2685
    %v2687 = vmul.f32 %v765, %v2684
    %v2688 = vmul.f32 %v766, %v2684
    %v2689 = vmul.f32 %v767, %v2684
    %v2690 = vmul.f32 %v768, %v2684
    %v2691 = vmul.f32 %v769, %v2684
    %v2692 = vmul.f32 %v770, %v2684
    %v2693 = vmul.f32 %v771, %v2684
    %v2694 = vmul.f32 %v772, %v2684
    %v2695 = vmul.f32 %v773, %v2684
    %v2696 = vmul.f32 %v774, %v2684
    %v2697 = vmul.f32 %v775, %v2684
    %v2698 = vmul.f32 %v776, %v2684
    %v2699 = vmul.f32 %v777, %v2684
    %v2700 = vmul.f32 %v778, %v2684
    %v2701 = vmul.f32 %v779, %v2684
    %v2702 = vmul.f32 %v780, %v2684
    %v2703 = vmul.f32 %v781, %v2684
    %v2704 = vmul.f32 %v782, %v2684
    %v2705 = vmul.f32 %v783, %v2684
    %v2706 = vmul.f32 %v784, %v2684
    %v2707 = vmul.f32 %v785, %v2684
    %v2708 = vmul.f32 %v786, %v2684
    %v2709 = vmul.f32 %v787, %v2684
    %v2710 = vmul.f32 %v788, %v2684
    %v2711 = vmul.f32 %v789, %v2684
    %v2712 = vmul.f32 %v790, %v2684
    %v2713 = vmul.f32 %v791, %v2684
    %v2714 = vmul.f32 %v792, %v2684
    %v2715 = vmul.f32 %v793, %v2684
    %v2716 = vmul.f32 %v794, %v2684
    %v2717 = vmul.f32 %v795, %v2684
    %v2718 = vmul.f32 %v796, %v2684
    %v2720 = vperm.slane %v2686, 0
    %v2722 = vsub.f32 %v2720, %v2687
    %v2723 = vsub.f32 %v2720, %v2688
    %v2724 = vsub.f32 %v2720, %v2689
    %v2725 = vsub.f32 %v2720, %v2690
    %v2726 = vsub.f32 %v2720, %v2691
    %v2727 = vsub.f32 %v2720, %v2692
    %v2728 = vsub.f32 %v2720, %v2693
    %v2729 = vsub.f32 %v2720, %v2694
    %v2730 = vsub.f32 %v2720, %v2695
    %v2731 = vsub.f32 %v2720, %v2696
    %v2732 = vsub.f32 %v2720, %v2697
    %v2733 = vsub.f32 %v2720, %v2698
    %v2734 = vsub.f32 %v2720, %v2699
    %v2735 = vsub.f32 %v2720, %v2700
    %v2736 = vsub.f32 %v2720, %v2701
    %v2737 = vsub.f32 %v2720, %v2702
    %v2738 = vsub.f32 %v2720, %v2703
    %v2739 = vsub.f32 %v2720, %v2704
    %v2740 = vsub.f32 %v2720, %v2705
    %v2741 = vsub.f32 %v2720, %v2706
    %v2742 = vsub.f32 %v2720, %v2707
    %v2743 = vsub.f32 %v2720, %v2708
    %v2744 = vsub.f32 %v2720, %v2709
    %v2745 = vsub.f32 %v2720, %v2710
    %v2746 = vsub.f32 %v2720, %v2711
    %v2747 = vsub.f32 %v2720, %v2712
    %v2748 = vsub.f32 %v2720, %v2713
    %v2749 = vsub.f32 %v2720, %v2714
    %v2750 = vsub.f32 %v2720, %v2715
    %v2751 = vsub.f32 %v2720, %v2716
    %v2752 = vsub.f32 %v2720, %v2717
    %v2753 = vsub.f32 %v2720, %v2718
    %2754 = vmax.xlane.f32.xlu0 %v2722
    %v2755 = vpop.xlane.xlu0 %2754
    %2756 = vmax.xlane.f32.xlu0 %v2723
    %v2757 = vpop.xlane.xlu0 %2756
    %2758 = vmax.xlane.f32.xlu0 %v2724
    %v2759 = vpop.xlane.xlu0 %2758
    %2760 = vmax.xlane.f32.xlu0 %v2725
    %v2761 = vpop.xlane.xlu0 %2760
    %2762 = vmax.xlane.f32.xlu0 %v2726
    %v2763 = vpop.xlane.xlu0 %2762
    %2764 = vmax.xlane.f32.xlu0 %v2727
    %v2765 = vpop.xlane.xlu0 %2764
    %2766 = vmax.xlane.f32.xlu0 %v2728
    %v2767 = vpop.xlane.xlu0 %2766
    %2768 = vmax.xlane.f32.xlu0 %v2729
    %v2769 = vpop.xlane.xlu0 %2768
    %2770 = vmax.xlane.f32.xlu0 %v2730
    %v2771 = vpop.xlane.xlu0 %2770
    %2772 = vmax.xlane.f32.xlu0 %v2731
    %v2773 = vpop.xlane.xlu0 %2772
    %2774 = vmax.xlane.f32.xlu0 %v2732
    %v2775 = vpop.xlane.xlu0 %2774
    %2776 = vmax.xlane.f32.xlu0 %v2733
    %v2777 = vpop.xlane.xlu0 %2776
    %2778 = vmax.xlane.f32.xlu0 %v2734
    %v2779 = vpop.xlane.xlu0 %2778
    %2780 = vmax.xlane.f32.xlu0 %v2735
    %v2781 = vpop.xlane.xlu0 %2780
    %2782 = vmax.xlane.f32.xlu0 %v2736
    %v2783 = vpop.xlane.xlu0 %2782
    %2784 = vmax.xlane.f32.xlu0 %v2737
    %v2785 = vpop.xlane.xlu0 %2784
    %2786 = vmax.xlane.f32.xlu0 %v2738
    %v2787 = vpop.xlane.xlu0 %2786
    %2788 = vmax.xlane.f32.xlu0 %v2739
    %v2789 = vpop.xlane.xlu0 %2788
    %2790 = vmax.xlane.f32.xlu0 %v2740
    %v2791 = vpop.xlane.xlu0 %2790
    %2792 = vmax.xlane.f32.xlu0 %v2741
    %v2793 = vpop.xlane.xlu0 %2792
    %2794 = vmax.xlane.f32.xlu0 %v2742
    %v2795 = vpop.xlane.xlu0 %2794
    %2796 = vmax.xlane.f32.xlu0 %v2743
    %v2797 = vpop.xlane.xlu0 %2796
    %2798 = vmax.xlane.f32.xlu0 %v2744
    %v2799 = vpop.xlane.xlu0 %2798
    %2800 = vmax.xlane.f32.xlu0 %v2745
    %v2801 = vpop.xlane.xlu0 %2800
    %2802 = vmax.xlane.f32.xlu0 %v2746
    %v2803 = vpop.xlane.xlu0 %2802
    %2804 = vmax.xlane.f32.xlu0 %v2747
    %v2805 = vpop.xlane.xlu0 %2804
    %2806 = vmax.xlane.f32.xlu0 %v2748
    %v2807 = vpop.xlane.xlu0 %2806
    %2808 = vmax.xlane.f32.xlu0 %v2749
    %v2809 = vpop.xlane.xlu0 %2808
    %2810 = vmax.xlane.f32.xlu0 %v2750
    %v2811 = vpop.xlane.xlu0 %2810
    %2812 = vmax.xlane.f32.xlu0 %v2751
    %v2813 = vpop.xlane.xlu0 %2812
    %2814 = vmax.xlane.f32.xlu0 %v2752
    %v2815 = vpop.xlane.xlu0 %2814
    %2816 = vmax.xlane.f32.xlu0 %v2753
    %v2817 = vpop.xlane.xlu0 %2816
    %v2818 = vsub.f32 %v2722, %v2755
    %v2819 = vsub.f32 %v2723, %v2757
    %v2820 = vsub.f32 %v2724, %v2759
    %v2821 = vsub.f32 %v2725, %v2761
    %v2822 = vsub.f32 %v2726, %v2763
    %v2823 = vsub.f32 %v2727, %v2765
    %v2824 = vsub.f32 %v2728, %v2767
    %v2825 = vsub.f32 %v2729, %v2769
    %v2826 = vsub.f32 %v2730, %v2771
    %v2827 = vsub.f32 %v2731, %v2773
    %v2828 = vsub.f32 %v2732, %v2775
    %v2829 = vsub.f32 %v2733, %v2777
    %v2830 = vsub.f32 %v2734, %v2779
    %v2831 = vsub.f32 %v2735, %v2781
    %v2832 = vsub.f32 %v2736, %v2783
    %v2833 = vsub.f32 %v2737, %v2785
    %v2834 = vsub.f32 %v2738, %v2787
    %v2835 = vsub.f32 %v2739, %v2789
    %v2836 = vsub.f32 %v2740, %v2791
    %v2837 = vsub.f32 %v2741, %v2793
    %v2838 = vsub.f32 %v2742, %v2795
    %v2839 = vsub.f32 %v2743, %v2797
    %v2840 = vsub.f32 %v2744, %v2799
    %v2841 = vsub.f32 %v2745, %v2801
    %v2842 = vsub.f32 %v2746, %v2803
    %v2843 = vsub.f32 %v2747, %v2805
    %v2844 = vsub.f32 %v2748, %v2807
    %v2845 = vsub.f32 %v2749, %v2809
    %v2846 = vsub.f32 %v2750, %v2811
    %v2847 = vsub.f32 %v2751, %v2813
    %v2848 = vsub.f32 %v2752, %v2815
    %v2849 = vsub.f32 %v2753, %v2817
    %v2850 = vmul.f32 %v2818, 1.442695
    %v2851 = vpow.pop %v2850
    %v2852 = vmul.f32 %v2819, 1.442695
    %v2853 = vpow.pop %v2852
    %v2854 = vmul.f32 %v2820, 1.442695
    %v2855 = vpow.pop %v2854
    %v2856 = vmul.f32 %v2821, 1.442695
    %v2857 = vpow.pop %v2856
    %v2858 = vmul.f32 %v2822, 1.442695
    %v2859 = vpow.pop %v2858
    %v2860 = vmul.f32 %v2823, 1.442695
    %v2861 = vpow.pop %v2860
    %v2862 = vmul.f32 %v2824, 1.442695
    %v2863 = vpow.pop %v2862
    %v2864 = vmul.f32 %v2825, 1.442695
    %v2865 = vpow.pop %v2864
    %v2866 = vmul.f32 %v2826, 1.442695
    %v2867 = vpow.pop %v2866
    %v2868 = vmul.f32 %v2827, 1.442695
    %v2869 = vpow.pop %v2868
    %v2870 = vmul.f32 %v2828, 1.442695
    %v2871 = vpow.pop %v2870
    %v2872 = vmul.f32 %v2829, 1.442695
    %v2873 = vpow.pop %v2872
    %v2874 = vmul.f32 %v2830, 1.442695
    %v2875 = vpow.pop %v2874
    %v2876 = vmul.f32 %v2831, 1.442695
    %v2877 = vpow.pop %v2876
    %v2878 = vmul.f32 %v2832, 1.442695
    %v2879 = vpow.pop %v2878
    %v2880 = vmul.f32 %v2833, 1.442695
    %v2881 = vpow.pop %v2880
    %v2882 = vmul.f32 %v2834, 1.442695
    %v2883 = vpow.pop %v2882
    %v2884 = vmul.f32 %v2835, 1.442695
    %v2885 = vpow.pop %v2884
    %v2886 = vmul.f32 %v2836, 1.442695
    %v2887 = vpow.pop %v2886
    %v2888 = vmul.f32 %v2837, 1.442695
    %v2889 = vpow.pop %v2888
    %v2890 = vmul.f32 %v2838, 1.442695
    %v2891 = vpow.pop %v2890
    %v2892 = vmul.f32 %v2839, 1.442695
    %v2893 = vpow.pop %v2892
    %v2894 = vmul.f32 %v2840, 1.442695
    %v2895 = vpow.pop %v2894
    %v2896 = vmul.f32 %v2841, 1.442695
    %v2897 = vpow.pop %v2896
    %v2898 = vmul.f32 %v2842, 1.442695
    %v2899 = vpow.pop %v2898
    %v2900 = vmul.f32 %v2843, 1.442695
    %v2901 = vpow.pop %v2900
    %v2902 = vmul.f32 %v2844, 1.442695
    %v2903 = vpow.pop %v2902
    %v2904 = vmul.f32 %v2845, 1.442695
    %v2905 = vpow.pop %v2904
    %v2906 = vmul.f32 %v2846, 1.442695
    %v2907 = vpow.pop %v2906
    %v2908 = vmul.f32 %v2847, 1.442695
    %v2909 = vpow.pop %v2908
    %v2910 = vmul.f32 %v2848, 1.442695
    %v2911 = vpow.pop %v2910
    %v2912 = vmul.f32 %v2849, 1.442695
    %v2913 = vpow.pop %v2912
    %2914 = vadd.xlane.f32.xlu0 %v2851
    %v2915 = vpop.xlane.xlu0 %2914
    %2916 = vadd.xlane.f32.xlu0 %v2853
    %v2917 = vpop.xlane.xlu0 %2916
    %2918 = vadd.xlane.f32.xlu0 %v2855
    %v2919 = vpop.xlane.xlu0 %2918
    %2920 = vadd.xlane.f32.xlu0 %v2857
    %v2921 = vpop.xlane.xlu0 %2920
    %2922 = vadd.xlane.f32.xlu0 %v2859
    %v2923 = vpop.xlane.xlu0 %2922
    %2924 = vadd.xlane.f32.xlu0 %v2861
    %v2925 = vpop.xlane.xlu0 %2924
    %2926 = vadd.xlane.f32.xlu0 %v2863
    %v2927 = vpop.xlane.xlu0 %2926
    %2928 = vadd.xlane.f32.xlu0 %v2865
    %v2929 = vpop.xlane.xlu0 %2928
    %2930 = vadd.xlane.f32.xlu0 %v2867
    %v2931 = vpop.xlane.xlu0 %2930
    %2932 = vadd.xlane.f32.xlu0 %v2869
    %v2933 = vpop.xlane.xlu0 %2932
    %2934 = vadd.xlane.f32.xlu0 %v2871
    %v2935 = vpop.xlane.xlu0 %2934
    %2936 = vadd.xlane.f32.xlu0 %v2873
    %v2937 = vpop.xlane.xlu0 %2936
    %2938 = vadd.xlane.f32.xlu0 %v2875
    %v2939 = vpop.xlane.xlu0 %2938
    %2940 = vadd.xlane.f32.xlu0 %v2877
    %v2941 = vpop.xlane.xlu0 %2940
    %2942 = vadd.xlane.f32.xlu0 %v2879
    %v2943 = vpop.xlane.xlu0 %2942
    %2944 = vadd.xlane.f32.xlu0 %v2881
    %v2945 = vpop.xlane.xlu0 %2944
    %2946 = vadd.xlane.f32.xlu0 %v2883
    %v2947 = vpop.xlane.xlu0 %2946
    %2948 = vadd.xlane.f32.xlu0 %v2885
    %v2949 = vpop.xlane.xlu0 %2948
    %2950 = vadd.xlane.f32.xlu0 %v2887
    %v2951 = vpop.xlane.xlu0 %2950
    %2952 = vadd.xlane.f32.xlu0 %v2889
    %v2953 = vpop.xlane.xlu0 %2952
    %2954 = vadd.xlane.f32.xlu0 %v2891
    %v2955 = vpop.xlane.xlu0 %2954
    %2956 = vadd.xlane.f32.xlu0 %v2893
    %v2957 = vpop.xlane.xlu0 %2956
    %2958 = vadd.xlane.f32.xlu0 %v2895
    %v2959 = vpop.xlane.xlu0 %2958
    %2960 = vadd.xlane.f32.xlu0 %v2897
    %v2961 = vpop.xlane.xlu0 %2960
    %2962 = vadd.xlane.f32.xlu0 %v2899
    %v2963 = vpop.xlane.xlu0 %2962
    %2964 = vadd.xlane.f32.xlu0 %v2901
    %v2965 = vpop.xlane.xlu0 %2964
    %2966 = vadd.xlane.f32.xlu0 %v2903
    %v2967 = vpop.xlane.xlu0 %2966
    %2968 = vadd.xlane.f32.xlu0 %v2905
    %v2969 = vpop.xlane.xlu0 %2968
    %2970 = vadd.xlane.f32.xlu0 %v2907
    %v2971 = vpop.xlane.xlu0 %2970
    %2972 = vadd.xlane.f32.xlu0 %v2909
    %v2973 = vpop.xlane.xlu0 %2972
    %2974 = vadd.xlane.f32.xlu0 %v2911
    %v2975 = vpop.xlane.xlu0 %2974
    %2976 = vadd.xlane.f32.xlu0 %v2913
    %v2977 = vpop.xlane.xlu0 %2976
    %s2978 = ssub.f32 0.0, %s2666
    %v2979 = vlog2.pop %v2915
    %v2980 = vmul.f32 %v2979, 0.6931472
    %v2981 = vlog2.pop %v2917
    %v2982 = vmul.f32 %v2981, 0.6931472
    %v2983 = vlog2.pop %v2919
    %v2984 = vmul.f32 %v2983, 0.6931472
    %v2985 = vlog2.pop %v2921
    %v2986 = vmul.f32 %v2985, 0.6931472
    %v2987 = vlog2.pop %v2923
    %v2988 = vmul.f32 %v2987, 0.6931472
    %v2989 = vlog2.pop %v2925
    %v2990 = vmul.f32 %v2989, 0.6931472
    %v2991 = vlog2.pop %v2927
    %v2992 = vmul.f32 %v2991, 0.6931472
    %v2993 = vlog2.pop %v2929
    %v2994 = vmul.f32 %v2993, 0.6931472
    %v2995 = vlog2.pop %v2931
    %v2996 = vmul.f32 %v2995, 0.6931472
    %v2997 = vlog2.pop %v2933
    %v2998 = vmul.f32 %v2997, 0.6931472
    %v2999 = vlog2.pop %v2935
    %v3000 = vmul.f32 %v2999, 0.6931472
    %v3001 = vlog2.pop %v2937
    %v3002 = vmul.f32 %v3001, 0.6931472
    %v3003 = vlog2.pop %v2939
    %v3004 = vmul.f32 %v3003, 0.6931472
    %v3005 = vlog2.pop %v2941
    %v3006 = vmul.f32 %v3005, 0.6931472
    %v3007 = vlog2.pop %v2943
    %v3008 = vmul.f32 %v3007, 0.6931472
    %v3009 = vlog2.pop %v2945
    %v3010 = vmul.f32 %v3009, 0.6931472
    %v3011 = vlog2.pop %v2947
    %v3012 = vmul.f32 %v3011, 0.6931472
    %v3013 = vlog2.pop %v2949
    %v3014 = vmul.f32 %v3013, 0.6931472
    %v3015 = vlog2.pop %v2951
    %v3016 = vmul.f32 %v3015, 0.6931472
    %v3017 = vlog2.pop %v2953
    %v3018 = vmul.f32 %v3017, 0.6931472
    %v3019 = vlog2.pop %v2955
    %v3020 = vmul.f32 %v3019, 0.6931472
    %v3021 = vlog2.pop %v2957
    %v3022 = vmul.f32 %v3021, 0.6931472
    %v3023 = vlog2.pop %v2959
    %v3024 = vmul.f32 %v3023, 0.6931472
    %v3025 = vlog2.pop %v2961
    %v3026 = vmul.f32 %v3025, 0.6931472
    %v3027 = vlog2.pop %v2963
    %v3028 = vmul.f32 %v3027, 0.6931472
    %v3029 = vlog2.pop %v2965
    %v3030 = vmul.f32 %v3029, 0.6931472
    %v3031 = vlog2.pop %v2967
    %v3032 = vmul.f32 %v3031, 0.6931472
    %v3033 = vlog2.pop %v2969
    %v3034 = vmul.f32 %v3033, 0.6931472
    %v3035 = vlog2.pop %v2971
    %v3036 = vmul.f32 %v3035, 0.6931472
    %v3037 = vlog2.pop %v2973
    %v3038 = vmul.f32 %v3037, 0.6931472
    %v3039 = vlog2.pop %v2975
    %v3040 = vmul.f32 %v3039, 0.6931472
    %v3041 = vlog2.pop %v2977
    %v3042 = vmul.f32 %v3041, 0.6931472
    %v3043 = vadd.f32 %v2755, %v2980
    %v3044 = vadd.f32 %v2757, %v2982
    %v3045 = vadd.f32 %v2759, %v2984
    %v3046 = vadd.f32 %v2761, %v2986
    %v3047 = vadd.f32 %v2763, %v2988
    %v3048 = vadd.f32 %v2765, %v2990
    %v3049 = vadd.f32 %v2767, %v2992
    %v3050 = vadd.f32 %v2769, %v2994
    %v3051 = vadd.f32 %v2771, %v2996
    %v3052 = vadd.f32 %v2773, %v2998
    %v3053 = vadd.f32 %v2775, %v3000
    %v3054 = vadd.f32 %v2777, %v3002
    %v3055 = vadd.f32 %v2779, %v3004
    %v3056 = vadd.f32 %v2781, %v3006
    %v3057 = vadd.f32 %v2783, %v3008
    %v3058 = vadd.f32 %v2785, %v3010
    %v3059 = vadd.f32 %v2787, %v3012
    %v3060 = vadd.f32 %v2789, %v3014
    %v3061 = vadd.f32 %v2791, %v3016
    %v3062 = vadd.f32 %v2793, %v3018
    %v3063 = vadd.f32 %v2795, %v3020
    %v3064 = vadd.f32 %v2797, %v3022
    %v3065 = vadd.f32 %v2799, %v3024
    %v3066 = vadd.f32 %v2801, %v3026
    %v3067 = vadd.f32 %v2803, %v3028
    %v3068 = vadd.f32 %v2805, %v3030
    %v3069 = vadd.f32 %v2807, %v3032
    %v3070 = vadd.f32 %v2809, %v3034
    %v3071 = vadd.f32 %v2811, %v3036
    %v3072 = vadd.f32 %v2813, %v3038
    %v3073 = vadd.f32 %v2815, %v3040
    %v3074 = vadd.f32 %v2817, %v3042
    %v3075 = vstv %s2978
    %v3076 = vmul.f32 %v3075, %v3043
    %v3077 = vmul.f32 %v3075, %v3044
    %v3078 = vmul.f32 %v3075, %v3045
    %v3079 = vmul.f32 %v3075, %v3046
    %v3080 = vmul.f32 %v3075, %v3047
    %v3081 = vmul.f32 %v3075, %v3048
    %v3082 = vmul.f32 %v3075, %v3049
    %v3083 = vmul.f32 %v3075, %v3050
    %v3084 = vmul.f32 %v3075, %v3051
    %v3085 = vmul.f32 %v3075, %v3052
    %v3086 = vmul.f32 %v3075, %v3053
    %v3087 = vmul.f32 %v3075, %v3054
    %v3088 = vmul.f32 %v3075, %v3055
    %v3089 = vmul.f32 %v3075, %v3056
    %v3090 = vmul.f32 %v3075, %v3057
    %v3091 = vmul.f32 %v3075, %v3058
    %v3092 = vmul.f32 %v3075, %v3059
    %v3093 = vmul.f32 %v3075, %v3060
    %v3094 = vmul.f32 %v3075, %v3061
    %v3095 = vmul.f32 %v3075, %v3062
    %v3096 = vmul.f32 %v3075, %v3063
    %v3097 = vmul.f32 %v3075, %v3064
    %v3098 = vmul.f32 %v3075, %v3065
    %v3099 = vmul.f32 %v3075, %v3066
    %v3100 = vmul.f32 %v3075, %v3067
    %v3101 = vmul.f32 %v3075, %v3068
    %v3102 = vmul.f32 %v3075, %v3069
    %v3103 = vmul.f32 %v3075, %v3070
    %v3104 = vmul.f32 %v3075, %v3071
    %v3105 = vmul.f32 %v3075, %v3072
    %v3106 = vmul.f32 %v3075, %v3073
    %v3107 = vmul.f32 %v3075, %v3074
    %v3108 = vstv %s2683
    %v3109 = vmul.f32 %v3108, %v3076
    %v3110 = vmul.f32 %v3108, %v3077
    %v3111 = vmul.f32 %v3108, %v3078
    %v3112 = vmul.f32 %v3108, %v3079
    %v3113 = vmul.f32 %v3108, %v3080
    %v3114 = vmul.f32 %v3108, %v3081
    %v3115 = vmul.f32 %v3108, %v3082
    %v3116 = vmul.f32 %v3108, %v3083
    %v3117 = vmul.f32 %v3108, %v3084
    %v3118 = vmul.f32 %v3108, %v3085
    %v3119 = vmul.f32 %v3108, %v3086
    %v3120 = vmul.f32 %v3108, %v3087
    %v3121 = vmul.f32 %v3108, %v3088
    %v3122 = vmul.f32 %v3108, %v3089
    %v3123 = vmul.f32 %v3108, %v3090
    %v3124 = vmul.f32 %v3108, %v3091
    %v3125 = vmul.f32 %v3108, %v3092
    %v3126 = vmul.f32 %v3108, %v3093
    %v3127 = vmul.f32 %v3108, %v3094
    %v3128 = vmul.f32 %v3108, %v3095
    %v3129 = vmul.f32 %v3108, %v3096
    %v3130 = vmul.f32 %v3108, %v3097
    %v3131 = vmul.f32 %v3108, %v3098
    %v3132 = vmul.f32 %v3108, %v3099
    %v3133 = vmul.f32 %v3108, %v3100
    %v3134 = vmul.f32 %v3108, %v3101
    %v3135 = vmul.f32 %v3108, %v3102
    %v3136 = vmul.f32 %v3108, %v3103
    %v3137 = vmul.f32 %v3108, %v3104
    %v3138 = vmul.f32 %v3108, %v3105
    %v3139 = vmul.f32 %v3108, %v3106
    %v3140 = vmul.f32 %v3108, %v3107
    %s3141 = sld [smem:[#allocation7 + $0x65]]
    %v3142 = vmul.f32 %v1627, %v2684
    %v3143 = vmul.f32 %v1628, %v2684
    %v3144 = vmul.f32 %v1629, %v2684
    %v3145 = vmul.f32 %v1630, %v2684
    %v3146 = vmul.f32 %v1631, %v2684
    %v3147 = vmul.f32 %v1632, %v2684
    %v3148 = vmul.f32 %v1633, %v2684
    %v3149 = vmul.f32 %v1634, %v2684
    %v3150 = vmul.f32 %v1635, %v2684
    %v3151 = vmul.f32 %v1636, %v2684
    %v3152 = vmul.f32 %v1637, %v2684
    %v3153 = vmul.f32 %v1638, %v2684
    %v3154 = vmul.f32 %v1639, %v2684
    %v3155 = vmul.f32 %v1640, %v2684
    %v3156 = vmul.f32 %v1641, %v2684
    %v3157 = vmul.f32 %v1642, %v2684
    %v3158 = vmul.f32 %v1643, %v2684
    %v3159 = vmul.f32 %v1644, %v2684
    %v3160 = vmul.f32 %v1645, %v2684
    %v3161 = vmul.f32 %v1646, %v2684
    %v3162 = vmul.f32 %v1647, %v2684
    %v3163 = vmul.f32 %v1648, %v2684
    %v3164 = vmul.f32 %v1649, %v2684
    %v3165 = vmul.f32 %v1650, %v2684
    %v3166 = vmul.f32 %v1651, %v2684
    %v3167 = vmul.f32 %v1652, %v2684
    %v3168 = vmul.f32 %v1653, %v2684
    %v3169 = vmul.f32 %v1654, %v2684
    %v3170 = vmul.f32 %v1655, %v2684
    %v3171 = vmul.f32 %v1656, %v2684
    %v3172 = vmul.f32 %v1657, %v2684
    %v3173 = vmul.f32 %v1658, %v2684
    %v3174 = vadd.f32 %v714, %v3142
    %v3175 = vadd.f32 %v715, %v3143
    %v3176 = vadd.f32 %v716, %v3144
    %v3177 = vadd.f32 %v717, %v3145
    %v3178 = vadd.f32 %v718, %v3146
    %v3179 = vadd.f32 %v719, %v3147
    %v3180 = vadd.f32 %v720, %v3148
    %v3181 = vadd.f32 %v721, %v3149
    %v3182 = vadd.f32 %v722, %v3150
    %v3183 = vadd.f32 %v723, %v3151
    %v3184 = vadd.f32 %v724, %v3152
    %v3185 = vadd.f32 %v725, %v3153
    %v3186 = vadd.f32 %v726, %v3154
    %v3187 = vadd.f32 %v727, %v3155
    %v3188 = vadd.f32 %v728, %v3156
    %v3189 = vadd.f32 %v729, %v3157
    %v3190 = vadd.f32 %v730, %v3158
    %v3191 = vadd.f32 %v731, %v3159
    %v3192 = vadd.f32 %v732, %v3160
    %v3193 = vadd.f32 %v733, %v3161
    %v3194 = vadd.f32 %v734, %v3162
    %v3195 = vadd.f32 %v735, %v3163
    %v3196 = vadd.f32 %v736, %v3164
    %v3197 = vadd.f32 %v737, %v3165
    %v3198 = vadd.f32 %v738, %v3166
    %v3199 = vadd.f32 %v739, %v3167
    %v3200 = vadd.f32 %v740, %v3168
    %v3201 = vadd.f32 %v741, %v3169
    %v3202 = vadd.f32 %v742, %v3170
    %v3203 = vadd.f32 %v743, %v3171
    %v3204 = vadd.f32 %v744, %v3172
    %v3205 = vadd.f32 %v745, %v3173
    %3207 = vset.pattern.permute.xlu0 0
    %3208 = vperm.xlu0 %3207, %v3174
    %v3209 = vpop.permute.xlu0 %3208
    %3212 = vset.pattern.permute.xlu0 0
    %3213 = vperm.xlu0 %3212, %v3175
    %v3214 = vpop.permute.xlu0 %3213
    %3217 = vset.pattern.permute.xlu0 0
    %3218 = vperm.xlu0 %3217, %v3176
    %v3219 = vpop.permute.xlu0 %3218
    %3222 = vset.pattern.permute.xlu0 0
    %3223 = vperm.xlu0 %3222, %v3177
    %v3224 = vpop.permute.xlu0 %3223
    %3227 = vset.pattern.permute.xlu0 0
    %3228 = vperm.xlu0 %3227, %v3178
    %v3229 = vpop.permute.xlu0 %3228
    %3232 = vset.pattern.permute.xlu0 0
    %3233 = vperm.xlu0 %3232, %v3179
    %v3234 = vpop.permute.xlu0 %3233
    %3237 = vset.pattern.permute.xlu0 0
    %3238 = vperm.xlu0 %3237, %v3180
    %v3239 = vpop.permute.xlu0 %3238
    %3242 = vset.pattern.permute.xlu0 0
    %3243 = vperm.xlu0 %3242, %v3181
    %v3244 = vpop.permute.xlu0 %3243
    %3247 = vset.pattern.permute.xlu0 0
    %3248 = vperm.xlu0 %3247, %v3182
    %v3249 = vpop.permute.xlu0 %3248
    %3252 = vset.pattern.permute.xlu0 0
    %3253 = vperm.xlu0 %3252, %v3183
    %v3254 = vpop.permute.xlu0 %3253
    %3257 = vset.pattern.permute.xlu0 0
    %3258 = vperm.xlu0 %3257, %v3184
    %v3259 = vpop.permute.xlu0 %3258
    %3262 = vset.pattern.permute.xlu0 0
    %3263 = vperm.xlu0 %3262, %v3185
    %v3264 = vpop.permute.xlu0 %3263
    %3267 = vset.pattern.permute.xlu0 0
    %3268 = vperm.xlu0 %3267, %v3186
    %v3269 = vpop.permute.xlu0 %3268
    %3272 = vset.pattern.permute.xlu0 0
    %3273 = vperm.xlu0 %3272, %v3187
    %v3274 = vpop.permute.xlu0 %3273
    %3277 = vset.pattern.permute.xlu0 0
    %3278 = vperm.xlu0 %3277, %v3188
    %v3279 = vpop.permute.xlu0 %3278
    %3282 = vset.pattern.permute.xlu0 0
    %3283 = vperm.xlu0 %3282, %v3189
    %v3284 = vpop.permute.xlu0 %3283
    %3287 = vset.pattern.permute.xlu0 0
    %3288 = vperm.xlu0 %3287, %v3190
    %v3289 = vpop.permute.xlu0 %3288
    %3292 = vset.pattern.permute.xlu0 0
    %3293 = vperm.xlu0 %3292, %v3191
    %v3294 = vpop.permute.xlu0 %3293
    %3297 = vset.pattern.permute.xlu0 0
    %3298 = vperm.xlu0 %3297, %v3192
    %v3299 = vpop.permute.xlu0 %3298
    %3302 = vset.pattern.permute.xlu0 0
    %3303 = vperm.xlu0 %3302, %v3193
    %v3304 = vpop.permute.xlu0 %3303
    %3307 = vset.pattern.permute.xlu0 0
    %3308 = vperm.xlu0 %3307, %v3194
    %v3309 = vpop.permute.xlu0 %3308
    %3312 = vset.pattern.permute.xlu0 0
    %3313 = vperm.xlu0 %3312, %v3195
    %v3314 = vpop.permute.xlu0 %3313
    %3317 = vset.pattern.permute.xlu0 0
    %3318 = vperm.xlu0 %3317, %v3196
    %v3319 = vpop.permute.xlu0 %3318
    %3322 = vset.pattern.permute.xlu0 0
    %3323 = vperm.xlu0 %3322, %v3197
    %v3324 = vpop.permute.xlu0 %3323
    %3327 = vset.pattern.permute.xlu0 0
    %3328 = vperm.xlu0 %3327, %v3198
    %v3329 = vpop.permute.xlu0 %3328
    %3332 = vset.pattern.permute.xlu0 0
    %3333 = vperm.xlu0 %3332, %v3199
    %v3334 = vpop.permute.xlu0 %3333
    %3337 = vset.pattern.permute.xlu0 0
    %3338 = vperm.xlu0 %3337, %v3200
    %v3339 = vpop.permute.xlu0 %3338
    %3342 = vset.pattern.permute.xlu0 0
    %3343 = vperm.xlu0 %3342, %v3201
    %v3344 = vpop.permute.xlu0 %3343
    %3347 = vset.pattern.permute.xlu0 0
    %3348 = vperm.xlu0 %3347, %v3202
    %v3349 = vpop.permute.xlu0 %3348
    %3352 = vset.pattern.permute.xlu0 0
    %3353 = vperm.xlu0 %3352, %v3203
    %v3354 = vpop.permute.xlu0 %3353
    %3357 = vset.pattern.permute.xlu0 0
    %3358 = vperm.xlu0 %3357, %v3204
    %v3359 = vpop.permute.xlu0 %3358
    %3362 = vset.pattern.permute.xlu0 0
    %3363 = vperm.xlu0 %3362, %v3205
    %v3364 = vpop.permute.xlu0 %3363
    %v3366 = vsub.f32 %v3209, %v2687
    %v3367 = vsub.f32 %v3214, %v2688
    %v3368 = vsub.f32 %v3219, %v2689
    %v3369 = vsub.f32 %v3224, %v2690
    %v3370 = vsub.f32 %v3229, %v2691
    %v3371 = vsub.f32 %v3234, %v2692
    %v3372 = vsub.f32 %v3239, %v2693
    %v3373 = vsub.f32 %v3244, %v2694
    %v3374 = vsub.f32 %v3249, %v2695
    %v3375 = vsub.f32 %v3254, %v2696
    %v3376 = vsub.f32 %v3259, %v2697
    %v3377 = vsub.f32 %v3264, %v2698
    %v3378 = vsub.f32 %v3269, %v2699
    %v3379 = vsub.f32 %v3274, %v2700
    %v3380 = vsub.f32 %v3279, %v2701
    %v3381 = vsub.f32 %v3284, %v2702
    %v3382 = vsub.f32 %v3289, %v2703
    %v3383 = vsub.f32 %v3294, %v2704
    %v3384 = vsub.f32 %v3299, %v2705
    %v3385 = vsub.f32 %v3304, %v2706
    %v3386 = vsub.f32 %v3309, %v2707
    %v3387 = vsub.f32 %v3314, %v2708
    %v3388 = vsub.f32 %v3319, %v2709
    %v3389 = vsub.f32 %v3324, %v2710
    %v3390 = vsub.f32 %v3329, %v2711
    %v3391 = vsub.f32 %v3334, %v2712
    %v3392 = vsub.f32 %v3339, %v2713
    %v3393 = vsub.f32 %v3344, %v2714
    %v3394 = vsub.f32 %v3349, %v2715
    %v3395 = vsub.f32 %v3354, %v2716
    %v3396 = vsub.f32 %v3359, %v2717
    %v3397 = vsub.f32 %v3364, %v2718
    %v3398 = vmax.f32 %v3366, %v3370
    %v3399 = vmax.f32 %v3367, %v3371
    %v3400 = vmax.f32 %v3368, %v3372
    %v3401 = vmax.f32 %v3369, %v3373
    %v3402 = vmax.f32 %v3398, %v3374
    %v3403 = vmax.f32 %v3399, %v3375
    %v3404 = vmax.f32 %v3400, %v3376
    %v3405 = vmax.f32 %v3401, %v3377
    %v3406 = vmax.f32 %v3402, %v3378
    %v3407 = vmax.f32 %v3403, %v3379
    %v3408 = vmax.f32 %v3404, %v3380
    %v3409 = vmax.f32 %v3405, %v3381
    %v3410 = vmax.f32 %v3406, %v3382
    %v3411 = vmax.f32 %v3407, %v3383
    %v3412 = vmax.f32 %v3408, %v3384
    %v3413 = vmax.f32 %v3409, %v3385
    %v3414 = vmax.f32 %v3410, %v3386
    %v3415 = vmax.f32 %v3411, %v3387
    %v3416 = vmax.f32 %v3412, %v3388
    %v3417 = vmax.f32 %v3413, %v3389
    %v3418 = vmax.f32 %v3414, %v3390
    %v3419 = vmax.f32 %v3415, %v3391
    %v3420 = vmax.f32 %v3416, %v3392
    %v3421 = vmax.f32 %v3417, %v3393
    %v3422 = vmax.f32 %v3418, %v3394
    %v3423 = vmax.f32 %v3419, %v3395
    %v3424 = vmax.f32 %v3420, %v3396
    %v3425 = vmax.f32 %v3421, %v3397
    %v3426 = vmax.f32 %v3422, %v3423
    %v3427 = vmax.f32 %v3424, %v3425
    %v3428 = vmax.f32 %v3426, %v3427
    %v3429 = vrot.slane %v3428, 4
    %v3430 = vmax.f32 %v3428, %v3429
    %v3431 = vrot.slane %v3430, 2
    %v3432 = vmax.f32 %v3430, %v3431
    %v3433 = vrot.slane %v3432, 1
    %v3434 = vmax.f32 %v3432, %v3433
    %v3435 = vsub.f32 %v3366, %v3434
    %v3436 = vsub.f32 %v3367, %v3434
    %v3437 = vsub.f32 %v3368, %v3434
    %v3438 = vsub.f32 %v3369, %v3434
    %v3439 = vsub.f32 %v3370, %v3434
    %v3440 = vsub.f32 %v3371, %v3434
    %v3441 = vsub.f32 %v3372, %v3434
    %v3442 = vsub.f32 %v3373, %v3434
    %v3443 = vsub.f32 %v3374, %v3434
    %v3444 = vsub.f32 %v3375, %v3434
    %v3445 = vsub.f32 %v3376, %v3434
    %v3446 = vsub.f32 %v3377, %v3434
    %v3447 = vsub.f32 %v3378, %v3434
    %v3448 = vsub.f32 %v3379, %v3434
    %v3449 = vsub.f32 %v3380, %v3434
    %v3450 = vsub.f32 %v3381, %v3434
    %v3451 = vsub.f32 %v3382, %v3434
    %v3452 = vsub.f32 %v3383, %v3434
    %v3453 = vsub.f32 %v3384, %v3434
    %v3454 = vsub.f32 %v3385, %v3434
    %v3455 = vsub.f32 %v3386, %v3434
    %v3456 = vsub.f32 %v3387, %v3434
    %v3457 = vsub.f32 %v3388, %v3434
    %v3458 = vsub.f32 %v3389, %v3434
    %v3459 = vsub.f32 %v3390, %v3434
    %v3460 = vsub.f32 %v3391, %v3434
    %v3461 = vsub.f32 %v3392, %v3434
    %v3462 = vsub.f32 %v3393, %v3434
    %v3463 = vsub.f32 %v3394, %v3434
    %v3464 = vsub.f32 %v3395, %v3434
    %v3465 = vsub.f32 %v3396, %v3434
    %v3466 = vsub.f32 %v3397, %v3434
    %v3467 = vmul.f32 %v3435, 1.442695
    %v3468 = vpow.pop %v3467
    %v3469 = vmul.f32 %v3436, 1.442695
    %v3470 = vpow.pop %v3469
    %v3471 = vmul.f32 %v3437, 1.442695
    %v3472 = vpow.pop %v3471
    %v3473 = vmul.f32 %v3438, 1.442695
    %v3474 = vpow.pop %v3473
    %v3475 = vmul.f32 %v3439, 1.442695
    %v3476 = vpow.pop %v3475
    %v3477 = vmul.f32 %v3440, 1.442695
    %v3478 = vpow.pop %v3477
    %v3479 = vmul.f32 %v3441, 1.442695
    %v3480 = vpow.pop %v3479
    %v3481 = vmul.f32 %v3442, 1.442695
    %v3482 = vpow.pop %v3481
    %v3483 = vmul.f32 %v3443, 1.442695
    %v3484 = vpow.pop %v3483
    %v3485 = vmul.f32 %v3444, 1.442695
    %v3486 = vpow.pop %v3485
    %v3487 = vmul.f32 %v3445, 1.442695
    %v3488 = vpow.pop %v3487
    %v3489 = vmul.f32 %v3446, 1.442695
    %v3490 = vpow.pop %v3489
    %v3491 = vmul.f32 %v3447, 1.442695
    %v3492 = vpow.pop %v3491
    %v3493 = vmul.f32 %v3448, 1.442695
    %v3494 = vpow.pop %v3493
    %v3495 = vmul.f32 %v3449, 1.442695
    %v3496 = vpow.pop %v3495
    %v3497 = vmul.f32 %v3450, 1.442695
    %v3498 = vpow.pop %v3497
    %v3499 = vmul.f32 %v3451, 1.442695
    %v3500 = vpow.pop %v3499
    %v3501 = vmul.f32 %v3452, 1.442695
    %v3502 = vpow.pop %v3501
    %v3503 = vmul.f32 %v3453, 1.442695
    %v3504 = vpow.pop %v3503
    %v3505 = vmul.f32 %v3454, 1.442695
    %v3506 = vpow.pop %v3505
    %v3507 = vmul.f32 %v3455, 1.442695
    %v3508 = vpow.pop %v3507
    %v3509 = vmul.f32 %v3456, 1.442695
    %v3510 = vpow.pop %v3509
    %v3511 = vmul.f32 %v3457, 1.442695
    %v3512 = vpow.pop %v3511
    %v3513 = vmul.f32 %v3458, 1.442695
    %v3514 = vpow.pop %v3513
    %v3515 = vmul.f32 %v3459, 1.442695
    %v3516 = vpow.pop %v3515
    %v3517 = vmul.f32 %v3460, 1.442695
    %v3518 = vpow.pop %v3517
    %v3519 = vmul.f32 %v3461, 1.442695
    %v3520 = vpow.pop %v3519
    %v3521 = vmul.f32 %v3462, 1.442695
    %v3522 = vpow.pop %v3521
    %v3523 = vmul.f32 %v3463, 1.442695
    %v3524 = vpow.pop %v3523
    %v3525 = vmul.f32 %v3464, 1.442695
    %v3526 = vpow.pop %v3525
    %v3527 = vmul.f32 %v3465, 1.442695
    %v3528 = vpow.pop %v3527
    %v3529 = vmul.f32 %v3466, 1.442695
    %v3530 = vpow.pop %v3529
    %v3531 = vadd.f32 %v3468, %v3470
    %v3532 = vadd.f32 %v3531, %v3472
    %v3533 = vadd.f32 %v3532, %v3474
    %v3534 = vadd.f32 %v3533, %v3476
    %v3535 = vadd.f32 %v3534, %v3478
    %v3536 = vadd.f32 %v3535, %v3480
    %v3537 = vadd.f32 %v3536, %v3482
    %v3538 = vadd.f32 %v3537, %v3484
    %v3539 = vadd.f32 %v3538, %v3486
    %v3540 = vadd.f32 %v3539, %v3488
    %v3541 = vadd.f32 %v3540, %v3490
    %v3542 = vadd.f32 %v3541, %v3492
    %v3543 = vadd.f32 %v3542, %v3494
    %v3544 = vadd.f32 %v3543, %v3496
    %v3545 = vadd.f32 %v3544, %v3498
    %v3546 = vadd.f32 %v3545, %v3500
    %v3547 = vadd.f32 %v3546, %v3502
    %v3548 = vadd.f32 %v3547, %v3504
    %v3549 = vadd.f32 %v3548, %v3506
    %v3550 = vadd.f32 %v3549, %v3508
    %v3551 = vadd.f32 %v3550, %v3510
    %v3552 = vadd.f32 %v3551, %v3512
    %v3553 = vadd.f32 %v3552, %v3514
    %v3554 = vadd.f32 %v3553, %v3516
    %v3555 = vadd.f32 %v3554, %v3518
    %v3556 = vadd.f32 %v3555, %v3520
    %v3557 = vadd.f32 %v3556, %v3522
    %v3558 = vadd.f32 %v3557, %v3524
    %v3559 = vadd.f32 %v3558, %v3526
    %v3560 = vadd.f32 %v3559, %v3528
    %v3561 = vadd.f32 %v3560, %v3530
    %v3562 = vrot.slane %v3561, 4
    %v3563 = vadd.f32 %v3561, %v3562
    %v3564 = vrot.slane %v3563, 2
    %v3565 = vadd.f32 %v3563, %v3564
    %v3566 = vrot.slane %v3565, 1
    %v3567 = vadd.f32 %v3565, %v3566
    %v3568 = vlog2.pop %v3567
    %v3569 = vmul.f32 %v3568, 0.6931472
    %v3570 = vadd.f32 %v3434, %v3569
    %v3571 = vmul.f32 %v3075, %v3570
    %v3572 = vstv %s3141
    %v3573 = vmul.f32 %v3572, %v3571
    %vm3574 = vcmask 7168
    %3575 = vst.msk [vmem:[%s7] sm:$0xff] %vm3574, %v3109
    %3576 = vst.msk [vmem:[%s7 + $0x8] sm:$0xff] %vm3574, %v3110
    %3577 = vst.msk [vmem:[%s7 + $0x10] sm:$0xff] %vm3574, %v3111
    %3578 = vst.msk [vmem:[%s7 + $0x18] sm:$0xff] %vm3574, %v3112
    %3579 = vst.msk [vmem:[%s7 + $0x20] sm:$0xff] %vm3574, %v3113
    %3580 = vst.msk [vmem:[%s7 + $0x28] sm:$0xff] %vm3574, %v3114
    %3581 = vst.msk [vmem:[%s7 + $0x30] sm:$0xff] %vm3574, %v3115
    %3582 = vst.msk [vmem:[%s7 + $0x38] sm:$0xff] %vm3574, %v3116
    %3583 = vst.msk [vmem:[%s7 + $0x40] sm:$0xff] %vm3574, %v3117
    %3584 = vst.msk [vmem:[%s7 + $0x48] sm:$0xff] %vm3574, %v3118
    %3585 = vst.msk [vmem:[%s7 + $0x50] sm:$0xff] %vm3574, %v3119
    %3586 = vst.msk [vmem:[%s7 + $0x58] sm:$0xff] %vm3574, %v3120
    %3587 = vst.msk [vmem:[%s7 + $0x60] sm:$0xff] %vm3574, %v3121
    %3588 = vst.msk [vmem:[%s7 + $0x68] sm:$0xff] %vm3574, %v3122
    %3589 = vst.msk [vmem:[%s7 + $0x70] sm:$0xff] %vm3574, %v3123
    %3590 = vst.msk [vmem:[%s7 + $0x78] sm:$0xff] %vm3574, %v3124
    %3591 = vst.msk [vmem:[%s7 + $0x80] sm:$0xff] %vm3574, %v3125
    %3592 = vst.msk [vmem:[%s7 + $0x88] sm:$0xff] %vm3574, %v3126
    %3593 = vst.msk [vmem:[%s7 + $0x90] sm:$0xff] %vm3574, %v3127
    %3594 = vst.msk [vmem:[%s7 + $0x98] sm:$0xff] %vm3574, %v3128
    %3595 = vst.msk [vmem:[%s7 + $0xa0] sm:$0xff] %vm3574, %v3129
    %3596 = vst.msk [vmem:[%s7 + $0xa8] sm:$0xff] %vm3574, %v3130
    %3597 = vst.msk [vmem:[%s7 + $0xb0] sm:$0xff] %vm3574, %v3131
    %3598 = vst.msk [vmem:[%s7 + $0xb8] sm:$0xff] %vm3574, %v3132
    %3599 = vst.msk [vmem:[%s7 + $0xc0] sm:$0xff] %vm3574, %v3133
    %3600 = vst.msk [vmem:[%s7 + $0xc8] sm:$0xff] %vm3574, %v3134
    %3601 = vst.msk [vmem:[%s7 + $0xd0] sm:$0xff] %vm3574, %v3135
    %3602 = vst.msk [vmem:[%s7 + $0xd8] sm:$0xff] %vm3574, %v3136
    %3603 = vst.msk [vmem:[%s7 + $0xe0] sm:$0xff] %vm3574, %v3137
    %3604 = vst.msk [vmem:[%s7 + $0xe8] sm:$0xff] %vm3574, %v3138
    %3605 = vst.msk [vmem:[%s7 + $0xf0] sm:$0xff] %vm3574, %v3139
    %3606 = vst.msk [vmem:[%s7 + $0xf8] sm:$0xff] %vm3574, %v3140
    %3607 = vst [vmem:[%s8] sm:$0x1] %v3573
    // Predicated region
    $region49: #{_sinkhorn_apply.1} parent=1 // pred_check
      _
    $region50: #{_sinkhorn_apply.1} parent=1 // pred_check_branch
      %3609 = sbr.rel (0) target = $region52
    $region51: #{_sinkhorn_apply.1} parent=1 // pred_region
      _
    $region52: #{_sinkhorn_apply.1} parent=1 // pred_fallthru
      _
    // Predicated region
    $region53: #{_sinkhorn_apply.1} parent=1 // pred_check
      _
    $region54: #{_sinkhorn_apply.1} parent=1 // pred_check_branch
      %3611 = sbr.rel (0) target = $region56
    $region55: #{_sinkhorn_apply.1} parent=1 // pred_region
      _
    $region56: #{_sinkhorn_apply.1} parent=1 // pred_fallthru
      _
    // Predicated region
    $region57: #{_sinkhorn_apply.1} parent=1 // pred_check
      _
    $region58: #{_sinkhorn_apply.1} parent=1 // pred_check_branch
      %3613 = sbr.rel (0) target = $region60
    $region59: #{_sinkhorn_apply.1} parent=1 // pred_region
      _
    $region60: #{_sinkhorn_apply.1} parent=1 // pred_fallthru
      _
    // Predicated region
    $region61: #{_sinkhorn_apply.1} parent=1 // pred_check
      _
    $region62: #{_sinkhorn_apply.1} parent=1 // pred_check_branch
      %3615 = sbr.rel (0) target = $region64
    $region63: #{_sinkhorn_apply.1} parent=1 // pred_region
      _
    $region64: #{_sinkhorn_apply.1} parent=1 // pred_fallthru
      _
    %3616 = vsyncpa [#allocation4], 1
    %3617 = vsyncpa [#allocation6], 1

</llo_original>
